<compile_context>
chip_gen: v6e
topology: v6e:2x2x1
jax: 0.10.0
libtpu: 0.0.40
codegen_flags: <defaults>
</compile_context>

<pallas_src>
import math
import jax
import jax.numpy as jnp
import numpy as np
from jax.experimental import pallas as pl
from jax.experimental.pallas import tpu as pltpu

N_HEAD = 12
K_DIM = 64
V_DIM = 64
LN_EPS = 1e-5
_SCALE = 1.0 / math.sqrt(K_DIM)
_MASK_NEG = 1e9


def _discriminator_kernel(h_ref, mask_ref,
                          wqkv_ref, bqkv_ref, wo_ref, bo_ref,
                          ln_g_ref, ln_b_ref,
                          w1_ref, b1_ref, w2t_ref, b2_ref,
                          out_ref,
                          q_s, k_s, v_s, o_s):
    # One grid step == TB batch elements.
    TB, S, E = h_ref.shape
    R = TB * S
    HK = N_HEAD * K_DIM
    HV = N_HEAD * V_DIM

    m_row = mask_ref[...]                                     # (TB, 1, S) f32
    # Additive mask, broadcast ONCE before the head loop (not re-materialized
    # 12x inside it).
    neg_b = jnp.broadcast_to((m_row - 1.0) * _MASK_NEG, (TB, S, S))   # (TB,S,S)

    hf = h_ref[...].reshape(R, E)                              # f32, residual/LN
    hb = hf.astype(jnp.bfloat16)                               # bf16 matmul input

    # ---- fused QKV: single (R,E)@(E,3*768) matmul, bf16 in / f32 accumulate.
    # 1/sqrt(K_DIM) is already folded into the q columns/bias (host-side).
    qkv = jnp.dot(hb, wqkv_ref[...],
                  preferred_element_type=jnp.float32) + bqkv_ref[...]
    q_s[...] = qkv[:, :HK].reshape(TB, S, HK).astype(jnp.bfloat16)
    k_s[...] = qkv[:, HK:2 * HK].reshape(TB, S, HK).astype(jnp.bfloat16)
    v_s[...] = qkv[:, 2 * HK:].reshape(TB, S, HV).astype(jnp.bfloat16)

    # ---- attention: heads in aligned pairs (128-lane loads / stores) ----
    for pair in range(N_HEAD // 2):
        lo = pair * 2 * K_DIM                                  # multiple of 128
        qp = q_s[:, :, lo:lo + 2 * K_DIM]                      # (TB,S,128) bf16
        kp = k_s[:, :, lo:lo + 2 * K_DIM]
        vp = v_s[:, :, lo:lo + 2 * K_DIM]
        oh_pair = []
        for sub in range(2):
            c0 = sub * K_DIM
            qh = qp[:, :, c0:c0 + K_DIM]                       # (TB,S,64)
            kh = kp[:, :, c0:c0 + K_DIM]
            vh = vp[:, :, c0:c0 + K_DIM]

            # scores (scale pre-folded into q); contract last dims directly.
            a = jnp.einsum('bqd,bkd->bqk', qh, kh,
                           preferred_element_type=jnp.float32)  # (TB,S,S)
            x = a + neg_b                                       # additive mask
            mx = jnp.max(x, axis=2, keepdims=True)
            p_un = jnp.exp(x - mx)           # masked lanes underflow to exactly 0
            s_un = jnp.sum(p_un, axis=2, keepdims=True)         # always >= 1
            inv = pl.reciprocal(s_un, approx=True)              # EUP slot

            # normalize AFTER the PV matmul: S*64 multiplies instead of S*S.
            oh = jnp.einsum('bqk,bkd->bqd', p_un.astype(jnp.bfloat16), vh,
                            preferred_element_type=jnp.float32) * inv
            oh_pair.append(oh.astype(jnp.bfloat16))
        # single unmasked 128-lane store per pair.
        o_s[:, :, lo:lo + 2 * K_DIM] = jnp.concatenate(oh_pair, axis=-1)

    # ---- output projection (single K=768 matmul) + residual ----
    o_all = o_s[...].reshape(R, HV)                            # bf16
    o_proj = jnp.dot(o_all, wo_ref[...],
                     preferred_element_type=jnp.float32) + bo_ref[...]
    h2 = hf + o_proj                                           # (R, E) f32

    # ---- LayerNorm over embed dim (eps=1e-5, biased variance) ----
    mu = jnp.mean(h2, axis=1, keepdims=True)
    var = jnp.mean((h2 - mu) ** 2, axis=1, keepdims=True)
    h_ln = (h2 - mu) * jax.lax.rsqrt(var + LN_EPS) * ln_g_ref[...] + ln_b_ref[...]

    # ---- masked mean over the sequence dim, as a batched mat-vec on the MXU ----
    h_ln3 = h_ln.reshape(TB, S, E)
    num3 = jnp.einsum('bqs,bse->bqe', m_row, h_ln3,
                      preferred_element_type=jnp.float32)       # (TB, 1, E)
    den3 = jnp.sum(m_row, axis=2, keepdims=True)                # (TB, 1, 1)
    pooled = (num3 / den3).reshape(TB, E)

    # ---- classifier: Linear(E,128) -> tanh -> Linear(128,1), batched over TB ----
    hid = jnp.tanh(jnp.dot(pooled, w1_ref[...],
                           preferred_element_type=jnp.float32) + b1_ref[...])
    # lane-dense (1, TB) logit row via dot_general (no in-kernel transpose).
    logit = jnp.einsum('ok,tk->ot', w2t_ref[...], hid,
                       preferred_element_type=jnp.float32) + b2_ref[...]
    out_ref[...] = logit                                        # (1, TB)


def _pick_tb(B, S):
    """Largest divisor of B with TB*S around ~1024 MXU rows per grid step."""
    cap = max(1, 1024 // max(S, 1))
    best = 1
    for d in range(1, B + 1):
        if B % d == 0 and d <= cap:
            best = d
    return best


def _vmem_limit_bytes():
    """min(96 MiB, 75% of physical VMEM): ~96 MiB on v5e/v6e, ~48 MiB on v7x."""
    try:
        cap = pltpu.get_tpu_info().vmem_capacity_bytes
    except Exception:
        cap = 64 * 1024 * 1024
    return int(min(96 * 1024 * 1024, int(cap * 0.75)))


def manifold_discriminator(h, mask, params, tb=None):
    B, S, E = h.shape
    if tb is None:
        tb = _pick_tb(B, S)
    assert B % tb == 0
    G = B // tb

    # Lane-major mask: avoids any in-kernel (S,1)<->(1,S) transpose.
    mask_row = mask.astype(jnp.float32).reshape(B, 1, S)

    bf = jnp.bfloat16
    # Fold the 1/sqrt(K_DIM) score scale into the q weights/bias and fuse QKV.
    wqkv = jnp.concatenate(
        [params["wq"] * _SCALE, params["wk"], params["wv"]], axis=1).astype(bf)
    bqkv = jnp.concatenate(
        [params["bq"] * _SCALE, params["bk"], params["bv"]], axis=1
    ).astype(jnp.float32)
    w2t = params["w2"].T                      # (1, 128) for the lane-dense logit row

    weights = [
        wqkv, bqkv,
        params["wo"].astype(bf), params["bo"],
        params["ln_g"], params["ln_b"],
        params["w1"], params["b1"],
        w2t, params["b2"],
    ]
    hk = N_HEAD * K_DIM
    hv = N_HEAD * V_DIM

    def wspec(a):
        nd = a.ndim
        return pl.BlockSpec(a.shape, lambda b, _nd=nd: (0,) * _nd)

    in_specs = [pl.BlockSpec((tb, S, E), lambda b: (b, 0, 0)),
                pl.BlockSpec((tb, 1, S), lambda b: (b, 0, 0))]
    in_specs += [wspec(w) for w in weights]

    out = pl.pallas_call(
        _discriminator_kernel,
        grid=(G,),
        in_specs=in_specs,
        out_specs=pl.BlockSpec((1, tb), lambda b: (b, 0)),      # lane-dense logits
        out_shape=jax.ShapeDtypeStruct((G, tb), jnp.float32),
        scratch_shapes=[
            pltpu.VMEM((tb, S, hk), bf),   # q
            pltpu.VMEM((tb, S, hk), bf),   # k
            pltpu.VMEM((tb, S, hv), bf),   # v
            pltpu.VMEM((tb, S, hv), bf),   # per-head outputs
        ],
        # Batch tiles are independent -> shard across TensorCores on v7x.
        compiler_params=pltpu.CompilerParams(
            dimension_semantics=("parallel",),
            vmem_limit_bytes=_vmem_limit_bytes()),
    )(h, mask_row, *weights)
    return out.reshape(B, 1)


def reference(h, mask, params):
    """Pure-JAX f32 mirror of the PyTorch forward pass (eval mode)."""
    B, S, E = h.shape
    m = mask.astype(jnp.float32)
    q = h @ params["wq"] + params["bq"]
    k = h @ params["wk"] + params["bk"]
    v = h @ params["wv"] + params["bv"]
    q = q.reshape(B, S, N_HEAD, K_DIM).transpose(0, 2, 1, 3)
    k = k.reshape(B, S, N_HEAD, K_DIM).transpose(0, 2, 3, 1)
    v = v.reshape(B, S, N_HEAD, V_DIM).transpose(0, 2, 1, 3)
    a = jnp.matmul(q, k) / math.sqrt(K_DIM)               # (B, H, S, S)
    mask4 = m[:, None, None, :]
    masked_vec = a * mask4
    max_vec = masked_vec.max(axis=3, keepdims=True)
    exps = jnp.exp(masked_vec - max_vec)
    masked_exps = exps * mask4
    sums = masked_exps.sum(axis=3, keepdims=True)
    sums = sums + (sums == 0).astype(jnp.float32)
    attn = masked_exps / sums
    o = jnp.matmul(attn, v).transpose(0, 2, 1, 3).reshape(B, S, -1)
    o = o @ params["wo"] + params["bo"]
    h2 = h + o
    mu = h2.mean(axis=-1, keepdims=True)
    var = ((h2 - mu) ** 2).mean(axis=-1, keepdims=True)
    h_ln = (h2 - mu) / jnp.sqrt(var + LN_EPS) * params["ln_g"] + params["ln_b"]
    m_col = m[:, :, None]
    pooled = (h_ln * m_col).sum(axis=1) / m_col.sum(axis=1)
    hid = jnp.tanh(pooled @ params["w1"] + params["b1"])
    return hid @ params["w2"] + params["b2"]


def init_params(key, embed_dim):
    ks = jax.random.split(key, 10)
    s = 0.02
    hk = N_HEAD * K_DIM
    hv = N_HEAD * V_DIM
    return {
        "wq": jax.random.normal(ks[0], (embed_dim, hk), jnp.float32) * s,
        "bq": jax.random.normal(ks[1], (1, hk), jnp.float32) * s,
        "wk": jax.random.normal(ks[2], (embed_dim, hk), jnp.float32) * s,
        "bk": jax.random.normal(ks[3], (1, hk), jnp.float32) * s,
        "wv": jax.random.normal(ks[4], (embed_dim, hv), jnp.float32) * s,
        "bv": jax.random.normal(ks[5], (1, hv), jnp.float32) * s,
        "wo": jax.random.normal(ks[6], (hv, embed_dim), jnp.float32) * s,
        "bo": jax.random.normal(ks[7], (1, embed_dim), jnp.float32) * s,
        "ln_g": jnp.ones((1, embed_dim), jnp.float32),
        "ln_b": jnp.zeros((1, embed_dim), jnp.float32),
        "w1": jax.random.normal(ks[8], (embed_dim, 128), jnp.float32) * s,
        "b1": jnp.zeros((1, 128), jnp.float32),
        "w2": jax.random.normal(ks[9], (128, 1), jnp.float32) * s,
        "b2": jnp.zeros((1, 1), jnp.float32),
    }


if __name__ == "__main__":
    B, S, E = 2, 8, 32
    key = jax.random.PRNGKey(0)
    k_h, k_p = jax.random.split(key)

    h = jax.random.normal(k_h, (B, S, E), jnp.float32)
    # valid lengths: 8 and 5  (second sequence has padding)
    lengths = jnp.array([S, S - 3])
    mask = (jnp.arange(S)[None, :] < lengths[:, None]).astype(jnp.float32)

    params = init_params(k_p, E)

    out = manifold_discriminator(h, mask, params)
    out = jax.block_until_ready(out)

    ref = reference(h, mask, params)
    # bf16 matmul inputs + approx reciprocal -> slightly looser tolerance vs f32 ref.
    np.testing.assert_allclose(np.asarray(out), np.asarray(ref),
                               rtol=2e-2, atol=3e-3)
    print("KERNEL_OK")
</pallas_src>

<mosaic_0001>
module attributes {stable_mosaic.version = 11 : i64} {
  func.func @_discriminator_kernel(%arg0: i32, %arg1: memref<2x8x32xf32, #tpu.memory_space<vmem>>, %arg2: memref<2x1x8xf32, #tpu.memory_space<vmem>>, %arg3: memref<32x2304xbf16, #tpu.memory_space<vmem>>, %arg4: memref<1x2304xf32, #tpu.memory_space<vmem>>, %arg5: memref<768x32xbf16, #tpu.memory_space<vmem>>, %arg6: memref<1x32xf32, #tpu.memory_space<vmem>>, %arg7: memref<1x32xf32, #tpu.memory_space<vmem>>, %arg8: memref<1x32xf32, #tpu.memory_space<vmem>>, %arg9: memref<32x128xf32, #tpu.memory_space<vmem>>, %arg10: memref<1x128xf32, #tpu.memory_space<vmem>>, %arg11: memref<1x128xf32, #tpu.memory_space<vmem>>, %arg12: memref<1x1xf32, #tpu.memory_space<vmem>>, %arg13: memref<1x2xf32, #tpu.memory_space<vmem>>, %arg14: memref<2x8x768xbf16, #tpu.memory_space<vmem>>, %arg15: memref<2x8x768xbf16, #tpu.memory_space<vmem>>, %arg16: memref<2x8x768xbf16, #tpu.memory_space<vmem>>, %arg17: memref<2x8x768xbf16, #tpu.memory_space<vmem>>) attributes {dimension_semantics = [#tpu.dimension_semantics<parallel>], iteration_bounds = array<i64: 1>, scalar_prefetch = 0 : i64, scratch_operands = 4 : i64, tpu.core_type = #tpu.core_type<tc>, window_params = [{transform_indices = @transform_0, window_bounds = array<i64: 2, 8, 32>}, {transform_indices = @transform_1, window_bounds = array<i64: 2, 1, 8>}, {pipeline_mode = #tpu.pipeline_mode<synchronous>, transform_indices = @transform_2, window_bounds = array<i64: 32, 2304>}, {pipeline_mode = #tpu.pipeline_mode<synchronous>, transform_indices = @transform_3, window_bounds = array<i64: 1, 2304>}, {pipeline_mode = #tpu.pipeline_mode<synchronous>, transform_indices = @transform_4, window_bounds = array<i64: 768, 32>}, {pipeline_mode = #tpu.pipeline_mode<synchronous>, transform_indices = @transform_5, window_bounds = array<i64: 1, 32>}, {pipeline_mode = #tpu.pipeline_mode<synchronous>, transform_indices = @transform_6, window_bounds = array<i64: 1, 32>}, {pipeline_mode = #tpu.pipeline_mode<synchronous>, transform_indices = @transform_7, window_bounds = array<i64: 1, 32>}, {pipeline_mode = #tpu.pipeline_mode<synchronous>, transform_indices = @transform_8, window_bounds = array<i64: 32, 128>}, {pipeline_mode = #tpu.pipeline_mode<synchronous>, transform_indices = @transform_9, window_bounds = array<i64: 1, 128>}, {pipeline_mode = #tpu.pipeline_mode<synchronous>, transform_indices = @transform_10, window_bounds = array<i64: 1, 128>}, {pipeline_mode = #tpu.pipeline_mode<synchronous>, transform_indices = @transform_11, window_bounds = array<i64: 1, 1>}, {transform_indices = @transform_12, window_bounds = array<i64: 1, 2>}]} {
    %c0 = arith.constant 0 : index
    %c0_0 = arith.constant 0 : index
    %c0_1 = arith.constant 0 : index
    %0 = vector.load %arg2[%c0, %c0_0, %c0_1] : memref<2x1x8xf32, #tpu.memory_space<vmem>>, vector<2x1x8xf32>
    %cst = arith.constant 1.000000e+00 : f32
    %1 = vector.broadcast %cst : f32 to vector<2x1x8xf32>
    %2 = arith.subf %0, %1 : vector<2x1x8xf32>
    %cst_2 = arith.constant 1.000000e+09 : f32
    %3 = vector.broadcast %cst_2 : f32 to vector<2x1x8xf32>
    %4 = arith.mulf %2, %3 : vector<2x1x8xf32>
    %5 = vector.shape_cast %4 : vector<2x1x8xf32> to vector<2x1x8xf32>
    %6 = vector.broadcast %5 : vector<2x1x8xf32> to vector<2x8x8xf32>
    %c0_3 = arith.constant 0 : index
    %c0_4 = arith.constant 0 : index
    %c0_5 = arith.constant 0 : index
    %7 = vector.load %arg1[%c0_3, %c0_4, %c0_5] : memref<2x8x32xf32, #tpu.memory_space<vmem>>, vector<2x8x32xf32>
    %8 = vector.shape_cast %7 : vector<2x8x32xf32> to vector<16x32xf32>
    %9 = arith.truncf %8 : vector<16x32xf32> to vector<16x32xbf16>
    %c0_6 = arith.constant 0 : index
    %c0_7 = arith.constant 0 : index
    %10 = vector.load %arg3[%c0_6, %c0_7] : memref<32x2304xbf16, #tpu.memory_space<vmem>>, vector<32x2304xbf16>
    %cst_8 = arith.constant dense<0.000000e+00> : vector<16x2304xf32>
    %11 = tpu.matmul %9, %10, %cst_8 {dimension_numbers = #tpu.dot_dimension_numbers<[1], [0], [0], [1], [0, 0, 1, 1], [], []>} : vector<16x32xbf16>, vector<32x2304xbf16>, vector<16x2304xf32> -> vector<16x2304xf32>
    %c0_9 = arith.constant 0 : index
    %c0_10 = arith.constant 0 : index
    %12 = vector.load %arg4[%c0_9, %c0_10] : memref<1x2304xf32, #tpu.memory_space<vmem>>, vector<1x2304xf32>
    %13 = vector.broadcast %12 : vector<1x2304xf32> to vector<16x2304xf32>
    %14 = arith.addf %11, %13 : vector<16x2304xf32>
    %15 = vector.extract_strided_slice %14 {offsets = [0, 0], sizes = [16, 768], strides = [1, 1]} : vector<16x2304xf32> to vector<16x768xf32>
    %16 = vector.shape_cast %15 : vector<16x768xf32> to vector<2x8x768xf32>
    %17 = arith.truncf %16 : vector<2x8x768xf32> to vector<2x8x768xbf16>
    %c0_11 = arith.constant 0 : index
    %c0_12 = arith.constant 0 : index
    %c0_13 = arith.constant 0 : index
    %18 = vector.load %arg14[%c0_11, %c0_12, %c0_13] : memref<2x8x768xbf16, #tpu.memory_space<vmem>>, vector<2x8x768xbf16>
    tpu.vector_store %arg14[%c0_11, %c0_12, %c0_13], %17 {strides = array<i32>} : memref<2x8x768xbf16, #tpu.memory_space<vmem>>, vector<2x8x768xbf16>,
    %19 = vector.extract_strided_slice %14 {offsets = [0, 768], sizes = [16, 768], strides = [1, 1]} : vector<16x2304xf32> to vector<16x768xf32>
    %20 = vector.shape_cast %19 : vector<16x768xf32> to vector<2x8x768xf32>
    %21 = arith.truncf %20 : vector<2x8x768xf32> to vector<2x8x768xbf16>
    %c0_14 = arith.constant 0 : index
    %c0_15 = arith.constant 0 : index
    %c0_16 = arith.constant 0 : index
    %22 = vector.load %arg15[%c0_14, %c0_15, %c0_16] : memref<2x8x768xbf16, #tpu.memory_space<vmem>>, vector<2x8x768xbf16>
    tpu.vector_store %arg15[%c0_14, %c0_15, %c0_16], %21 {strides = array<i32>} : memref<2x8x768xbf16, #tpu.memory_space<vmem>>, vector<2x8x768xbf16>,
    %23 = vector.extract_strided_slice %14 {offsets = [0, 1536], sizes = [16, 768], strides = [1, 1]} : vector<16x2304xf32> to vector<16x768xf32>
    %24 = vector.shape_cast %23 : vector<16x768xf32> to vector<2x8x768xf32>
    %25 = arith.truncf %24 : vector<2x8x768xf32> to vector<2x8x768xbf16>
    %c0_17 = arith.constant 0 : index
    %c0_18 = arith.constant 0 : index
    %c0_19 = arith.constant 0 : index
    %26 = vector.load %arg16[%c0_17, %c0_18, %c0_19] : memref<2x8x768xbf16, #tpu.memory_space<vmem>>, vector<2x8x768xbf16>
    tpu.vector_store %arg16[%c0_17, %c0_18, %c0_19], %25 {strides = array<i32>} : memref<2x8x768xbf16, #tpu.memory_space<vmem>>, vector<2x8x768xbf16>,
    %c0_20 = arith.constant 0 : index
    %c0_21 = arith.constant 0 : index
    %c0_22 = arith.constant 0 : index
    %27 = vector.load %arg14[%c0_20, %c0_21, %c0_22] : memref<2x8x768xbf16, #tpu.memory_space<vmem>>, vector<2x8x128xbf16>
    %c0_23 = arith.constant 0 : index
    %c0_24 = arith.constant 0 : index
    %c0_25 = arith.constant 0 : index
    %28 = vector.load %arg15[%c0_23, %c0_24, %c0_25] : memref<2x8x768xbf16, #tpu.memory_space<vmem>>, vector<2x8x128xbf16>
    %c0_26 = arith.constant 0 : index
    %c0_27 = arith.constant 0 : index
    %c0_28 = arith.constant 0 : index
    %29 = vector.load %arg16[%c0_26, %c0_27, %c0_28] : memref<2x8x768xbf16, #tpu.memory_space<vmem>>, vector<2x8x128xbf16>
    %30 = vector.extract_strided_slice %27 {offsets = [0, 0, 0], sizes = [2, 8, 64], strides = [1, 1, 1]} : vector<2x8x128xbf16> to vector<2x8x64xbf16>
    %31 = vector.extract_strided_slice %28 {offsets = [0, 0, 0], sizes = [2, 8, 64], strides = [1, 1, 1]} : vector<2x8x128xbf16> to vector<2x8x64xbf16>
    %32 = vector.extract_strided_slice %29 {offsets = [0, 0, 0], sizes = [2, 8, 64], strides = [1, 1, 1]} : vector<2x8x128xbf16> to vector<2x8x64xbf16>
    "tpu.trace_start"() <{level = 10 : i32, message = "bqd,bkd->bqk"}> : () -> ()
    %cst_29 = arith.constant dense<0.000000e+00> : vector<2x8x8xf32>
    %33 = tpu.matmul %30, %31, %cst_29 {dimension_numbers = #tpu.dot_dimension_numbers<[2], [2], [1], [1], [0, 0, 0, 1, 1, 1], [0], [0]>} : vector<2x8x64xbf16>, vector<2x8x64xbf16>, vector<2x8x8xf32> -> vector<2x8x8xf32>
    "tpu.trace_stop"() : () -> ()
    %34 = arith.addf %33, %6 : vector<2x8x8xf32>
    %cst_30 = arith.constant dense<0xFF800000> : vector<2x8xf32>
    %35 = vector.multi_reduction <maximumf>, %34, %cst_30 [2] : vector<2x8x8xf32> to vector<2x8xf32>
    %36 = vector.shape_cast %35 : vector<2x8xf32> to vector<2x8x1xf32>
    %37 = vector.broadcast %36 : vector<2x8x1xf32> to vector<2x8x8xf32>
    %38 = arith.subf %34, %37 : vector<2x8x8xf32>
    %39 = math.exp %38 : vector<2x8x8xf32>
    %cst_31 = arith.constant dense<0.000000e+00> : vector<2x8xf32>
    %40 = vector.multi_reduction <add>, %39, %cst_31 [2] : vector<2x8x8xf32> to vector<2x8xf32>
    %41 = vector.shape_cast %40 : vector<2x8xf32> to vector<2x8x1xf32>
    %42 = tpu.reciprocal %41 {approx = true} : vector<2x8x1xf32> -> vector<2x8x1xf32>
    %43 = arith.truncf %39 : vector<2x8x8xf32> to vector<2x8x8xbf16>
    "tpu.trace_start"() <{level = 10 : i32, message = "bqk,bkd->bqd"}> : () -> ()
    %cst_32 = arith.constant dense<0.000000e+00> : vector<2x8x64xf32>
    %44 = tpu.matmul %43, %32, %cst_32 {dimension_numbers = #tpu.dot_dimension_numbers<[2], [1], [1], [2], [0, 0, 0, 1, 1, 2], [0], [0]>} : vector<2x8x8xbf16>, vector<2x8x64xbf16>, vector<2x8x64xf32> -> vector<2x8x64xf32>
    "tpu.trace_stop"() : () -> ()
    %45 = vector.broadcast %42 : vector<2x8x1xf32> to vector<2x8x64xf32>
    %46 = arith.mulf %44, %45 : vector<2x8x64xf32>
    %47 = arith.truncf %46 : vector<2x8x64xf32> to vector<2x8x64xbf16>
    %48 = vector.extract_strided_slice %27 {offsets = [0, 0, 64], sizes = [2, 8, 64], strides = [1, 1, 1]} : vector<2x8x128xbf16> to vector<2x8x64xbf16>
    %49 = vector.extract_strided_slice %28 {offsets = [0, 0, 64], sizes = [2, 8, 64], strides = [1, 1, 1]} : vector<2x8x128xbf16> to vector<2x8x64xbf16>
    %50 = vector.extract_strided_slice %29 {offsets = [0, 0, 64], sizes = [2, 8, 64], strides = [1, 1, 1]} : vector<2x8x128xbf16> to vector<2x8x64xbf16>
    "tpu.trace_start"() <{level = 10 : i32, message = "bqd,bkd->bqk"}> : () -> ()
    %cst_33 = arith.constant dense<0.000000e+00> : vector<2x8x8xf32>
    %51 = tpu.matmul %48, %49, %cst_33 {dimension_numbers = #tpu.dot_dimension_numbers<[2], [2], [1], [1], [0, 0, 0, 1, 1, 1], [0], [0]>} : vector<2x8x64xbf16>, vector<2x8x64xbf16>, vector<2x8x8xf32> -> vector<2x8x8xf32>
    "tpu.trace_stop"() : () -> ()
    %52 = arith.addf %51, %6 : vector<2x8x8xf32>
    %cst_34 = arith.constant dense<0xFF800000> : vector<2x8xf32>
    %53 = vector.multi_reduction <maximumf>, %52, %cst_34 [2] : vector<2x8x8xf32> to vector<2x8xf32>
    %54 = vector.shape_cast %53 : vector<2x8xf32> to vector<2x8x1xf32>
    %55 = vector.broadcast %54 : vector<2x8x1xf32> to vector<2x8x8xf32>
    %56 = arith.subf %52, %55 : vector<2x8x8xf32>
    %57 = math.exp %56 : vector<2x8x8xf32>
    %cst_35 = arith.constant dense<0.000000e+00> : vector<2x8xf32>
    %58 = vector.multi_reduction <add>, %57, %cst_35 [2] : vector<2x8x8xf32> to vector<2x8xf32>
    %59 = vector.shape_cast %58 : vector<2x8xf32> to vector<2x8x1xf32>
    %60 = tpu.reciprocal %59 {approx = true} : vector<2x8x1xf32> -> vector<2x8x1xf32>
    %61 = arith.truncf %57 : vector<2x8x8xf32> to vector<2x8x8xbf16>
    "tpu.trace_start"() <{level = 10 : i32, message = "bqk,bkd->bqd"}> : () -> ()
    %cst_36 = arith.constant dense<0.000000e+00> : vector<2x8x64xf32>
    %62 = tpu.matmul %61, %50, %cst_36 {dimension_numbers = #tpu.dot_dimension_numbers<[2], [1], [1], [2], [0, 0, 0, 1, 1, 2], [0], [0]>} : vector<2x8x8xbf16>, vector<2x8x64xbf16>, vector<2x8x64xf32> -> vector<2x8x64xf32>
    "tpu.trace_stop"() : () -> ()
    %63 = vector.broadcast %60 : vector<2x8x1xf32> to vector<2x8x64xf32>
    %64 = arith.mulf %62, %63 : vector<2x8x64xf32>
    %65 = arith.truncf %64 : vector<2x8x64xf32> to vector<2x8x64xbf16>
    %66 = tpu.concatenate %47, %65 in 2 : vector<2x8x64xbf16>, vector<2x8x64xbf16> -> vector<2x8x128xbf16>
    %c0_37 = arith.constant 0 : index
    %c0_38 = arith.constant 0 : index
    %c0_39 = arith.constant 0 : index
    %67 = vector.load %arg17[%c0_37, %c0_38, %c0_39] : memref<2x8x768xbf16, #tpu.memory_space<vmem>>, vector<2x8x128xbf16>
    tpu.vector_store %arg17[%c0_37, %c0_38, %c0_39], %66 {strides = array<i32>} : memref<2x8x768xbf16, #tpu.memory_space<vmem>>, vector<2x8x128xbf16>,
    %c0_40 = arith.constant 0 : index
    %c0_41 = arith.constant 0 : index
    %c128 = arith.constant 128 : index
    %68 = vector.load %arg14[%c0_40, %c0_41, %c128] : memref<2x8x768xbf16, #tpu.memory_space<vmem>>, vector<2x8x128xbf16>
    %c0_42 = arith.constant 0 : index
    %c0_43 = arith.constant 0 : index
    %c128_44 = arith.constant 128 : index
    %69 = vector.load %arg15[%c0_42, %c0_43, %c128_44] : memref<2x8x768xbf16, #tpu.memory_space<vmem>>, vector<2x8x128xbf16>
    %c0_45 = arith.constant 0 : index
    %c0_46 = arith.constant 0 : index
    %c128_47 = arith.constant 128 : index
    %70 = vector.load %arg16[%c0_45, %c0_46, %c128_47] : memref<2x8x768xbf16, #tpu.memory_space<vmem>>, vector<2x8x128xbf16>
    %71 = vector.extract_strided_slice %68 {offsets = [0, 0, 0], sizes = [2, 8, 64], strides = [1, 1, 1]} : vector<2x8x128xbf16> to vector<2x8x64xbf16>
    %72 = vector.extract_strided_slice %69 {offsets = [0, 0, 0], sizes = [2, 8, 64], strides = [1, 1, 1]} : vector<2x8x128xbf16> to vector<2x8x64xbf16>
    %73 = vector.extract_strided_slice %70 {offsets = [0, 0, 0], sizes = [2, 8, 64], strides = [1, 1, 1]} : vector<2x8x128xbf16> to vector<2x8x64xbf16>
    "tpu.trace_start"() <{level = 10 : i32, message = "bqd,bkd->bqk"}> : () -> ()
    %cst_48 = arith.constant dense<0.000000e+00> : vector<2x8x8xf32>
    %74 = tpu.matmul %71, %72, %cst_48 {dimension_numbers = #tpu.dot_dimension_numbers<[2], [2], [1], [1], [0, 0, 0, 1, 1, 1], [0], [0]>} : vector<2x8x64xbf16>, vector<2x8x64xbf16>, vector<2x8x8xf32> -> vector<2x8x8xf32>
    "tpu.trace_stop"() : () -> ()
    %75 = arith.addf %74, %6 : vector<2x8x8xf32>
    %cst_49 = arith.constant dense<0xFF800000> : vector<2x8xf32>
    %76 = vector.multi_reduction <maximumf>, %75, %cst_49 [2] : vector<2x8x8xf32> to vector<2x8xf32>
    %77 = vector.shape_cast %76 : vector<2x8xf32> to vector<2x8x1xf32>
    %78 = vector.broadcast %77 : vector<2x8x1xf32> to vector<2x8x8xf32>
    %79 = arith.subf %75, %78 : vector<2x8x8xf32>
    %80 = math.exp %79 : vector<2x8x8xf32>
    %cst_50 = arith.constant dense<0.000000e+00> : vector<2x8xf32>
    %81 = vector.multi_reduction <add>, %80, %cst_50 [2] : vector<2x8x8xf32> to vector<2x8xf32>
    %82 = vector.shape_cast %81 : vector<2x8xf32> to vector<2x8x1xf32>
    %83 = tpu.reciprocal %82 {approx = true} : vector<2x8x1xf32> -> vector<2x8x1xf32>
    %84 = arith.truncf %80 : vector<2x8x8xf32> to vector<2x8x8xbf16>
    "tpu.trace_start"() <{level = 10 : i32, message = "bqk,bkd->bqd"}> : () -> ()
    %cst_51 = arith.constant dense<0.000000e+00> : vector<2x8x64xf32>
    %85 = tpu.matmul %84, %73, %cst_51 {dimension_numbers = #tpu.dot_dimension_numbers<[2], [1], [1], [2], [0, 0, 0, 1, 1, 2], [0], [0]>} : vector<2x8x8xbf16>, vector<2x8x64xbf16>, vector<2x8x64xf32> -> vector<2x8x64xf32>
    "tpu.trace_stop"() : () -> ()
    %86 = vector.broadcast %83 : vector<2x8x1xf32> to vector<2x8x64xf32>
    %87 = arith.mulf %85, %86 : vector<2x8x64xf32>
    %88 = arith.truncf %87 : vector<2x8x64xf32> to vector<2x8x64xbf16>
    %89 = vector.extract_strided_slice %68 {offsets = [0, 0, 64], sizes = [2, 8, 64], strides = [1, 1, 1]} : vector<2x8x128xbf16> to vector<2x8x64xbf16>
    %90 = vector.extract_strided_slice %69 {offsets = [0, 0, 64], sizes = [2, 8, 64], strides = [1, 1, 1]} : vector<2x8x128xbf16> to vector<2x8x64xbf16>
    %91 = vector.extract_strided_slice %70 {offsets = [0, 0, 64], sizes = [2, 8, 64], strides = [1, 1, 1]} : vector<2x8x128xbf16> to vector<2x8x64xbf16>
    "tpu.trace_start"() <{level = 10 : i32, message = "bqd,bkd->bqk"}> : () -> ()
    %cst_52 = arith.constant dense<0.000000e+00> : vector<2x8x8xf32>
    %92 = tpu.matmul %89, %90, %cst_52 {dimension_numbers = #tpu.dot_dimension_numbers<[2], [2], [1], [1], [0, 0, 0, 1, 1, 1], [0], [0]>} : vector<2x8x64xbf16>, vector<2x8x64xbf16>, vector<2x8x8xf32> -> vector<2x8x8xf32>
    "tpu.trace_stop"() : () -> ()
    %93 = arith.addf %92, %6 : vector<2x8x8xf32>
    %cst_53 = arith.constant dense<0xFF800000> : vector<2x8xf32>
    %94 = vector.multi_reduction <maximumf>, %93, %cst_53 [2] : vector<2x8x8xf32> to vector<2x8xf32>
    %95 = vector.shape_cast %94 : vector<2x8xf32> to vector<2x8x1xf32>
    %96 = vector.broadcast %95 : vector<2x8x1xf32> to vector<2x8x8xf32>
    %97 = arith.subf %93, %96 : vector<2x8x8xf32>
    %98 = math.exp %97 : vector<2x8x8xf32>
    %cst_54 = arith.constant dense<0.000000e+00> : vector<2x8xf32>
    %99 = vector.multi_reduction <add>, %98, %cst_54 [2] : vector<2x8x8xf32> to vector<2x8xf32>
    %100 = vector.shape_cast %99 : vector<2x8xf32> to vector<2x8x1xf32>
    %101 = tpu.reciprocal %100 {approx = true} : vector<2x8x1xf32> -> vector<2x8x1xf32>
    %102 = arith.truncf %98 : vector<2x8x8xf32> to vector<2x8x8xbf16>
    "tpu.trace_start"() <{level = 10 : i32, message = "bqk,bkd->bqd"}> : () -> ()
    %cst_55 = arith.constant dense<0.000000e+00> : vector<2x8x64xf32>
    %103 = tpu.matmul %102, %91, %cst_55 {dimension_numbers = #tpu.dot_dimension_numbers<[2], [1], [1], [2], [0, 0, 0, 1, 1, 2], [0], [0]>} : vector<2x8x8xbf16>, vector<2x8x64xbf16>, vector<2x8x64xf32> -> vector<2x8x64xf32>
    "tpu.trace_stop"() : () -> ()
    %104 = vector.broadcast %101 : vector<2x8x1xf32> to vector<2x8x64xf32>
    %105 = arith.mulf %103, %104 : vector<2x8x64xf32>
    %106 = arith.truncf %105 : vector<2x8x64xf32> to vector<2x8x64xbf16>
    %107 = tpu.concatenate %88, %106 in 2 : vector<2x8x64xbf16>, vector<2x8x64xbf16> -> vector<2x8x128xbf16>
    %c0_56 = arith.constant 0 : index
    %c0_57 = arith.constant 0 : index
    %c128_58 = arith.constant 128 : index
    %108 = vector.load %arg17[%c0_56, %c0_57, %c128_58] : memref<2x8x768xbf16, #tpu.memory_space<vmem>>, vector<2x8x128xbf16>
    tpu.vector_store %arg17[%c0_56, %c0_57, %c128_58], %107 {strides = array<i32>} : memref<2x8x768xbf16, #tpu.memory_space<vmem>>, vector<2x8x128xbf16>,
    %c0_59 = arith.constant 0 : index
    %c0_60 = arith.constant 0 : index
    %c256 = arith.constant 256 : index
    %109 = vector.load %arg14[%c0_59, %c0_60, %c256] : memref<2x8x768xbf16, #tpu.memory_space<vmem>>, vector<2x8x128xbf16>
    %c0_61 = arith.constant 0 : index
    %c0_62 = arith.constant 0 : index
    %c256_63 = arith.constant 256 : index
    %110 = vector.load %arg15[%c0_61, %c0_62, %c256_63] : memref<2x8x768xbf16, #tpu.memory_space<vmem>>, vector<2x8x128xbf16>
    %c0_64 = arith.constant 0 : index
    %c0_65 = arith.constant 0 : index
    %c256_66 = arith.constant 256 : index
    %111 = vector.load %arg16[%c0_64, %c0_65, %c256_66] : memref<2x8x768xbf16, #tpu.memory_space<vmem>>, vector<2x8x128xbf16>
    %112 = vector.extract_strided_slice %109 {offsets = [0, 0, 0], sizes = [2, 8, 64], strides = [1, 1, 1]} : vector<2x8x128xbf16> to vector<2x8x64xbf16>
    %113 = vector.extract_strided_slice %110 {offsets = [0, 0, 0], sizes = [2, 8, 64], strides = [1, 1, 1]} : vector<2x8x128xbf16> to vector<2x8x64xbf16>
    %114 = vector.extract_strided_slice %111 {offsets = [0, 0, 0], sizes = [2, 8, 64], strides = [1, 1, 1]} : vector<2x8x128xbf16> to vector<2x8x64xbf16>
    "tpu.trace_start"() <{level = 10 : i32, message = "bqd,bkd->bqk"}> : () -> ()
    %cst_67 = arith.constant dense<0.000000e+00> : vector<2x8x8xf32>
    %115 = tpu.matmul %112, %113, %cst_67 {dimension_numbers = #tpu.dot_dimension_numbers<[2], [2], [1], [1], [0, 0, 0, 1, 1, 1], [0], [0]>} : vector<2x8x64xbf16>, vector<2x8x64xbf16>, vector<2x8x8xf32> -> vector<2x8x8xf32>
    "tpu.trace_stop"() : () -> ()
    %116 = arith.addf %115, %6 : vector<2x8x8xf32>
    %cst_68 = arith.constant dense<0xFF800000> : vector<2x8xf32>
    %117 = vector.multi_reduction <maximumf>, %116, %cst_68 [2] : vector<2x8x8xf32> to vector<2x8xf32>
    %118 = vector.shape_cast %117 : vector<2x8xf32> to vector<2x8x1xf32>
    %119 = vector.broadcast %118 : vector<2x8x1xf32> to vector<2x8x8xf32>
    %120 = arith.subf %116, %119 : vector<2x8x8xf32>
    %121 = math.exp %120 : vector<2x8x8xf32>
    %cst_69 = arith.constant dense<0.000000e+00> : vector<2x8xf32>
    %122 = vector.multi_reduction <add>, %121, %cst_69 [2] : vector<2x8x8xf32> to vector<2x8xf32>
    %123 = vector.shape_cast %122 : vector<2x8xf32> to vector<2x8x1xf32>
    %124 = tpu.reciprocal %123 {approx = true} : vector<2x8x1xf32> -> vector<2x8x1xf32>
    %125 = arith.truncf %121 : vector<2x8x8xf32> to vector<2x8x8xbf16>
    "tpu.trace_start"() <{level = 10 : i32, message = "bqk,bkd->bqd"}> : () -> ()
    %cst_70 = arith.constant dense<0.000000e+00> : vector<2x8x64xf32>
    %126 = tpu.matmul %125, %114, %cst_70 {dimension_numbers = #tpu.dot_dimension_numbers<[2], [1], [1], [2], [0, 0, 0, 1, 1, 2], [0], [0]>} : vector<2x8x8xbf16>, vector<2x8x64xbf16>, vector<2x8x64xf32> -> vector<2x8x64xf32>
    "tpu.trace_stop"() : () -> ()
    %127 = vector.broadcast %124 : vector<2x8x1xf32> to vector<2x8x64xf32>
    %128 = arith.mulf %126, %127 : vector<2x8x64xf32>
    %129 = arith.truncf %128 : vector<2x8x64xf32> to vector<2x8x64xbf16>
    %130 = vector.extract_strided_slice %109 {offsets = [0, 0, 64], sizes = [2, 8, 64], strides = [1, 1, 1]} : vector<2x8x128xbf16> to vector<2x8x64xbf16>
    %131 = vector.extract_strided_slice %110 {offsets = [0, 0, 64], sizes = [2, 8, 64], strides = [1, 1, 1]} : vector<2x8x128xbf16> to vector<2x8x64xbf16>
    %132 = vector.extract_strided_slice %111 {offsets = [0, 0, 64], sizes = [2, 8, 64], strides = [1, 1, 1]} : vector<2x8x128xbf16> to vector<2x8x64xbf16>
    "tpu.trace_start"() <{level = 10 : i32, message = "bqd,bkd->bqk"}> : () -> ()
    %cst_71 = arith.constant dense<0.000000e+00> : vector<2x8x8xf32>
    %133 = tpu.matmul %130, %131, %cst_71 {dimension_numbers = #tpu.dot_dimension_numbers<[2], [2], [1], [1], [0, 0, 0, 1, 1, 1], [0], [0]>} : vector<2x8x64xbf16>, vector<2x8x64xbf16>, vector<2x8x8xf32> -> vector<2x8x8xf32>
    "tpu.trace_stop"() : () -> ()
    %134 = arith.addf %133, %6 : vector<2x8x8xf32>
    %cst_72 = arith.constant dense<0xFF800000> : vector<2x8xf32>
    %135 = vector.multi_reduction <maximumf>, %134, %cst_72 [2] : vector<2x8x8xf32> to vector<2x8xf32>
    %136 = vector.shape_cast %135 : vector<2x8xf32> to vector<2x8x1xf32>
    %137 = vector.broadcast %136 : vector<2x8x1xf32> to vector<2x8x8xf32>
    %138 = arith.subf %134, %137 : vector<2x8x8xf32>
    %139 = math.exp %138 : vector<2x8x8xf32>
    %cst_73 = arith.constant dense<0.000000e+00> : vector<2x8xf32>
    %140 = vector.multi_reduction <add>, %139, %cst_73 [2] : vector<2x8x8xf32> to vector<2x8xf32>
    %141 = vector.shape_cast %140 : vector<2x8xf32> to vector<2x8x1xf32>
    %142 = tpu.reciprocal %141 {approx = true} : vector<2x8x1xf32> -> vector<2x8x1xf32>
    %143 = arith.truncf %139 : vector<2x8x8xf32> to vector<2x8x8xbf16>
    "tpu.trace_start"() <{level = 10 : i32, message = "bqk,bkd->bqd"}> : () -> ()
    %cst_74 = arith.constant dense<0.000000e+00> : vector<2x8x64xf32>
    %144 = tpu.matmul %143, %132, %cst_74 {dimension_numbers = #tpu.dot_dimension_numbers<[2], [1], [1], [2], [0, 0, 0, 1, 1, 2], [0], [0]>} : vector<2x8x8xbf16>, vector<2x8x64xbf16>, vector<2x8x64xf32> -> vector<2x8x64xf32>
    "tpu.trace_stop"() : () -> ()
    %145 = vector.broadcast %142 : vector<2x8x1xf32> to vector<2x8x64xf32>
    %146 = arith.mulf %144, %145 : vector<2x8x64xf32>
    %147 = arith.truncf %146 : vector<2x8x64xf32> to vector<2x8x64xbf16>
    %148 = tpu.concatenate %129, %147 in 2 : vector<2x8x64xbf16>, vector<2x8x64xbf16> -> vector<2x8x128xbf16>
    %c0_75 = arith.constant 0 : index
    %c0_76 = arith.constant 0 : index
    %c256_77 = arith.constant 256 : index
    %149 = vector.load %arg17[%c0_75, %c0_76, %c256_77] : memref<2x8x768xbf16, #tpu.memory_space<vmem>>, vector<2x8x128xbf16>
    tpu.vector_store %arg17[%c0_75, %c0_76, %c256_77], %148 {strides = array<i32>} : memref<2x8x768xbf16, #tpu.memory_space<vmem>>, vector<2x8x128xbf16>,
    %c0_78 = arith.constant 0 : index
    %c0_79 = arith.constant 0 : index
    %c384 = arith.constant 384 : index
    %150 = vector.load %arg14[%c0_78, %c0_79, %c384] : memref<2x8x768xbf16, #tpu.memory_space<vmem>>, vector<2x8x128xbf16>
    %c0_80 = arith.constant 0 : index
    %c0_81 = arith.constant 0 : index
    %c384_82 = arith.constant 384 : index
    %151 = vector.load %arg15[%c0_80, %c0_81, %c384_82] : memref<2x8x768xbf16, #tpu.memory_space<vmem>>, vector<2x8x128xbf16>
    %c0_83 = arith.constant 0 : index
    %c0_84 = arith.constant 0 : index
    %c384_85 = arith.constant 384 : index
    %152 = vector.load %arg16[%c0_83, %c0_84, %c384_85] : memref<2x8x768xbf16, #tpu.memory_space<vmem>>, vector<2x8x128xbf16>
    %153 = vector.extract_strided_slice %150 {offsets = [0, 0, 0], sizes = [2, 8, 64], strides = [1, 1, 1]} : vector<2x8x128xbf16> to vector<2x8x64xbf16>
    %154 = vector.extract_strided_slice %151 {offsets = [0, 0, 0], sizes = [2, 8, 64], strides = [1, 1, 1]} : vector<2x8x128xbf16> to vector<2x8x64xbf16>
    %155 = vector.extract_strided_slice %152 {offsets = [0, 0, 0], sizes = [2, 8, 64], strides = [1, 1, 1]} : vector<2x8x128xbf16> to vector<2x8x64xbf16>
    "tpu.trace_start"() <{level = 10 : i32, message = "bqd,bkd->bqk"}> : () -> ()
    %cst_86 = arith.constant dense<0.000000e+00> : vector<2x8x8xf32>
    %156 = tpu.matmul %153, %154, %cst_86 {dimension_numbers = #tpu.dot_dimension_numbers<[2], [2], [1], [1], [0, 0, 0, 1, 1, 1], [0], [0]>} : vector<2x8x64xbf16>, vector<2x8x64xbf16>, vector<2x8x8xf32> -> vector<2x8x8xf32>
    "tpu.trace_stop"() : () -> ()
    %157 = arith.addf %156, %6 : vector<2x8x8xf32>
    %cst_87 = arith.constant dense<0xFF800000> : vector<2x8xf32>
    %158 = vector.multi_reduction <maximumf>, %157, %cst_87 [2] : vector<2x8x8xf32> to vector<2x8xf32>
    %159 = vector.shape_cast %158 : vector<2x8xf32> to vector<2x8x1xf32>
    %160 = vector.broadcast %159 : vector<2x8x1xf32> to vector<2x8x8xf32>
    %161 = arith.subf %157, %160 : vector<2x8x8xf32>
    %162 = math.exp %161 : vector<2x8x8xf32>
    %cst_88 = arith.constant dense<0.000000e+00> : vector<2x8xf32>
    %163 = vector.multi_reduction <add>, %162, %cst_88 [2] : vector<2x8x8xf32> to vector<2x8xf32>
    %164 = vector.shape_cast %163 : vector<2x8xf32> to vector<2x8x1xf32>
    %165 = tpu.reciprocal %164 {approx = true} : vector<2x8x1xf32> -> vector<2x8x1xf32>
    %166 = arith.truncf %162 : vector<2x8x8xf32> to vector<2x8x8xbf16>
    "tpu.trace_start"() <{level = 10 : i32, message = "bqk,bkd->bqd"}> : () -> ()
    %cst_89 = arith.constant dense<0.000000e+00> : vector<2x8x64xf32>
    %167 = tpu.matmul %166, %155, %cst_89 {dimension_numbers = #tpu.dot_dimension_numbers<[2], [1], [1], [2], [0, 0, 0, 1, 1, 2], [0], [0]>} : vector<2x8x8xbf16>, vector<2x8x64xbf16>, vector<2x8x64xf32> -> vector<2x8x64xf32>
    "tpu.trace_stop"() : () -> ()
    %168 = vector.broadcast %165 : vector<2x8x1xf32> to vector<2x8x64xf32>
    %169 = arith.mulf %167, %168 : vector<2x8x64xf32>
    %170 = arith.truncf %169 : vector<2x8x64xf32> to vector<2x8x64xbf16>
    %171 = vector.extract_strided_slice %150 {offsets = [0, 0, 64], sizes = [2, 8, 64], strides = [1, 1, 1]} : vector<2x8x128xbf16> to vector<2x8x64xbf16>
    %172 = vector.extract_strided_slice %151 {offsets = [0, 0, 64], sizes = [2, 8, 64], strides = [1, 1, 1]} : vector<2x8x128xbf16> to vector<2x8x64xbf16>
    %173 = vector.extract_strided_slice %152 {offsets = [0, 0, 64], sizes = [2, 8, 64], strides = [1, 1, 1]} : vector<2x8x128xbf16> to vector<2x8x64xbf16>
    "tpu.trace_start"() <{level = 10 : i32, message = "bqd,bkd->bqk"}> : () -> ()
    %cst_90 = arith.constant dense<0.000000e+00> : vector<2x8x8xf32>
    %174 = tpu.matmul %171, %172, %cst_90 {dimension_numbers = #tpu.dot_dimension_numbers<[2], [2], [1], [1], [0, 0, 0, 1, 1, 1], [0], [0]>} : vector<2x8x64xbf16>, vector<2x8x64xbf16>, vector<2x8x8xf32> -> vector<2x8x8xf32>
    "tpu.trace_stop"() : () -> ()
    %175 = arith.addf %174, %6 : vector<2x8x8xf32>
    %cst_91 = arith.constant dense<0xFF800000> : vector<2x8xf32>
    %176 = vector.multi_reduction <maximumf>, %175, %cst_91 [2] : vector<2x8x8xf32> to vector<2x8xf32>
    %177 = vector.shape_cast %176 : vector<2x8xf32> to vector<2x8x1xf32>
    %178 = vector.broadcast %177 : vector<2x8x1xf32> to vector<2x8x8xf32>
    %179 = arith.subf %175, %178 : vector<2x8x8xf32>
    %180 = math.exp %179 : vector<2x8x8xf32>
    %cst_92 = arith.constant dense<0.000000e+00> : vector<2x8xf32>
    %181 = vector.multi_reduction <add>, %180, %cst_92 [2] : vector<2x8x8xf32> to vector<2x8xf32>
    %182 = vector.shape_cast %181 : vector<2x8xf32> to vector<2x8x1xf32>
    %183 = tpu.reciprocal %182 {approx = true} : vector<2x8x1xf32> -> vector<2x8x1xf32>
    %184 = arith.truncf %180 : vector<2x8x8xf32> to vector<2x8x8xbf16>
    "tpu.trace_start"() <{level = 10 : i32, message = "bqk,bkd->bqd"}> : () -> ()
    %cst_93 = arith.constant dense<0.000000e+00> : vector<2x8x64xf32>
    %185 = tpu.matmul %184, %173, %cst_93 {dimension_numbers = #tpu.dot_dimension_numbers<[2], [1], [1], [2], [0, 0, 0, 1, 1, 2], [0], [0]>} : vector<2x8x8xbf16>, vector<2x8x64xbf16>, vector<2x8x64xf32> -> vector<2x8x64xf32>
    "tpu.trace_stop"() : () -> ()
    %186 = vector.broadcast %183 : vector<2x8x1xf32> to vector<2x8x64xf32>
    %187 = arith.mulf %185, %186 : vector<2x8x64xf32>
    %188 = arith.truncf %187 : vector<2x8x64xf32> to vector<2x8x64xbf16>
    %189 = tpu.concatenate %170, %188 in 2 : vector<2x8x64xbf16>, vector<2x8x64xbf16> -> vector<2x8x128xbf16>
    %c0_94 = arith.constant 0 : index
    %c0_95 = arith.constant 0 : index
    %c384_96 = arith.constant 384 : index
    %190 = vector.load %arg17[%c0_94, %c0_95, %c384_96] : memref<2x8x768xbf16, #tpu.memory_space<vmem>>, vector<2x8x128xbf16>
    tpu.vector_store %arg17[%c0_94, %c0_95, %c384_96], %189 {strides = array<i32>} : memref<2x8x768xbf16, #tpu.memory_space<vmem>>, vector<2x8x128xbf16>,
    %c0_97 = arith.constant 0 : index
    %c0_98 = arith.constant 0 : index
    %c512 = arith.constant 512 : index
    %191 = vector.load %arg14[%c0_97, %c0_98, %c512] : memref<2x8x768xbf16, #tpu.memory_space<vmem>>, vector<2x8x128xbf16>
    %c0_99 = arith.constant 0 : index
    %c0_100 = arith.constant 0 : index
    %c512_101 = arith.constant 512 : index
    %192 = vector.load %arg15[%c0_99, %c0_100, %c512_101] : memref<2x8x768xbf16, #tpu.memory_space<vmem>>, vector<2x8x128xbf16>
    %c0_102 = arith.constant 0 : index
    %c0_103 = arith.constant 0 : index
    %c512_104 = arith.constant 512 : index
    %193 = vector.load %arg16[%c0_102, %c0_103, %c512_104] : memref<2x8x768xbf16, #tpu.memory_space<vmem>>, vector<2x8x128xbf16>
    %194 = vector.extract_strided_slice %191 {offsets = [0, 0, 0], sizes = [2, 8, 64], strides = [1, 1, 1]} : vector<2x8x128xbf16> to vector<2x8x64xbf16>
    %195 = vector.extract_strided_slice %192 {offsets = [0, 0, 0], sizes = [2, 8, 64], strides = [1, 1, 1]} : vector<2x8x128xbf16> to vector<2x8x64xbf16>
    %196 = vector.extract_strided_slice %193 {offsets = [0, 0, 0], sizes = [2, 8, 64], strides = [1, 1, 1]} : vector<2x8x128xbf16> to vector<2x8x64xbf16>
    "tpu.trace_start"() <{level = 10 : i32, message = "bqd,bkd->bqk"}> : () -> ()
    %cst_105 = arith.constant dense<0.000000e+00> : vector<2x8x8xf32>
    %197 = tpu.matmul %194, %195, %cst_105 {dimension_numbers = #tpu.dot_dimension_numbers<[2], [2], [1], [1], [0, 0, 0, 1, 1, 1], [0], [0]>} : vector<2x8x64xbf16>, vector<2x8x64xbf16>, vector<2x8x8xf32> -> vector<2x8x8xf32>
    "tpu.trace_stop"() : () -> ()
    %198 = arith.addf %197, %6 : vector<2x8x8xf32>
    %cst_106 = arith.constant dense<0xFF800000> : vector<2x8xf32>
    %199 = vector.multi_reduction <maximumf>, %198, %cst_106 [2] : vector<2x8x8xf32> to vector<2x8xf32>
    %200 = vector.shape_cast %199 : vector<2x8xf32> to vector<2x8x1xf32>
    %201 = vector.broadcast %200 : vector<2x8x1xf32> to vector<2x8x8xf32>
    %202 = arith.subf %198, %201 : vector<2x8x8xf32>
    %203 = math.exp %202 : vector<2x8x8xf32>
    %cst_107 = arith.constant dense<0.000000e+00> : vector<2x8xf32>
    %204 = vector.multi_reduction <add>, %203, %cst_107 [2] : vector<2x8x8xf32> to vector<2x8xf32>
    %205 = vector.shape_cast %204 : vector<2x8xf32> to vector<2x8x1xf32>
    %206 = tpu.reciprocal %205 {approx = true} : vector<2x8x1xf32> -> vector<2x8x1xf32>
    %207 = arith.truncf %203 : vector<2x8x8xf32> to vector<2x8x8xbf16>
    "tpu.trace_start"() <{level = 10 : i32, message = "bqk,bkd->bqd"}> : () -> ()
    %cst_108 = arith.constant dense<0.000000e+00> : vector<2x8x64xf32>
    %208 = tpu.matmul %207, %196, %cst_108 {dimension_numbers = #tpu.dot_dimension_numbers<[2], [1], [1], [2], [0, 0, 0, 1, 1, 2], [0], [0]>} : vector<2x8x8xbf16>, vector<2x8x64xbf16>, vector<2x8x64xf32> -> vector<2x8x64xf32>
    "tpu.trace_stop"() : () -> ()
    %209 = vector.broadcast %206 : vector<2x8x1xf32> to vector<2x8x64xf32>
    %210 = arith.mulf %208, %209 : vector<2x8x64xf32>
    %211 = arith.truncf %210 : vector<2x8x64xf32> to vector<2x8x64xbf16>
    %212 = vector.extract_strided_slice %191 {offsets = [0, 0, 64], sizes = [2, 8, 64], strides = [1, 1, 1]} : vector<2x8x128xbf16> to vector<2x8x64xbf16>
    %213 = vector.extract_strided_slice %192 {offsets = [0, 0, 64], sizes = [2, 8, 64], strides = [1, 1, 1]} : vector<2x8x128xbf16> to vector<2x8x64xbf16>
    %214 = vector.extract_strided_slice %193 {offsets = [0, 0, 64], sizes = [2, 8, 64], strides = [1, 1, 1]} : vector<2x8x128xbf16> to vector<2x8x64xbf16>
    "tpu.trace_start"() <{level = 10 : i32, message = "bqd,bkd->bqk"}> : () -> ()
    %cst_109 = arith.constant dense<0.000000e+00> : vector<2x8x8xf32>
    %215 = tpu.matmul %212, %213, %cst_109 {dimension_numbers = #tpu.dot_dimension_numbers<[2], [2], [1], [1], [0, 0, 0, 1, 1, 1], [0], [0]>} : vector<2x8x64xbf16>, vector<2x8x64xbf16>, vector<2x8x8xf32> -> vector<2x8x8xf32>
    "tpu.trace_stop"() : () -> ()
    %216 = arith.addf %215, %6 : vector<2x8x8xf32>
    %cst_110 = arith.constant dense<0xFF800000> : vector<2x8xf32>
    %217 = vector.multi_reduction <maximumf>, %216, %cst_110 [2] : vector<2x8x8xf32> to vector<2x8xf32>
    %218 = vector.shape_cast %217 : vector<2x8xf32> to vector<2x8x1xf32>
    %219 = vector.broadcast %218 : vector<2x8x1xf32> to vector<2x8x8xf32>
    %220 = arith.subf %216, %219 : vector<2x8x8xf32>
    %221 = math.exp %220 : vector<2x8x8xf32>
    %cst_111 = arith.constant dense<0.000000e+00> : vector<2x8xf32>
    %222 = vector.multi_reduction <add>, %221, %cst_111 [2] : vector<2x8x8xf32> to vector<2x8xf32>
    %223 = vector.shape_cast %222 : vector<2x8xf32> to vector<2x8x1xf32>
    %224 = tpu.reciprocal %223 {approx = true} : vector<2x8x1xf32> -> vector<2x8x1xf32>
    %225 = arith.truncf %221 : vector<2x8x8xf32> to vector<2x8x8xbf16>
    "tpu.trace_start"() <{level = 10 : i32, message = "bqk,bkd->bqd"}> : () -> ()
    %cst_112 = arith.constant dense<0.000000e+00> : vector<2x8x64xf32>
    %226 = tpu.matmul %225, %214, %cst_112 {dimension_numbers = #tpu.dot_dimension_numbers<[2], [1], [1], [2], [0, 0, 0, 1, 1, 2], [0], [0]>} : vector<2x8x8xbf16>, vector<2x8x64xbf16>, vector<2x8x64xf32> -> vector<2x8x64xf32>
    "tpu.trace_stop"() : () -> ()
    %227 = vector.broadcast %224 : vector<2x8x1xf32> to vector<2x8x64xf32>
    %228 = arith.mulf %226, %227 : vector<2x8x64xf32>
    %229 = arith.truncf %228 : vector<2x8x64xf32> to vector<2x8x64xbf16>
    %230 = tpu.concatenate %211, %229 in 2 : vector<2x8x64xbf16>, vector<2x8x64xbf16> -> vector<2x8x128xbf16>
    %c0_113 = arith.constant 0 : index
    %c0_114 = arith.constant 0 : index
    %c512_115 = arith.constant 512 : index
    %231 = vector.load %arg17[%c0_113, %c0_114, %c512_115] : memref<2x8x768xbf16, #tpu.memory_space<vmem>>, vector<2x8x128xbf16>
    tpu.vector_store %arg17[%c0_113, %c0_114, %c512_115], %230 {strides = array<i32>} : memref<2x8x768xbf16, #tpu.memory_space<vmem>>, vector<2x8x128xbf16>,
    %c0_116 = arith.constant 0 : index
    %c0_117 = arith.constant 0 : index
    %c640 = arith.constant 640 : index
    %232 = vector.load %arg14[%c0_116, %c0_117, %c640] : memref<2x8x768xbf16, #tpu.memory_space<vmem>>, vector<2x8x128xbf16>
    %c0_118 = arith.constant 0 : index
    %c0_119 = arith.constant 0 : index
    %c640_120 = arith.constant 640 : index
    %233 = vector.load %arg15[%c0_118, %c0_119, %c640_120] : memref<2x8x768xbf16, #tpu.memory_space<vmem>>, vector<2x8x128xbf16>
    %c0_121 = arith.constant 0 : index
    %c0_122 = arith.constant 0 : index
    %c640_123 = arith.constant 640 : index
    %234 = vector.load %arg16[%c0_121, %c0_122, %c640_123] : memref<2x8x768xbf16, #tpu.memory_space<vmem>>, vector<2x8x128xbf16>
    %235 = vector.extract_strided_slice %232 {offsets = [0, 0, 0], sizes = [2, 8, 64], strides = [1, 1, 1]} : vector<2x8x128xbf16> to vector<2x8x64xbf16>
    %236 = vector.extract_strided_slice %233 {offsets = [0, 0, 0], sizes = [2, 8, 64], strides = [1, 1, 1]} : vector<2x8x128xbf16> to vector<2x8x64xbf16>
    %237 = vector.extract_strided_slice %234 {offsets = [0, 0, 0], sizes = [2, 8, 64], strides = [1, 1, 1]} : vector<2x8x128xbf16> to vector<2x8x64xbf16>
    "tpu.trace_start"() <{level = 10 : i32, message = "bqd,bkd->bqk"}> : () -> ()
    %cst_124 = arith.constant dense<0.000000e+00> : vector<2x8x8xf32>
    %238 = tpu.matmul %235, %236, %cst_124 {dimension_numbers = #tpu.dot_dimension_numbers<[2], [2], [1], [1], [0, 0, 0, 1, 1, 1], [0], [0]>} : vector<2x8x64xbf16>, vector<2x8x64xbf16>, vector<2x8x8xf32> -> vector<2x8x8xf32>
    "tpu.trace_stop"() : () -> ()
    %239 = arith.addf %238, %6 : vector<2x8x8xf32>
    %cst_125 = arith.constant dense<0xFF800000> : vector<2x8xf32>
    %240 = vector.multi_reduction <maximumf>, %239, %cst_125 [2] : vector<2x8x8xf32> to vector<2x8xf32>
    %241 = vector.shape_cast %240 : vector<2x8xf32> to vector<2x8x1xf32>
    %242 = vector.broadcast %241 : vector<2x8x1xf32> to vector<2x8x8xf32>
    %243 = arith.subf %239, %242 : vector<2x8x8xf32>
    %244 = math.exp %243 : vector<2x8x8xf32>
    %cst_126 = arith.constant dense<0.000000e+00> : vector<2x8xf32>
    %245 = vector.multi_reduction <add>, %244, %cst_126 [2] : vector<2x8x8xf32> to vector<2x8xf32>
    %246 = vector.shape_cast %245 : vector<2x8xf32> to vector<2x8x1xf32>
    %247 = tpu.reciprocal %246 {approx = true} : vector<2x8x1xf32> -> vector<2x8x1xf32>
    %248 = arith.truncf %244 : vector<2x8x8xf32> to vector<2x8x8xbf16>
    "tpu.trace_start"() <{level = 10 : i32, message = "bqk,bkd->bqd"}> : () -> ()
    %cst_127 = arith.constant dense<0.000000e+00> : vector<2x8x64xf32>
    %249 = tpu.matmul %248, %237, %cst_127 {dimension_numbers = #tpu.dot_dimension_numbers<[2], [1], [1], [2], [0, 0, 0, 1, 1, 2], [0], [0]>} : vector<2x8x8xbf16>, vector<2x8x64xbf16>, vector<2x8x64xf32> -> vector<2x8x64xf32>
    "tpu.trace_stop"() : () -> ()
    %250 = vector.broadcast %247 : vector<2x8x1xf32> to vector<2x8x64xf32>
    %251 = arith.mulf %249, %250 : vector<2x8x64xf32>
    %252 = arith.truncf %251 : vector<2x8x64xf32> to vector<2x8x64xbf16>
    %253 = vector.extract_strided_slice %232 {offsets = [0, 0, 64], sizes = [2, 8, 64], strides = [1, 1, 1]} : vector<2x8x128xbf16> to vector<2x8x64xbf16>
    %254 = vector.extract_strided_slice %233 {offsets = [0, 0, 64], sizes = [2, 8, 64], strides = [1, 1, 1]} : vector<2x8x128xbf16> to vector<2x8x64xbf16>
    %255 = vector.extract_strided_slice %234 {offsets = [0, 0, 64], sizes = [2, 8, 64], strides = [1, 1, 1]} : vector<2x8x128xbf16> to vector<2x8x64xbf16>
    "tpu.trace_start"() <{level = 10 : i32, message = "bqd,bkd->bqk"}> : () -> ()
    %cst_128 = arith.constant dense<0.000000e+00> : vector<2x8x8xf32>
    %256 = tpu.matmul %253, %254, %cst_128 {dimension_numbers = #tpu.dot_dimension_numbers<[2], [2], [1], [1], [0, 0, 0, 1, 1, 1], [0], [0]>} : vector<2x8x64xbf16>, vector<2x8x64xbf16>, vector<2x8x8xf32> -> vector<2x8x8xf32>
    "tpu.trace_stop"() : () -> ()
    %257 = arith.addf %256, %6 : vector<2x8x8xf32>
    %cst_129 = arith.constant dense<0xFF800000> : vector<2x8xf32>
    %258 = vector.multi_reduction <maximumf>, %257, %cst_129 [2] : vector<2x8x8xf32> to vector<2x8xf32>
    %259 = vector.shape_cast %258 : vector<2x8xf32> to vector<2x8x1xf32>
    %260 = vector.broadcast %259 : vector<2x8x1xf32> to vector<2x8x8xf32>
    %261 = arith.subf %257, %260 : vector<2x8x8xf32>
    %262 = math.exp %261 : vector<2x8x8xf32>
    %cst_130 = arith.constant dense<0.000000e+00> : vector<2x8xf32>
    %263 = vector.multi_reduction <add>, %262, %cst_130 [2] : vector<2x8x8xf32> to vector<2x8xf32>
    %264 = vector.shape_cast %263 : vector<2x8xf32> to vector<2x8x1xf32>
    %265 = tpu.reciprocal %264 {approx = true} : vector<2x8x1xf32> -> vector<2x8x1xf32>
    %266 = arith.truncf %262 : vector<2x8x8xf32> to vector<2x8x8xbf16>
    "tpu.trace_start"() <{level = 10 : i32, message = "bqk,bkd->bqd"}> : () -> ()
    %cst_131 = arith.constant dense<0.000000e+00> : vector<2x8x64xf32>
    %267 = tpu.matmul %266, %255, %cst_131 {dimension_numbers = #tpu.dot_dimension_numbers<[2], [1], [1], [2], [0, 0, 0, 1, 1, 2], [0], [0]>} : vector<2x8x8xbf16>, vector<2x8x64xbf16>, vector<2x8x64xf32> -> vector<2x8x64xf32>
    "tpu.trace_stop"() : () -> ()
    %268 = vector.broadcast %265 : vector<2x8x1xf32> to vector<2x8x64xf32>
    %269 = arith.mulf %267, %268 : vector<2x8x64xf32>
    %270 = arith.truncf %269 : vector<2x8x64xf32> to vector<2x8x64xbf16>
    %271 = tpu.concatenate %252, %270 in 2 : vector<2x8x64xbf16>, vector<2x8x64xbf16> -> vector<2x8x128xbf16>
    %c0_132 = arith.constant 0 : index
    %c0_133 = arith.constant 0 : index
    %c640_134 = arith.constant 640 : index
    %272 = vector.load %arg17[%c0_132, %c0_133, %c640_134] : memref<2x8x768xbf16, #tpu.memory_space<vmem>>, vector<2x8x128xbf16>
    tpu.vector_store %arg17[%c0_132, %c0_133, %c640_134], %271 {strides = array<i32>} : memref<2x8x768xbf16, #tpu.memory_space<vmem>>, vector<2x8x128xbf16>,
    %c0_135 = arith.constant 0 : index
    %c0_136 = arith.constant 0 : index
    %c0_137 = arith.constant 0 : index
    %273 = vector.load %arg17[%c0_135, %c0_136, %c0_137] : memref<2x8x768xbf16, #tpu.memory_space<vmem>>, vector<2x8x768xbf16>
    %274 = vector.shape_cast %273 : vector<2x8x768xbf16> to vector<16x768xbf16>
    %c0_138 = arith.constant 0 : index
    %c0_139 = arith.constant 0 : index
    %275 = vector.load %arg5[%c0_138, %c0_139] : memref<768x32xbf16, #tpu.memory_space<vmem>>, vector<768x32xbf16>
    %cst_140 = arith.constant dense<0.000000e+00> : vector<16x32xf32>
    %276 = tpu.matmul %274, %275, %cst_140 {dimension_numbers = #tpu.dot_dimension_numbers<[1], [0], [0], [1], [0, 0, 1, 1], [], []>} : vector<16x768xbf16>, vector<768x32xbf16>, vector<16x32xf32> -> vector<16x32xf32>
    %c0_141 = arith.constant 0 : index
    %c0_142 = arith.constant 0 : index
    %277 = vector.load %arg6[%c0_141, %c0_142] : memref<1x32xf32, #tpu.memory_space<vmem>>, vector<1x32xf32>
    %278 = vector.broadcast %277 : vector<1x32xf32> to vector<16x32xf32>
    %279 = arith.addf %276, %278 : vector<16x32xf32>
    %280 = arith.addf %8, %279 : vector<16x32xf32>
    %cst_143 = arith.constant dense<0.000000e+00> : vector<16xf32>
    %281 = vector.multi_reduction <add>, %280, %cst_143 [1] : vector<16x32xf32> to vector<16xf32>
    %282 = vector.shape_cast %281 : vector<16xf32> to vector<16x1xf32>
    %cst_144 = arith.constant 3.200000e+01 : f32
    %283 = vector.broadcast %cst_144 : f32 to vector<16x1xf32>
    %284 = arith.divf %282, %283 : vector<16x1xf32>
    %285 = vector.broadcast %284 : vector<16x1xf32> to vector<16x32xf32>
    %286 = arith.subf %280, %285 : vector<16x32xf32>
    %287 = arith.mulf %286, %286 : vector<16x32xf32>
    %cst_145 = arith.constant dense<0.000000e+00> : vector<16xf32>
    %288 = vector.multi_reduction <add>, %287, %cst_145 [1] : vector<16x32xf32> to vector<16xf32>
    %289 = vector.shape_cast %288 : vector<16xf32> to vector<16x1xf32>
    %cst_146 = arith.constant 3.200000e+01 : f32
    %290 = vector.broadcast %cst_146 : f32 to vector<16x1xf32>
    %291 = arith.divf %289, %290 : vector<16x1xf32>
    %292 = vector.broadcast %284 : vector<16x1xf32> to vector<16x32xf32>
    %293 = arith.subf %280, %292 : vector<16x32xf32>
    %cst_147 = arith.constant 9.99999974E-6 : f32
    %294 = vector.broadcast %cst_147 : f32 to vector<16x1xf32>
    %295 = arith.addf %291, %294 : vector<16x1xf32>
    %296 = math.rsqrt %295 : vector<16x1xf32>
    %297 = vector.broadcast %296 : vector<16x1xf32> to vector<16x32xf32>
    %298 = arith.mulf %293, %297 : vector<16x32xf32>
    %c0_148 = arith.constant 0 : index
    %c0_149 = arith.constant 0 : index
    %299 = vector.load %arg7[%c0_148, %c0_149] : memref<1x32xf32, #tpu.memory_space<vmem>>, vector<1x32xf32>
    %300 = vector.broadcast %299 : vector<1x32xf32> to vector<16x32xf32>
    %301 = arith.mulf %298, %300 : vector<16x32xf32>
    %c0_150 = arith.constant 0 : index
    %c0_151 = arith.constant 0 : index
    %302 = vector.load %arg8[%c0_150, %c0_151] : memref<1x32xf32, #tpu.memory_space<vmem>>, vector<1x32xf32>
    %303 = vector.broadcast %302 : vector<1x32xf32> to vector<16x32xf32>
    %304 = arith.addf %301, %303 : vector<16x32xf32>
    %305 = vector.shape_cast %304 : vector<16x32xf32> to vector<2x8x32xf32>
    "tpu.trace_start"() <{level = 10 : i32, message = "bqs,bse->bqe"}> : () -> ()
    %cst_152 = arith.constant dense<0.000000e+00> : vector<2x1x32xf32>
    %306 = tpu.matmul %0, %305, %cst_152 {dimension_numbers = #tpu.dot_dimension_numbers<[2], [1], [1], [2], [0, 0, 0, 1, 1, 2], [0], [0]>} : vector<2x1x8xf32>, vector<2x8x32xf32>, vector<2x1x32xf32> -> vector<2x1x32xf32>
    "tpu.trace_stop"() : () -> ()
    %cst_153 = arith.constant dense<0.000000e+00> : vector<2x1xf32>
    %307 = vector.multi_reduction <add>, %0, %cst_153 [2] : vector<2x1x8xf32> to vector<2x1xf32>
    %308 = vector.shape_cast %307 : vector<2x1xf32> to vector<2x1x1xf32>
    %309 = vector.broadcast %308 : vector<2x1x1xf32> to vector<2x1x32xf32>
    %310 = arith.divf %306, %309 : vector<2x1x32xf32>
    %311 = vector.shape_cast %310 : vector<2x1x32xf32> to vector<2x32xf32>
    %c0_154 = arith.constant 0 : index
    %c0_155 = arith.constant 0 : index
    %312 = vector.load %arg9[%c0_154, %c0_155] : memref<32x128xf32, #tpu.memory_space<vmem>>, vector<32x128xf32>
    %cst_156 = arith.constant dense<0.000000e+00> : vector<2x128xf32>
    %313 = tpu.matmul %311, %312, %cst_156 {dimension_numbers = #tpu.dot_dimension_numbers<[1], [0], [0], [1], [0, 0, 1, 1], [], []>} : vector<2x32xf32>, vector<32x128xf32>, vector<2x128xf32> -> vector<2x128xf32>
    %c0_157 = arith.constant 0 : index
    %c0_158 = arith.constant 0 : index
    %314 = vector.load %arg10[%c0_157, %c0_158] : memref<1x128xf32, #tpu.memory_space<vmem>>, vector<1x128xf32>
    %315 = vector.broadcast %314 : vector<1x128xf32> to vector<2x128xf32>
    %316 = arith.addf %313, %315 : vector<2x128xf32>
    %317 = math.tanh %316 : vector<2x128xf32>
    %c0_159 = arith.constant 0 : index
    %c0_160 = arith.constant 0 : index
    %318 = vector.load %arg11[%c0_159, %c0_160] : memref<1x128xf32, #tpu.memory_space<vmem>>, vector<1x128xf32>
    "tpu.trace_start"() <{level = 10 : i32, message = "ok,tk->ot"}> : () -> ()
    %cst_161 = arith.constant dense<0.000000e+00> : vector<1x2xf32>
    %319 = tpu.matmul %318, %317, %cst_161 {dimension_numbers = #tpu.dot_dimension_numbers<[1], [1], [0], [0], [0, 0, 1, 0], [], []>} : vector<1x128xf32>, vector<2x128xf32>, vector<1x2xf32> -> vector<1x2xf32>
    "tpu.trace_stop"() : () -> ()
    %c0_162 = arith.constant 0 : index
    %c0_163 = arith.constant 0 : index
    %320 = vector.load %arg12[%c0_162, %c0_163] : memref<1x1xf32, #tpu.memory_space<vmem>>, vector<1x1xf32>
    %321 = vector.broadcast %320 : vector<1x1xf32> to vector<1x2xf32>
    %322 = arith.addf %319, %321 : vector<1x2xf32>
    %c0_164 = arith.constant 0 : index
    %c0_165 = arith.constant 0 : index
    %323 = vector.load %arg13[%c0_164, %c0_165] : memref<1x2xf32, #tpu.memory_space<vmem>>, vector<1x2xf32>
    tpu.vector_store %arg13[%c0_164, %c0_165], %322 {strides = array<i32>} : memref<1x2xf32, #tpu.memory_space<vmem>>, vector<1x2xf32>,
    return
  }
  func.func @transform_0(%arg0: i32) -> (i32, i32, i32) {
    %c0_i32 = arith.constant 0 : i32
    %c0_i32_0 = arith.constant 0 : i32
    %c0_i32_1 = arith.constant 0 : i32
    return %arg0, %c0_i32, %c0_i32_0 : i32, i32, i32
  }
  func.func @transform_1(%arg0: i32) -> (i32, i32, i32) {
    %c0_i32 = arith.constant 0 : i32
    %c0_i32_0 = arith.constant 0 : i32
    %c0_i32_1 = arith.constant 0 : i32
    return %arg0, %c0_i32, %c0_i32_0 : i32, i32, i32
  }
  func.func @transform_2(%arg0: i32) -> (i32, i32) {
    %c0_i32 = arith.constant 0 : i32
    %c0_i32_0 = arith.constant 0 : i32
    %c0_i32_1 = arith.constant 0 : i32
    return %c0_i32, %c0_i32_0 : i32, i32
  }
  func.func @transform_3(%arg0: i32) -> (i32, i32) {
    %c0_i32 = arith.constant 0 : i32
    %c0_i32_0 = arith.constant 0 : i32
    %c0_i32_1 = arith.constant 0 : i32
    return %c0_i32, %c0_i32_0 : i32, i32
  }
  func.func @transform_4(%arg0: i32) -> (i32, i32) {
    %c0_i32 = arith.constant 0 : i32
    %c0_i32_0 = arith.constant 0 : i32
    %c0_i32_1 = arith.constant 0 : i32
    return %c0_i32, %c0_i32_0 : i32, i32
  }
  func.func @transform_5(%arg0: i32) -> (i32, i32) {
    %c0_i32 = arith.constant 0 : i32
    %c0_i32_0 = arith.constant 0 : i32
    %c0_i32_1 = arith.constant 0 : i32
    return %c0_i32, %c0_i32_0 : i32, i32
  }
  func.func @transform_6(%arg0: i32) -> (i32, i32) {
    %c0_i32 = arith.constant 0 : i32
    %c0_i32_0 = arith.constant 0 : i32
    %c0_i32_1 = arith.constant 0 : i32
    return %c0_i32, %c0_i32_0 : i32, i32
  }
  func.func @transform_7(%arg0: i32) -> (i32, i32) {
    %c0_i32 = arith.constant 0 : i32
    %c0_i32_0 = arith.constant 0 : i32
    %c0_i32_1 = arith.constant 0 : i32
    return %c0_i32, %c0_i32_0 : i32, i32
  }
  func.func @transform_8(%arg0: i32) -> (i32, i32) {
    %c0_i32 = arith.constant 0 : i32
    %c0_i32_0 = arith.constant 0 : i32
    %c0_i32_1 = arith.constant 0 : i32
    return %c0_i32, %c0_i32_0 : i32, i32
  }
  func.func @transform_9(%arg0: i32) -> (i32, i32) {
    %c0_i32 = arith.constant 0 : i32
    %c0_i32_0 = arith.constant 0 : i32
    %c0_i32_1 = arith.constant 0 : i32
    return %c0_i32, %c0_i32_0 : i32, i32
  }
  func.func @transform_10(%arg0: i32) -> (i32, i32) {
    %c0_i32 = arith.constant 0 : i32
    %c0_i32_0 = arith.constant 0 : i32
    %c0_i32_1 = arith.constant 0 : i32
    return %c0_i32, %c0_i32_0 : i32, i32
  }
  func.func @transform_11(%arg0: i32) -> (i32, i32) {
    %c0_i32 = arith.constant 0 : i32
    %c0_i32_0 = arith.constant 0 : i32
    %c0_i32_1 = arith.constant 0 : i32
    return %c0_i32, %c0_i32_0 : i32, i32
  }
  func.func @transform_12(%arg0: i32) -> (i32, i32) {
    %c0_i32 = arith.constant 0 : i32
    %c0_i32_0 = arith.constant 0 : i32
    return %arg0, %c0_i32 : i32, i32
  }
}

</mosaic_0001>

<llo_original>
// kernel: tpu_custom_call.1
$region0: #{tpu_custom_call.1}
  #allocation0 [shape = 'u32[]', space=smem, size = 0x4, offset = 0x4, fixed_abs, tag = 'smem constant byte address 0x4 - core index']
  #allocation1 [shape = 'u32[144,128]{1,0:T(1,128)}', space=vmem, size = 0x12000, scoped, tag = 'internal scratch']
  #allocation2 [shape = 'bf16[2,8,768]{2,1,0:T(8,128)(2,1)}', space=vmem, size = 0x6000, scoped, tag = 'scratch operand']
  #allocation3 [shape = 'bf16[2,8,768]{2,1,0:T(8,128)(2,1)}', space=vmem, size = 0x6000, scoped, tag = 'scratch operand']
  #allocation4 [shape = 'bf16[2,8,768]{2,1,0:T(8,128)(2,1)}', space=vmem, size = 0x6000, scoped, tag = 'scratch operand']
  #allocation5 [shape = 'bf16[2,8,768]{2,1,0:T(8,128)(2,1)}', space=vmem, size = 0x6000, scoped, tag = 'scratch operand']
  #allocation6 [shape = 'f32[1,1]{1,0:T(1,128)S(1)}', space=vmem, size = 0x200, scoped, tag = 'scoped memory for tpu_custom_call.1']
  %s0 = inlined_call_operand.vmem [shape: f32[2,8,32], index: 0, kind: input, shape index: {}]
  %s1 = inlined_call_operand.vmem [shape: f32[2,1,8], index: 1, kind: input, shape index: {}]
  %s2 = inlined_call_operand.vmem [shape: bf16[32,2304], index: 2, kind: input, shape index: {}]
  %s3 = inlined_call_operand.vmem [shape: f32[1,2304], index: 3, kind: input, shape index: {}]
  %s4 = inlined_call_operand.vmem [shape: bf16[768,32], index: 4, kind: input, shape index: {}]
  %s5 = inlined_call_operand.vmem [shape: f32[1,32], index: 5, kind: input, shape index: {}]
  %s6 = inlined_call_operand.vmem [shape: f32[1,32], index: 6, kind: input, shape index: {}]
  %s7 = inlined_call_operand.vmem [shape: f32[1,32], index: 7, kind: input, shape index: {}]
  %s8 = inlined_call_operand.vmem [shape: f32[32,128], index: 8, kind: input, shape index: {}]
  %s9 = inlined_call_operand.vmem [shape: f32[1,128], index: 9, kind: input, shape index: {}]
  %s10 = inlined_call_operand.vmem [shape: f32[1,128], index: 10, kind: input, shape index: {}]
  %s11 = inlined_call_operand.<no memory space> [shape: f32[1,1], index: 11, kind: input, shape index: {}]
  %s12 = inlined_call_operand.hbm [shape: f32[1,2], index: 12, kind: output, shape index: {}]
  %s13 = sld [smem:[#allocation0]]
  $region58: #{tpu_custom_call.1} parent=0
    _
  %s15 = ssub.s32 1, %s13
  %s16 = scalar_select 0, %s15, %s13
  %v17 = vstv %s11
  %18 = vst [vmem:[#allocation6] sm:$0x1] %v17
  $region1: #{tpu_custom_call.1} parent=0
    #allocation7 [shape = 'u8[512]{0}', space=vmem, size = 0x400, scoped, tag = 'output window, operand 0, single buffered']
    #allocation8 [shape = 's32[1]{0}', space=sflag, size = 0x4, scoped, tag = 'scoped memory for tpu_custom_call.1']
    %19 = vsyncpa [#allocation8], 0
    // Predicated region
    $region2: #{tpu_custom_call.1} parent=1 // pred_check
      _
    $region3: #{tpu_custom_call.1} parent=1 // pred_check_branch
      %21 = sbr.rel (0) target = $region5
    $region4: #{tpu_custom_call.1} parent=1 // pred_region
      _
    $region5: #{tpu_custom_call.1} parent=1 // pred_fallthru
      _
    // Predicated region
    $region6: #{tpu_custom_call.1} parent=1 // pred_check
      _
    $region7: #{tpu_custom_call.1} parent=1 // pred_check_branch
      %23 = sbr.rel (0) target = $region9
    $region8: #{tpu_custom_call.1} parent=1 // pred_region
      _
    $region9: #{tpu_custom_call.1} parent=1 // pred_fallthru
      _
    // Predicated region
    $region10: #{tpu_custom_call.1} parent=1 // pred_check
      _
    $region11: #{tpu_custom_call.1} parent=1 // pred_check_branch
      %25 = sbr.rel (0) target = $region13
    $region12: #{tpu_custom_call.1} parent=1 // pred_region
      _
    $region13: #{tpu_custom_call.1} parent=1 // pred_fallthru
      _
    // Predicated region
    $region14: #{tpu_custom_call.1} parent=1 // pred_check
      _
    $region15: #{tpu_custom_call.1} parent=1 // pred_check_branch
      %27 = sbr.rel (0) target = $region17
    $region16: #{tpu_custom_call.1} parent=1 // pred_region
      _
    $region17: #{tpu_custom_call.1} parent=1 // pred_fallthru
      _
    // Predicated region
    $region18: #{tpu_custom_call.1} parent=1 // pred_check
      _
    $region19: #{tpu_custom_call.1} parent=1 // pred_check_branch
      %29 = sbr.rel (0) target = $region21
    $region20: #{tpu_custom_call.1} parent=1 // pred_region
      _
    $region21: #{tpu_custom_call.1} parent=1 // pred_fallthru
      _
    // Predicated region
    $region22: #{tpu_custom_call.1} parent=1 // pred_check
      _
    $region23: #{tpu_custom_call.1} parent=1 // pred_check_branch
      %31 = sbr.rel (0) target = $region25
    $region24: #{tpu_custom_call.1} parent=1 // pred_region
      _
    $region25: #{tpu_custom_call.1} parent=1 // pred_fallthru
      _
    // Predicated region
    $region26: #{tpu_custom_call.1} parent=1 // pred_check
      _
    $region27: #{tpu_custom_call.1} parent=1 // pred_check_branch
      %33 = sbr.rel (0) target = $region29
    $region28: #{tpu_custom_call.1} parent=1 // pred_region
      _
    $region29: #{tpu_custom_call.1} parent=1 // pred_fallthru
      _
    // Predicated region
    $region30: #{tpu_custom_call.1} parent=1 // pred_check
      _
    $region31: #{tpu_custom_call.1} parent=1 // pred_check_branch
      %35 = sbr.rel (0) target = $region33
    $region32: #{tpu_custom_call.1} parent=1 // pred_region
      _
    $region33: #{tpu_custom_call.1} parent=1 // pred_fallthru
      _
    // Predicated region
    $region34: #{tpu_custom_call.1} parent=1 // pred_check
      _
    $region35: #{tpu_custom_call.1} parent=1 // pred_check_branch
      %37 = sbr.rel (0) target = $region37
    $region36: #{tpu_custom_call.1} parent=1 // pred_region
      _
    $region37: #{tpu_custom_call.1} parent=1 // pred_fallthru
      _
    // Predicated region
    $region38: #{tpu_custom_call.1} parent=1 // pred_check
      _
    $region39: #{tpu_custom_call.1} parent=1 // pred_check_branch
      %39 = sbr.rel (0) target = $region41
    $region40: #{tpu_custom_call.1} parent=1 // pred_region
      _
    $region41: #{tpu_custom_call.1} parent=1 // pred_fallthru
      _
    // Predicated region
    $region42: #{tpu_custom_call.1} parent=1 // pred_check
      _
    $region43: #{tpu_custom_call.1} parent=1 // pred_check_branch
      %41 = sbr.rel (0) target = $region45
    $region44: #{tpu_custom_call.1} parent=1 // pred_region
      _
    $region45: #{tpu_custom_call.1} parent=1 // pred_fallthru
      _
    // Predicated region
    $region46: #{tpu_custom_call.1} parent=1 // pred_check
      _
    $region47: #{tpu_custom_call.1} parent=1 // pred_check_branch
      %43 = sbr.rel (0) target = $region49
    $region48: #{tpu_custom_call.1} parent=1 // pred_region
      _
    $region49: #{tpu_custom_call.1} parent=1 // pred_fallthru
      _
    %v45 = vld [vmem:[%s1] sm:$0x1]
    %v46 = vld [vmem:[%s1 + $0x1] sm:$0x1]
    %v47 = vsub.f32 %v45, 1.0
    %v48 = vsub.f32 %v46, 1.0
    %v49 = vmul.f32 %v47, 1e+09
    %v50 = vmul.f32 %v48, 1e+09
    %v53 = vlaneseq
    %v54 = vshrl.u32 %v53, 7
    %v55 = vsub.s32 0, %v54
    %v56 = vrot.slane %v49, %v55
    %v57 = vlaneseq
    %v58 = vshrl.u32 %v57, 7
    %v59 = vsub.s32 0, %v58
    %v60 = vrot.slane %v50, %v59
    %v63 = vld [vmem:[%s0] sm:$0xff]
    %v64 = vld [vmem:[%s0 + $0x8] sm:$0xff]
    %v65 = vpack.c.bf16 %v64, %v63
    %v66 = vld [vmem:[%s2] sm:$0xff]
    %v67 = vld [vmem:[%s2 + $0x8] sm:$0xff]
    %v68 = vld [vmem:[%s2 + $0x10] sm:$0xff]
    %v69 = vld [vmem:[%s2 + $0x18] sm:$0xff]
    %v70 = vld [vmem:[%s2 + $0x20] sm:$0xff]
    %v71 = vld [vmem:[%s2 + $0x28] sm:$0xff]
    %v72 = vld [vmem:[%s2 + $0x30] sm:$0xff]
    %v73 = vld [vmem:[%s2 + $0x38] sm:$0xff]
    %v74 = vld [vmem:[%s2 + $0x40] sm:$0xff]
    %v75 = vld [vmem:[%s2 + $0x48] sm:$0xff]
    %v76 = vld [vmem:[%s2 + $0x50] sm:$0xff]
    %v77 = vld [vmem:[%s2 + $0x58] sm:$0xff]
    %v78 = vld [vmem:[%s2 + $0x60] sm:$0xff]
    %v79 = vld [vmem:[%s2 + $0x68] sm:$0xff]
    %v80 = vld [vmem:[%s2 + $0x70] sm:$0xff]
    %v81 = vld [vmem:[%s2 + $0x78] sm:$0xff]
    %v82 = vld [vmem:[%s2 + $0x80] sm:$0xff]
    %v83 = vld [vmem:[%s2 + $0x88] sm:$0xff]
    %v84 = vld [vmem:[%s2 + $0x90] sm:$0xff]
    %v85 = vld [vmem:[%s2 + $0x98] sm:$0xff]
    %v86 = vld [vmem:[%s2 + $0xa0] sm:$0xff]
    %v87 = vld [vmem:[%s2 + $0xa8] sm:$0xff]
    %v88 = vld [vmem:[%s2 + $0xb0] sm:$0xff]
    %v89 = vld [vmem:[%s2 + $0xb8] sm:$0xff]
    %v90 = vld [vmem:[%s2 + $0xc0] sm:$0xff]
    %v91 = vld [vmem:[%s2 + $0xc8] sm:$0xff]
    %v92 = vld [vmem:[%s2 + $0xd0] sm:$0xff]
    %v93 = vld [vmem:[%s2 + $0xd8] sm:$0xff]
    %v94 = vld [vmem:[%s2 + $0xe0] sm:$0xff]
    %v95 = vld [vmem:[%s2 + $0xe8] sm:$0xff]
    %v96 = vld [vmem:[%s2 + $0xf0] sm:$0xff]
    %v97 = vld [vmem:[%s2 + $0xf8] sm:$0xff]
    %v98 = vld [vmem:[%s2 + $0x100] sm:$0xff]
    %v99 = vld [vmem:[%s2 + $0x108] sm:$0xff]
    %v100 = vld [vmem:[%s2 + $0x110] sm:$0xff]
    %v101 = vld [vmem:[%s2 + $0x118] sm:$0xff]
    %v102 = vld [vmem:[%s3] sm:$0xff]
    %v103 = vld [vmem:[%s3 + $0x8] sm:$0xff]
    %v104 = vld [vmem:[%s3 + $0x10] sm:$0x3]
    %v108 = vlaneseq
    %v109 = vshrl.u32 %v108, 7
    %v110 = vsub.s32 0, %v109
    %v111 = vrot.slane %v102, %v110
    %v112 = vlaneseq
    %v113 = vshrl.u32 %v112, 7
    %v114 = vsub.s32 1, %v113
    %v115 = vrot.slane %v102, %v114
    %v116 = vlaneseq
    %v117 = vshrl.u32 %v116, 7
    %v118 = vsub.s32 2, %v117
    %v119 = vrot.slane %v102, %v118
    %v120 = vlaneseq
    %v121 = vshrl.u32 %v120, 7
    %v122 = vsub.s32 3, %v121
    %v123 = vrot.slane %v102, %v122
    %v124 = vlaneseq
    %v125 = vshrl.u32 %v124, 7
    %v126 = vsub.s32 4, %v125
    %v127 = vrot.slane %v102, %v126
    %v128 = vlaneseq
    %v129 = vshrl.u32 %v128, 7
    %v130 = vsub.s32 5, %v129
    %v131 = vrot.slane %v102, %v130
    %v132 = vlaneseq
    %v133 = vshrl.u32 %v132, 7
    %v134 = vsub.s32 6, %v133
    %v135 = vrot.slane %v102, %v134
    %v136 = vlaneseq
    %v137 = vshrl.u32 %v136, 7
    %v138 = vsub.s32 7, %v137
    %v139 = vrot.slane %v102, %v138
    %v140 = vlaneseq
    %v141 = vshrl.u32 %v140, 7
    %v142 = vsub.s32 0, %v141
    %v143 = vrot.slane %v103, %v142
    %v144 = vlaneseq
    %v145 = vshrl.u32 %v144, 7
    %v146 = vsub.s32 1, %v145
    %v147 = vrot.slane %v103, %v146
    %v148 = vlaneseq
    %v149 = vshrl.u32 %v148, 7
    %v150 = vsub.s32 2, %v149
    %v151 = vrot.slane %v103, %v150
    %v152 = vlaneseq
    %v153 = vshrl.u32 %v152, 7
    %v154 = vsub.s32 3, %v153
    %v155 = vrot.slane %v103, %v154
    %v156 = vlaneseq
    %v157 = vshrl.u32 %v156, 7
    %v158 = vsub.s32 4, %v157
    %v159 = vrot.slane %v103, %v158
    %v160 = vlaneseq
    %v161 = vshrl.u32 %v160, 7
    %v162 = vsub.s32 5, %v161
    %v163 = vrot.slane %v103, %v162
    %v164 = vlaneseq
    %v165 = vshrl.u32 %v164, 7
    %v166 = vsub.s32 6, %v165
    %v167 = vrot.slane %v103, %v166
    %v168 = vlaneseq
    %v169 = vshrl.u32 %v168, 7
    %v170 = vsub.s32 7, %v169
    %v171 = vrot.slane %v103, %v170
    %v172 = vlaneseq
    %v173 = vshrl.u32 %v172, 7
    %v174 = vsub.s32 0, %v173
    %v175 = vrot.slane %v104, %v174
    %v176 = vlaneseq
    %v177 = vshrl.u32 %v176, 7
    %v178 = vsub.s32 1, %v177
    %v179 = vrot.slane %v104, %v178
    %v234 = vunpack.c.l.b16 %v66
    %v235 = vunpack.c.h.b16 %v66
    %v236 = vunpack.c.l.b16 %v67
    %v237 = vunpack.c.h.b16 %v67
    %v238 = vunpack.c.l.b16 %v68
    %v239 = vunpack.c.h.b16 %v68
    %v240 = vunpack.c.l.b16 %v69
    %v241 = vunpack.c.h.b16 %v69
    %v242 = vunpack.c.l.b16 %v70
    %v243 = vunpack.c.h.b16 %v70
    %v244 = vunpack.c.l.b16 %v71
    %v245 = vunpack.c.h.b16 %v71
    %v246 = vunpack.c.l.b16 %v72
    %v247 = vunpack.c.h.b16 %v72
    %v248 = vunpack.c.l.b16 %v73
    %v249 = vunpack.c.h.b16 %v73
    %v250 = vunpack.c.l.b16 %v74
    %v251 = vunpack.c.h.b16 %v74
    %v252 = vunpack.c.l.b16 %v75
    %v253 = vunpack.c.h.b16 %v75
    %v254 = vunpack.c.l.b16 %v76
    %v255 = vunpack.c.h.b16 %v76
    %v256 = vunpack.c.l.b16 %v77
    %v257 = vunpack.c.h.b16 %v77
    %v258 = vunpack.c.l.b16 %v78
    %v259 = vunpack.c.h.b16 %v78
    %v260 = vunpack.c.l.b16 %v79
    %v261 = vunpack.c.h.b16 %v79
    %v262 = vunpack.c.l.b16 %v80
    %v263 = vunpack.c.h.b16 %v80
    %v264 = vunpack.c.l.b16 %v81
    %v265 = vunpack.c.h.b16 %v81
    %v266 = vunpack.c.l.b16 %v82
    %v267 = vunpack.c.h.b16 %v82
    %v268 = vunpack.c.l.b16 %v83
    %v269 = vunpack.c.h.b16 %v83
    %v270 = vunpack.c.l.b16 %v84
    %v271 = vunpack.c.h.b16 %v84
    %v272 = vunpack.c.l.b16 %v85
    %v273 = vunpack.c.h.b16 %v85
    %v274 = vunpack.c.l.b16 %v86
    %v275 = vunpack.c.h.b16 %v86
    %v276 = vunpack.c.l.b16 %v87
    %v277 = vunpack.c.h.b16 %v87
    %v278 = vunpack.c.l.b16 %v88
    %v279 = vunpack.c.h.b16 %v88
    %v280 = vunpack.c.l.b16 %v89
    %v281 = vunpack.c.h.b16 %v89
    %v282 = vunpack.c.l.b16 %v90
    %v283 = vunpack.c.h.b16 %v90
    %v284 = vunpack.c.l.b16 %v91
    %v285 = vunpack.c.h.b16 %v91
    %v286 = vunpack.c.l.b16 %v92
    %v287 = vunpack.c.h.b16 %v92
    %v288 = vunpack.c.l.b16 %v93
    %v289 = vunpack.c.h.b16 %v93
    %v290 = vunpack.c.l.b16 %v94
    %v291 = vunpack.c.h.b16 %v94
    %v292 = vunpack.c.l.b16 %v95
    %v293 = vunpack.c.h.b16 %v95
    %v294 = vunpack.c.l.b16 %v96
    %v295 = vunpack.c.h.b16 %v96
    %v296 = vunpack.c.l.b16 %v97
    %v297 = vunpack.c.h.b16 %v97
    %v298 = vunpack.c.l.b16 %v98
    %v299 = vunpack.c.h.b16 %v98
    %v300 = vunpack.c.l.b16 %v99
    %v301 = vunpack.c.h.b16 %v99
    %v302 = vunpack.c.l.b16 %v100
    %v303 = vunpack.c.h.b16 %v100
    %v304 = vunpack.c.l.b16 %v101
    %v305 = vunpack.c.h.b16 %v101
    %v306 = vpack.c.b16 %v252, %v234
    %v307 = vpack.c.b16 %v253, %v235
    %v308 = vpack.c.b16 %v254, %v236
    %v309 = vpack.c.b16 %v255, %v237
    %v310 = vpack.c.b16 %v256, %v238
    %v311 = vpack.c.b16 %v257, %v239
    %v312 = vpack.c.b16 %v258, %v240
    %v313 = vpack.c.b16 %v259, %v241
    %v314 = vpack.c.b16 %v260, %v242
    %v315 = vpack.c.b16 %v261, %v243
    %v316 = vpack.c.b16 %v262, %v244
    %v317 = vpack.c.b16 %v263, %v245
    %v318 = vpack.c.b16 %v264, %v246
    %v319 = vpack.c.b16 %v265, %v247
    %v320 = vpack.c.b16 %v266, %v248
    %v321 = vpack.c.b16 %v267, %v249
    %v322 = vpack.c.b16 %v268, %v250
    %v323 = vpack.c.b16 %v269, %v251
    %v324 = vpack.c.b16 %v288, %v270
    %v325 = vpack.c.b16 %v289, %v271
    %v326 = vpack.c.b16 %v290, %v272
    %v327 = vpack.c.b16 %v291, %v273
    %v328 = vpack.c.b16 %v292, %v274
    %v329 = vpack.c.b16 %v293, %v275
    %v330 = vpack.c.b16 %v294, %v276
    %v331 = vpack.c.b16 %v295, %v277
    %v332 = vpack.c.b16 %v296, %v278
    %v333 = vpack.c.b16 %v297, %v279
    %v334 = vpack.c.b16 %v298, %v280
    %v335 = vpack.c.b16 %v299, %v281
    %v336 = vpack.c.b16 %v300, %v282
    %v337 = vpack.c.b16 %v301, %v283
    %v338 = vpack.c.b16 %v302, %v284
    %v339 = vpack.c.b16 %v303, %v285
    %v340 = vpack.c.b16 %v304, %v286
    %v341 = vpack.c.b16 %v305, %v287
    %vm378 = vcmask 261120
    %v380 = vsel %vm378, %v65, 0
    %382 = vmatprep.subr.bf16.mxu0 0
    %383 = vmatpush1.bf16.msra.mxu0 0
    %384 = vmatprep.subr.bf16.mxu0 0
    %385 = vmatpush1.bf16.msra.mxu0 0
    %386 = vmatprep.subr.bf16.mxu0 0
    %387 = vmatpush1.bf16.msra.mxu0 0
    %388 = vmatprep.subr.bf16.mxu0 0
    %389 = vmatpush1.bf16.msra.mxu0 0
    %390 = vmatprep.subr.bf16.mxu0 0
    %391 = vmatpush1.bf16.msra.mxu0 0
    %392 = vmatprep.subr.bf16.mxu0 0
    %393 = vmatpush1.bf16.msra.mxu0 0
    %394 = vmatprep.subr.bf16.mxu0 %v325
    %395 = vmatpush1.bf16.msra.mxu0 %v324
    %396 = vmatprep.subr.bf16.mxu0 %v307
    %397 = vmatpush1.bf16.msra.mxu0 %v306
    %398 = vmatprep.subr.bf16.mxu0 0
    %399 = vmatpush2.bf16.msra.mxu0 0
    %400 = vmatprep.subr.bf16.mxu0 0
    %401 = vmatpush2.bf16.msra.mxu0 0
    %402 = vmatprep.subr.bf16.mxu0 0
    %403 = vmatpush2.bf16.msra.mxu0 0
    %404 = vmatprep.subr.bf16.mxu0 0
    %405 = vmatpush2.bf16.msra.mxu0 0
    %406 = vmatprep.subr.bf16.mxu0 0
    %407 = vmatpush2.bf16.msra.mxu0 0
    %408 = vmatprep.subr.bf16.mxu0 0
    %409 = vmatpush2.bf16.msra.mxu0 0
    %410 = vmatprep.subr.bf16.mxu0 0
    %411 = vmatpush2.bf16.msra.mxu0 0
    %412 = vmatprep.subr.bf16.mxu0 0
    %413 = vmatpush2.bf16.msra.mxu0 0
    %414 = vmatprep.mubr.bf16.mxu0 0
    %415 = vmatmul.mubr.bf16.gmra.mxu0 %v380
    %v416 = vpop.f32.mrf.mxu0
    %v417 = vadd.f32 %v111, %v416
    %v418 = vpop.f32.mrf.mxu0
    %v419 = vadd.f32 %v115, %v418
    %v420 = vpop.f32.mrf.mxu0
    %v421 = vadd.f32 %v111, %v420
    %v422 = vpop.f32.mrf.mxu0
    %v423 = vadd.f32 %v115, %v422
    %424 = vdwg.mxu0
    %425 = vmatprep.subr.bf16.mxu0 0
    %426 = vmatpush1.bf16.msra.mxu0 0
    %427 = vmatprep.subr.bf16.mxu0 0
    %428 = vmatpush1.bf16.msra.mxu0 0
    %429 = vmatprep.subr.bf16.mxu0 0
    %430 = vmatpush1.bf16.msra.mxu0 0
    %431 = vmatprep.subr.bf16.mxu0 0
    %432 = vmatpush1.bf16.msra.mxu0 0
    %433 = vmatprep.subr.bf16.mxu0 0
    %434 = vmatpush1.bf16.msra.mxu0 0
    %435 = vmatprep.subr.bf16.mxu0 0
    %436 = vmatpush1.bf16.msra.mxu0 0
    %437 = vmatprep.subr.bf16.mxu0 %v327
    %438 = vmatpush1.bf16.msra.mxu0 %v326
    %439 = vmatprep.subr.bf16.mxu0 %v309
    %440 = vmatpush1.bf16.msra.mxu0 %v308
    %441 = vmatprep.subr.bf16.mxu0 0
    %442 = vmatpush2.bf16.msra.mxu0 0
    %443 = vmatprep.subr.bf16.mxu0 0
    %444 = vmatpush2.bf16.msra.mxu0 0
    %445 = vmatprep.subr.bf16.mxu0 0
    %446 = vmatpush2.bf16.msra.mxu0 0
    %447 = vmatprep.subr.bf16.mxu0 0
    %448 = vmatpush2.bf16.msra.mxu0 0
    %449 = vmatprep.subr.bf16.mxu0 0
    %450 = vmatpush2.bf16.msra.mxu0 0
    %451 = vmatprep.subr.bf16.mxu0 0
    %452 = vmatpush2.bf16.msra.mxu0 0
    %453 = vmatprep.subr.bf16.mxu0 0
    %454 = vmatpush2.bf16.msra.mxu0 0
    %455 = vmatprep.subr.bf16.mxu0 0
    %456 = vmatpush2.bf16.msra.mxu0 0
    %457 = vmatprep.mubr.bf16.mxu0 0
    %458 = vmatmul.mubr.bf16.gmra.mxu0 %v380
    %v459 = vpop.f32.mrf.mxu0
    %v460 = vadd.f32 %v119, %v459
    %v461 = vpop.f32.mrf.mxu0
    %v462 = vadd.f32 %v123, %v461
    %v463 = vpop.f32.mrf.mxu0
    %v464 = vadd.f32 %v119, %v463
    %v465 = vpop.f32.mrf.mxu0
    %v466 = vadd.f32 %v123, %v465
    %467 = vdwg.mxu0
    %468 = vmatprep.subr.bf16.mxu0 0
    %469 = vmatpush1.bf16.msra.mxu0 0
    %470 = vmatprep.subr.bf16.mxu0 0
    %471 = vmatpush1.bf16.msra.mxu0 0
    %472 = vmatprep.subr.bf16.mxu0 0
    %473 = vmatpush1.bf16.msra.mxu0 0
    %474 = vmatprep.subr.bf16.mxu0 0
    %475 = vmatpush1.bf16.msra.mxu0 0
    %476 = vmatprep.subr.bf16.mxu0 0
    %477 = vmatpush1.bf16.msra.mxu0 0
    %478 = vmatprep.subr.bf16.mxu0 0
    %479 = vmatpush1.bf16.msra.mxu0 0
    %480 = vmatprep.subr.bf16.mxu0 %v329
    %481 = vmatpush1.bf16.msra.mxu0 %v328
    %482 = vmatprep.subr.bf16.mxu0 %v311
    %483 = vmatpush1.bf16.msra.mxu0 %v310
    %484 = vmatprep.subr.bf16.mxu0 0
    %485 = vmatpush2.bf16.msra.mxu0 0
    %486 = vmatprep.subr.bf16.mxu0 0
    %487 = vmatpush2.bf16.msra.mxu0 0
    %488 = vmatprep.subr.bf16.mxu0 0
    %489 = vmatpush2.bf16.msra.mxu0 0
    %490 = vmatprep.subr.bf16.mxu0 0
    %491 = vmatpush2.bf16.msra.mxu0 0
    %492 = vmatprep.subr.bf16.mxu0 0
    %493 = vmatpush2.bf16.msra.mxu0 0
    %494 = vmatprep.subr.bf16.mxu0 0
    %495 = vmatpush2.bf16.msra.mxu0 0
    %496 = vmatprep.subr.bf16.mxu0 0
    %497 = vmatpush2.bf16.msra.mxu0 0
    %498 = vmatprep.subr.bf16.mxu0 0
    %499 = vmatpush2.bf16.msra.mxu0 0
    %500 = vmatprep.mubr.bf16.mxu0 0
    %501 = vmatmul.mubr.bf16.gmra.mxu0 %v380
    %v502 = vpop.f32.mrf.mxu0
    %v503 = vadd.f32 %v127, %v502
    %v504 = vpop.f32.mrf.mxu0
    %v505 = vadd.f32 %v131, %v504
    %v506 = vpop.f32.mrf.mxu0
    %v507 = vadd.f32 %v127, %v506
    %v508 = vpop.f32.mrf.mxu0
    %v509 = vadd.f32 %v131, %v508
    %510 = vdwg.mxu0
    %511 = vmatprep.subr.bf16.mxu0 0
    %512 = vmatpush1.bf16.msra.mxu0 0
    %513 = vmatprep.subr.bf16.mxu0 0
    %514 = vmatpush1.bf16.msra.mxu0 0
    %515 = vmatprep.subr.bf16.mxu0 0
    %516 = vmatpush1.bf16.msra.mxu0 0
    %517 = vmatprep.subr.bf16.mxu0 0
    %518 = vmatpush1.bf16.msra.mxu0 0
    %519 = vmatprep.subr.bf16.mxu0 0
    %520 = vmatpush1.bf16.msra.mxu0 0
    %521 = vmatprep.subr.bf16.mxu0 0
    %522 = vmatpush1.bf16.msra.mxu0 0
    %523 = vmatprep.subr.bf16.mxu0 %v331
    %524 = vmatpush1.bf16.msra.mxu0 %v330
    %525 = vmatprep.subr.bf16.mxu0 %v313
    %526 = vmatpush1.bf16.msra.mxu0 %v312
    %527 = vmatprep.subr.bf16.mxu0 0
    %528 = vmatpush2.bf16.msra.mxu0 0
    %529 = vmatprep.subr.bf16.mxu0 0
    %530 = vmatpush2.bf16.msra.mxu0 0
    %531 = vmatprep.subr.bf16.mxu0 0
    %532 = vmatpush2.bf16.msra.mxu0 0
    %533 = vmatprep.subr.bf16.mxu0 0
    %534 = vmatpush2.bf16.msra.mxu0 0
    %535 = vmatprep.subr.bf16.mxu0 0
    %536 = vmatpush2.bf16.msra.mxu0 0
    %537 = vmatprep.subr.bf16.mxu0 0
    %538 = vmatpush2.bf16.msra.mxu0 0
    %539 = vmatprep.subr.bf16.mxu0 0
    %540 = vmatpush2.bf16.msra.mxu0 0
    %541 = vmatprep.subr.bf16.mxu0 0
    %542 = vmatpush2.bf16.msra.mxu0 0
    %543 = vmatprep.mubr.bf16.mxu0 0
    %544 = vmatmul.mubr.bf16.gmra.mxu0 %v380
    %v545 = vpop.f32.mrf.mxu0
    %v546 = vadd.f32 %v135, %v545
    %v547 = vpop.f32.mrf.mxu0
    %v548 = vadd.f32 %v139, %v547
    %v549 = vpop.f32.mrf.mxu0
    %v550 = vadd.f32 %v135, %v549
    %v551 = vpop.f32.mrf.mxu0
    %v552 = vadd.f32 %v139, %v551
    %553 = vdwg.mxu0
    %554 = vmatprep.subr.bf16.mxu0 0
    %555 = vmatpush1.bf16.msra.mxu0 0
    %556 = vmatprep.subr.bf16.mxu0 0
    %557 = vmatpush1.bf16.msra.mxu0 0
    %558 = vmatprep.subr.bf16.mxu0 0
    %559 = vmatpush1.bf16.msra.mxu0 0
    %560 = vmatprep.subr.bf16.mxu0 0
    %561 = vmatpush1.bf16.msra.mxu0 0
    %562 = vmatprep.subr.bf16.mxu0 0
    %563 = vmatpush1.bf16.msra.mxu0 0
    %564 = vmatprep.subr.bf16.mxu0 0
    %565 = vmatpush1.bf16.msra.mxu0 0
    %566 = vmatprep.subr.bf16.mxu0 %v333
    %567 = vmatpush1.bf16.msra.mxu0 %v332
    %568 = vmatprep.subr.bf16.mxu0 %v315
    %569 = vmatpush1.bf16.msra.mxu0 %v314
    %570 = vmatprep.subr.bf16.mxu0 0
    %571 = vmatpush2.bf16.msra.mxu0 0
    %572 = vmatprep.subr.bf16.mxu0 0
    %573 = vmatpush2.bf16.msra.mxu0 0
    %574 = vmatprep.subr.bf16.mxu0 0
    %575 = vmatpush2.bf16.msra.mxu0 0
    %576 = vmatprep.subr.bf16.mxu0 0
    %577 = vmatpush2.bf16.msra.mxu0 0
    %578 = vmatprep.subr.bf16.mxu0 0
    %579 = vmatpush2.bf16.msra.mxu0 0
    %580 = vmatprep.subr.bf16.mxu0 0
    %581 = vmatpush2.bf16.msra.mxu0 0
    %582 = vmatprep.subr.bf16.mxu0 0
    %583 = vmatpush2.bf16.msra.mxu0 0
    %584 = vmatprep.subr.bf16.mxu0 0
    %585 = vmatpush2.bf16.msra.mxu0 0
    %586 = vmatprep.mubr.bf16.mxu0 0
    %587 = vmatmul.mubr.bf16.gmra.mxu0 %v380
    %v588 = vpop.f32.mrf.mxu0
    %v589 = vadd.f32 %v143, %v588
    %v590 = vpop.f32.mrf.mxu0
    %v591 = vadd.f32 %v147, %v590
    %v592 = vpop.f32.mrf.mxu0
    %v593 = vadd.f32 %v143, %v592
    %v594 = vpop.f32.mrf.mxu0
    %v595 = vadd.f32 %v147, %v594
    %596 = vdwg.mxu0
    %597 = vmatprep.subr.bf16.mxu0 0
    %598 = vmatpush1.bf16.msra.mxu0 0
    %599 = vmatprep.subr.bf16.mxu0 0
    %600 = vmatpush1.bf16.msra.mxu0 0
    %601 = vmatprep.subr.bf16.mxu0 0
    %602 = vmatpush1.bf16.msra.mxu0 0
    %603 = vmatprep.subr.bf16.mxu0 0
    %604 = vmatpush1.bf16.msra.mxu0 0
    %605 = vmatprep.subr.bf16.mxu0 0
    %606 = vmatpush1.bf16.msra.mxu0 0
    %607 = vmatprep.subr.bf16.mxu0 0
    %608 = vmatpush1.bf16.msra.mxu0 0
    %609 = vmatprep.subr.bf16.mxu0 %v335
    %610 = vmatpush1.bf16.msra.mxu0 %v334
    %611 = vmatprep.subr.bf16.mxu0 %v317
    %612 = vmatpush1.bf16.msra.mxu0 %v316
    %613 = vmatprep.subr.bf16.mxu0 0
    %614 = vmatpush2.bf16.msra.mxu0 0
    %615 = vmatprep.subr.bf16.mxu0 0
    %616 = vmatpush2.bf16.msra.mxu0 0
    %617 = vmatprep.subr.bf16.mxu0 0
    %618 = vmatpush2.bf16.msra.mxu0 0
    %619 = vmatprep.subr.bf16.mxu0 0
    %620 = vmatpush2.bf16.msra.mxu0 0
    %621 = vmatprep.subr.bf16.mxu0 0
    %622 = vmatpush2.bf16.msra.mxu0 0
    %623 = vmatprep.subr.bf16.mxu0 0
    %624 = vmatpush2.bf16.msra.mxu0 0
    %625 = vmatprep.subr.bf16.mxu0 0
    %626 = vmatpush2.bf16.msra.mxu0 0
    %627 = vmatprep.subr.bf16.mxu0 0
    %628 = vmatpush2.bf16.msra.mxu0 0
    %629 = vmatprep.mubr.bf16.mxu0 0
    %630 = vmatmul.mubr.bf16.gmra.mxu0 %v380
    %v631 = vpop.f32.mrf.mxu0
    %v632 = vadd.f32 %v151, %v631
    %v633 = vpop.f32.mrf.mxu0
    %v634 = vadd.f32 %v155, %v633
    %v635 = vpop.f32.mrf.mxu0
    %v636 = vadd.f32 %v151, %v635
    %v637 = vpop.f32.mrf.mxu0
    %v638 = vadd.f32 %v155, %v637
    %639 = vdwg.mxu0
    %640 = vmatprep.subr.bf16.mxu0 0
    %641 = vmatpush1.bf16.msra.mxu0 0
    %642 = vmatprep.subr.bf16.mxu0 0
    %643 = vmatpush1.bf16.msra.mxu0 0
    %644 = vmatprep.subr.bf16.mxu0 0
    %645 = vmatpush1.bf16.msra.mxu0 0
    %646 = vmatprep.subr.bf16.mxu0 0
    %647 = vmatpush1.bf16.msra.mxu0 0
    %648 = vmatprep.subr.bf16.mxu0 0
    %649 = vmatpush1.bf16.msra.mxu0 0
    %650 = vmatprep.subr.bf16.mxu0 0
    %651 = vmatpush1.bf16.msra.mxu0 0
    %652 = vmatprep.subr.bf16.mxu0 %v337
    %653 = vmatpush1.bf16.msra.mxu0 %v336
    %654 = vmatprep.subr.bf16.mxu0 %v319
    %655 = vmatpush1.bf16.msra.mxu0 %v318
    %656 = vmatprep.subr.bf16.mxu0 0
    %657 = vmatpush2.bf16.msra.mxu0 0
    %658 = vmatprep.subr.bf16.mxu0 0
    %659 = vmatpush2.bf16.msra.mxu0 0
    %660 = vmatprep.subr.bf16.mxu0 0
    %661 = vmatpush2.bf16.msra.mxu0 0
    %662 = vmatprep.subr.bf16.mxu0 0
    %663 = vmatpush2.bf16.msra.mxu0 0
    %664 = vmatprep.subr.bf16.mxu0 0
    %665 = vmatpush2.bf16.msra.mxu0 0
    %666 = vmatprep.subr.bf16.mxu0 0
    %667 = vmatpush2.bf16.msra.mxu0 0
    %668 = vmatprep.subr.bf16.mxu0 0
    %669 = vmatpush2.bf16.msra.mxu0 0
    %670 = vmatprep.subr.bf16.mxu0 0
    %671 = vmatpush2.bf16.msra.mxu0 0
    %672 = vmatprep.mubr.bf16.mxu0 0
    %673 = vmatmul.mubr.bf16.gmra.mxu0 %v380
    %v674 = vpop.f32.mrf.mxu0
    %v675 = vadd.f32 %v159, %v674
    %v676 = vpop.f32.mrf.mxu0
    %v677 = vadd.f32 %v163, %v676
    %v678 = vpop.f32.mrf.mxu0
    %v679 = vadd.f32 %v159, %v678
    %v680 = vpop.f32.mrf.mxu0
    %v681 = vadd.f32 %v163, %v680
    %682 = vdwg.mxu0
    %683 = vmatprep.subr.bf16.mxu0 0
    %684 = vmatpush1.bf16.msra.mxu0 0
    %685 = vmatprep.subr.bf16.mxu0 0
    %686 = vmatpush1.bf16.msra.mxu0 0
    %687 = vmatprep.subr.bf16.mxu0 0
    %688 = vmatpush1.bf16.msra.mxu0 0
    %689 = vmatprep.subr.bf16.mxu0 0
    %690 = vmatpush1.bf16.msra.mxu0 0
    %691 = vmatprep.subr.bf16.mxu0 0
    %692 = vmatpush1.bf16.msra.mxu0 0
    %693 = vmatprep.subr.bf16.mxu0 0
    %694 = vmatpush1.bf16.msra.mxu0 0
    %695 = vmatprep.subr.bf16.mxu0 %v339
    %696 = vmatpush1.bf16.msra.mxu0 %v338
    %697 = vmatprep.subr.bf16.mxu0 %v321
    %698 = vmatpush1.bf16.msra.mxu0 %v320
    %699 = vmatprep.subr.bf16.mxu0 0
    %700 = vmatpush2.bf16.msra.mxu0 0
    %701 = vmatprep.subr.bf16.mxu0 0
    %702 = vmatpush2.bf16.msra.mxu0 0
    %703 = vmatprep.subr.bf16.mxu0 0
    %704 = vmatpush2.bf16.msra.mxu0 0
    %705 = vmatprep.subr.bf16.mxu0 0
    %706 = vmatpush2.bf16.msra.mxu0 0
    %707 = vmatprep.subr.bf16.mxu0 0
    %708 = vmatpush2.bf16.msra.mxu0 0
    %709 = vmatprep.subr.bf16.mxu0 0
    %710 = vmatpush2.bf16.msra.mxu0 0
    %711 = vmatprep.subr.bf16.mxu0 0
    %712 = vmatpush2.bf16.msra.mxu0 0
    %713 = vmatprep.subr.bf16.mxu0 0
    %714 = vmatpush2.bf16.msra.mxu0 0
    %715 = vmatprep.mubr.bf16.mxu0 0
    %716 = vmatmul.mubr.bf16.gmra.mxu0 %v380
    %v717 = vpop.f32.mrf.mxu0
    %v718 = vadd.f32 %v167, %v717
    %v719 = vpop.f32.mrf.mxu0
    %v720 = vadd.f32 %v171, %v719
    %v721 = vpop.f32.mrf.mxu0
    %v722 = vadd.f32 %v167, %v721
    %v723 = vpop.f32.mrf.mxu0
    %v724 = vadd.f32 %v171, %v723
    %725 = vdwg.mxu0
    %726 = vmatprep.subr.bf16.mxu0 0
    %727 = vmatpush1.bf16.msra.mxu0 0
    %728 = vmatprep.subr.bf16.mxu0 0
    %729 = vmatpush1.bf16.msra.mxu0 0
    %730 = vmatprep.subr.bf16.mxu0 0
    %731 = vmatpush1.bf16.msra.mxu0 0
    %732 = vmatprep.subr.bf16.mxu0 0
    %733 = vmatpush1.bf16.msra.mxu0 0
    %734 = vmatprep.subr.bf16.mxu0 0
    %735 = vmatpush1.bf16.msra.mxu0 0
    %736 = vmatprep.subr.bf16.mxu0 0
    %737 = vmatpush1.bf16.msra.mxu0 0
    %738 = vmatprep.subr.bf16.mxu0 %v341
    %739 = vmatpush1.bf16.msra.mxu0 %v340
    %740 = vmatprep.subr.bf16.mxu0 %v323
    %741 = vmatpush1.bf16.msra.mxu0 %v322
    %742 = vmatprep.subr.bf16.mxu0 0
    %743 = vmatpush2.bf16.msra.mxu0 0
    %744 = vmatprep.subr.bf16.mxu0 0
    %745 = vmatpush2.bf16.msra.mxu0 0
    %746 = vmatprep.subr.bf16.mxu0 0
    %747 = vmatpush2.bf16.msra.mxu0 0
    %748 = vmatprep.subr.bf16.mxu0 0
    %749 = vmatpush2.bf16.msra.mxu0 0
    %750 = vmatprep.subr.bf16.mxu0 0
    %751 = vmatpush2.bf16.msra.mxu0 0
    %752 = vmatprep.subr.bf16.mxu0 0
    %753 = vmatpush2.bf16.msra.mxu0 0
    %754 = vmatprep.subr.bf16.mxu0 0
    %755 = vmatpush2.bf16.msra.mxu0 0
    %756 = vmatprep.subr.bf16.mxu0 0
    %757 = vmatpush2.bf16.msra.mxu0 0
    %758 = vmatprep.mubr.bf16.mxu0 0
    %759 = vmatmul.mubr.bf16.gmra.mxu0 %v380
    %v760 = vpop.f32.mrf.mxu0
    %v761 = vadd.f32 %v175, %v760
    %v762 = vpop.f32.mrf.mxu0
    %v763 = vadd.f32 %v179, %v762
    %v764 = vpop.f32.mrf.mxu0
    %v765 = vadd.f32 %v175, %v764
    %v766 = vpop.f32.mrf.mxu0
    %v767 = vadd.f32 %v179, %v766
    %768 = vdwg.mxu0
    %v769 = vpack.c.bf16 %v417, %v417
    %v770 = vpack.c.bf16 %v419, %v419
    %v771 = vpack.c.bf16 %v460, %v460
    %v772 = vpack.c.bf16 %v462, %v462
    %v773 = vpack.c.bf16 %v503, %v503
    %v774 = vpack.c.bf16 %v505, %v505
    %v775 = vpack.c.bf16 %v421, %v421
    %v776 = vpack.c.bf16 %v423, %v423
    %v777 = vpack.c.bf16 %v464, %v464
    %v778 = vpack.c.bf16 %v466, %v466
    %v779 = vpack.c.bf16 %v507, %v507
    %v780 = vpack.c.bf16 %v509, %v509
    %v793 = vunpack.c.l.b16 %v769
    %v794 = vunpack.c.l.b16 %v770
    %v795 = vunpack.c.l.b16 %v771
    %v796 = vunpack.c.l.b16 %v772
    %v797 = vunpack.c.l.b16 %v773
    %v798 = vunpack.c.l.b16 %v774
    %v799 = vunpack.c.l.b16 %v775
    %v800 = vunpack.c.l.b16 %v776
    %v801 = vunpack.c.l.b16 %v777
    %v802 = vunpack.c.l.b16 %v778
    %v803 = vunpack.c.l.b16 %v779
    %v804 = vunpack.c.l.b16 %v780
    %v805 = vpack.c.b16 %v794, %v793
    %v806 = vpack.c.b16 %v796, %v795
    %v807 = vpack.c.b16 %v798, %v797
    %v808 = vpack.c.b16 %v800, %v799
    %v809 = vpack.c.b16 %v802, %v801
    %v810 = vpack.c.b16 %v804, %v803
    %817 = vst [vmem:[#allocation2] sm:$0xff] %v805
    %818 = vst [vmem:[#allocation2 + $0x8] sm:$0xff] %v806
    %819 = vst [vmem:[#allocation2 + $0x10] sm:$0xff] %v807
    %820 = vst [vmem:[#allocation2 + $0x18] sm:$0xff] %v808
    %821 = vst [vmem:[#allocation2 + $0x20] sm:$0xff] %v809
    %822 = vst [vmem:[#allocation2 + $0x28] sm:$0xff] %v810
    %v823 = vpack.c.bf16 %v546, %v546
    %v824 = vpack.c.bf16 %v548, %v548
    %v825 = vpack.c.bf16 %v589, %v589
    %v826 = vpack.c.bf16 %v591, %v591
    %v827 = vpack.c.bf16 %v632, %v632
    %v828 = vpack.c.bf16 %v634, %v634
    %v829 = vpack.c.bf16 %v550, %v550
    %v830 = vpack.c.bf16 %v552, %v552
    %v831 = vpack.c.bf16 %v593, %v593
    %v832 = vpack.c.bf16 %v595, %v595
    %v833 = vpack.c.bf16 %v636, %v636
    %v834 = vpack.c.bf16 %v638, %v638
    %v847 = vunpack.c.l.b16 %v823
    %v848 = vunpack.c.l.b16 %v824
    %v849 = vunpack.c.l.b16 %v825
    %v850 = vunpack.c.l.b16 %v826
    %v851 = vunpack.c.l.b16 %v827
    %v852 = vunpack.c.l.b16 %v828
    %v853 = vunpack.c.l.b16 %v829
    %v854 = vunpack.c.l.b16 %v830
    %v855 = vunpack.c.l.b16 %v831
    %v856 = vunpack.c.l.b16 %v832
    %v857 = vunpack.c.l.b16 %v833
    %v858 = vunpack.c.l.b16 %v834
    %v859 = vpack.c.b16 %v848, %v847
    %v860 = vpack.c.b16 %v850, %v849
    %v861 = vpack.c.b16 %v852, %v851
    %v862 = vpack.c.b16 %v854, %v853
    %v863 = vpack.c.b16 %v856, %v855
    %v864 = vpack.c.b16 %v858, %v857
    %871 = vst [vmem:[#allocation3] sm:$0xff] %v859
    %872 = vst [vmem:[#allocation3 + $0x8] sm:$0xff] %v860
    %873 = vst [vmem:[#allocation3 + $0x10] sm:$0xff] %v861
    %874 = vst [vmem:[#allocation3 + $0x18] sm:$0xff] %v862
    %875 = vst [vmem:[#allocation3 + $0x20] sm:$0xff] %v863
    %876 = vst [vmem:[#allocation3 + $0x28] sm:$0xff] %v864
    %v877 = vpack.c.bf16 %v675, %v675
    %v878 = vpack.c.bf16 %v677, %v677
    %v879 = vpack.c.bf16 %v718, %v718
    %v880 = vpack.c.bf16 %v720, %v720
    %v881 = vpack.c.bf16 %v761, %v761
    %v882 = vpack.c.bf16 %v763, %v763
    %v883 = vpack.c.bf16 %v679, %v679
    %v884 = vpack.c.bf16 %v681, %v681
    %v885 = vpack.c.bf16 %v722, %v722
    %v886 = vpack.c.bf16 %v724, %v724
    %v887 = vpack.c.bf16 %v765, %v765
    %v888 = vpack.c.bf16 %v767, %v767
    %v901 = vunpack.c.l.b16 %v877
    %v902 = vunpack.c.l.b16 %v878
    %v903 = vunpack.c.l.b16 %v879
    %v904 = vunpack.c.l.b16 %v880
    %v905 = vunpack.c.l.b16 %v881
    %v906 = vunpack.c.l.b16 %v882
    %v907 = vunpack.c.l.b16 %v883
    %v908 = vunpack.c.l.b16 %v884
    %v909 = vunpack.c.l.b16 %v885
    %v910 = vunpack.c.l.b16 %v886
    %v911 = vunpack.c.l.b16 %v887
    %v912 = vunpack.c.l.b16 %v888
    %v913 = vpack.c.b16 %v902, %v901
    %v914 = vpack.c.b16 %v904, %v903
    %v915 = vpack.c.b16 %v906, %v905
    %v916 = vpack.c.b16 %v908, %v907
    %v917 = vpack.c.b16 %v910, %v909
    %v918 = vpack.c.b16 %v912, %v911
    %925 = vst [vmem:[#allocation4] sm:$0xff] %v913
    %926 = vst [vmem:[#allocation4 + $0x8] sm:$0xff] %v914
    %927 = vst [vmem:[#allocation4 + $0x10] sm:$0xff] %v915
    %928 = vst [vmem:[#allocation4 + $0x18] sm:$0xff] %v916
    %929 = vst [vmem:[#allocation4 + $0x20] sm:$0xff] %v917
    %930 = vst [vmem:[#allocation4 + $0x28] sm:$0xff] %v918
    %v931 = vld [vmem:[#allocation2] sm:$0xf]
    %v932 = vld [vmem:[#allocation2 + $0x18] sm:$0xf]
    %v933 = vld [vmem:[#allocation3] sm:$0xf]
    %v934 = vld [vmem:[#allocation3 + $0x18] sm:$0xf]
    %v935 = vld [vmem:[#allocation4] sm:$0xf]
    %v936 = vld [vmem:[#allocation4 + $0x18] sm:$0xf]
    %vm937 = vcmask 523264
    %v939 = vsel %vm937, %v931, 0
    %v942 = vsel %vm937, %v933, 0
    %944 = vmatprep.subr.bf16.mxu0 0
    %945 = vmatpush1.bf16.xpose.msra.mxu0 0
    %946 = vmatprep.subr.bf16.mxu0 0
    %947 = vmatpush1.bf16.xpose.msra.mxu0 0
    %948 = vmatprep.subr.bf16.mxu0 0
    %949 = vmatpush1.bf16.xpose.msra.mxu0 0
    %950 = vmatprep.subr.bf16.mxu0 0
    %951 = vmatpush1.bf16.xpose.msra.mxu0 0
    %952 = vmatprep.subr.bf16.mxu0 0
    %953 = vmatpush1.bf16.xpose.msra.mxu0 0
    %954 = vmatprep.subr.bf16.mxu0 0
    %955 = vmatpush1.bf16.xpose.msra.mxu0 0
    %956 = vmatprep.subr.bf16.mxu0 0
    %957 = vmatpush1.bf16.xpose.msra.mxu0 0
    %958 = vmatprep.subr.bf16.mxu0 0
    %959 = vmatpush1.bf16.xpose.msra.mxu0 %v942
    %960 = vmatprep.subr.bf16.mxu0 0
    %961 = vmatpush2.bf16.xpose.msra.mxu0 0
    %962 = vmatprep.subr.bf16.mxu0 0
    %963 = vmatpush2.bf16.xpose.msra.mxu0 0
    %964 = vmatprep.subr.bf16.mxu0 0
    %965 = vmatpush2.bf16.xpose.msra.mxu0 0
    %966 = vmatprep.subr.bf16.mxu0 0
    %967 = vmatpush2.bf16.xpose.msra.mxu0 0
    %968 = vmatprep.subr.bf16.mxu0 0
    %969 = vmatpush2.bf16.xpose.msra.mxu0 0
    %970 = vmatprep.subr.bf16.mxu0 0
    %971 = vmatpush2.bf16.xpose.msra.mxu0 0
    %972 = vmatprep.subr.bf16.mxu0 0
    %973 = vmatpush2.bf16.xpose.msra.mxu0 0
    %974 = vmatprep.subr.bf16.mxu0 0
    %975 = vmatpush2.bf16.xpose.msra.mxu0 0
    %976 = vmatprep.mubr.bf16.mxu0 0
    %977 = vmatmul.mubr.bf16.gmra.mxu0 %v939
    %v978 = vpop.f32.mrf.mxu0
    %v979 = vadd.f32 %v56, %v978
    %v980 = vpop.f32.mrf.mxu0
    %v981 = vpop.f32.mrf.mxu0
    %v982 = vpop.f32.mrf.mxu0
    %983 = vdwg.mxu0
    %v985 = vsel %vm937, %v932, 0
    %v988 = vsel %vm937, %v934, 0
    %990 = vmatprep.subr.bf16.mxu0 0
    %991 = vmatpush1.bf16.xpose.msra.mxu0 0
    %992 = vmatprep.subr.bf16.mxu0 0
    %993 = vmatpush1.bf16.xpose.msra.mxu0 0
    %994 = vmatprep.subr.bf16.mxu0 0
    %995 = vmatpush1.bf16.xpose.msra.mxu0 0
    %996 = vmatprep.subr.bf16.mxu0 0
    %997 = vmatpush1.bf16.xpose.msra.mxu0 0
    %998 = vmatprep.subr.bf16.mxu0 0
    %999 = vmatpush1.bf16.xpose.msra.mxu0 0
    %1000 = vmatprep.subr.bf16.mxu0 0
    %1001 = vmatpush1.bf16.xpose.msra.mxu0 0
    %1002 = vmatprep.subr.bf16.mxu0 0
    %1003 = vmatpush1.bf16.xpose.msra.mxu0 0
    %1004 = vmatprep.subr.bf16.mxu0 0
    %1005 = vmatpush1.bf16.xpose.msra.mxu0 %v988
    %1006 = vmatprep.subr.bf16.mxu0 0
    %1007 = vmatpush2.bf16.xpose.msra.mxu0 0
    %1008 = vmatprep.subr.bf16.mxu0 0
    %1009 = vmatpush2.bf16.xpose.msra.mxu0 0
    %1010 = vmatprep.subr.bf16.mxu0 0
    %1011 = vmatpush2.bf16.xpose.msra.mxu0 0
    %1012 = vmatprep.subr.bf16.mxu0 0
    %1013 = vmatpush2.bf16.xpose.msra.mxu0 0
    %1014 = vmatprep.subr.bf16.mxu0 0
    %1015 = vmatpush2.bf16.xpose.msra.mxu0 0
    %1016 = vmatprep.subr.bf16.mxu0 0
    %1017 = vmatpush2.bf16.xpose.msra.mxu0 0
    %1018 = vmatprep.subr.bf16.mxu0 0
    %1019 = vmatpush2.bf16.xpose.msra.mxu0 0
    %1020 = vmatprep.subr.bf16.mxu0 0
    %1021 = vmatpush2.bf16.xpose.msra.mxu0 0
    %1022 = vmatprep.mubr.bf16.mxu0 0
    %1023 = vmatmul.mubr.bf16.gmra.mxu0 %v985
    %v1024 = vpop.f32.mrf.mxu0
    %v1025 = vadd.f32 %v60, %v1024
    %v1026 = vpop.f32.mrf.mxu0
    %v1027 = vpop.f32.mrf.mxu0
    %v1028 = vpop.f32.mrf.mxu0
    %1029 = vdwg.mxu0
    %vm1030 = vcmask 64512
    %v1031 = vsel %vm1030, %v979, -inf
    %1032 = vmax.xlane.f32.xlu0 %v1031
    %v1033 = vpop.xlane.xlu0 %1032
    %v1034 = vsel %vm1030, %v1025, -inf
    %1035 = vmax.xlane.f32.xlu0 %v1034
    %v1036 = vpop.xlane.xlu0 %1035
    %v1037 = vsub.f32 %v979, %v1033
    %v1038 = vsub.f32 %v1025, %v1036
    %v1039 = vmul.f32 %v1037, 1.442695
    %v1040 = vpow.pop %v1039
    %v1041 = vmul.f32 %v1038, 1.442695
    %v1042 = vpow.pop %v1041
    %v1043 = vsel %vm1030, %v1040, 0.0
    %1044 = vadd.xlane.f32.xlu0 %v1043
    %v1045 = vpop.xlane.xlu0 %1044
    %v1046 = vsel %vm1030, %v1042, 0.0
    %1047 = vadd.xlane.f32.xlu0 %v1046
    %v1048 = vpop.xlane.xlu0 %1047
    %v1049 = vrcp.pop %v1045
    %v1050 = vrcp.pop %v1048
    %v1051 = vpack.c.bf16 %v1040, %v1040
    %v1052 = vpack.c.bf16 %v1042, %v1042
    %v1054 = vsel %vm1030, %v1051, 0
    %vm1056 = vcmask 1043456
    %v1058 = vsel %vm1056, %v935, 0
    %1060 = vmatprep.subr.bf16.mxu0 0
    %1061 = vmatpush1.bf16.msra.mxu0 0
    %1062 = vmatprep.subr.bf16.mxu0 0
    %1063 = vmatpush1.bf16.msra.mxu0 0
    %1064 = vmatprep.subr.bf16.mxu0 0
    %1065 = vmatpush1.bf16.msra.mxu0 0
    %1066 = vmatprep.subr.bf16.mxu0 0
    %1067 = vmatpush1.bf16.msra.mxu0 0
    %1068 = vmatprep.subr.bf16.mxu0 0
    %1069 = vmatpush1.bf16.msra.mxu0 0
    %1070 = vmatprep.subr.bf16.mxu0 0
    %1071 = vmatpush1.bf16.msra.mxu0 0
    %1072 = vmatprep.subr.bf16.mxu0 0
    %1073 = vmatpush1.bf16.msra.mxu0 0
    %1074 = vmatprep.subr.bf16.mxu0 0
    %1075 = vmatpush1.bf16.msra.mxu0 %v1058
    %1076 = vmatprep.subr.bf16.mxu0 0
    %1077 = vmatpush2.bf16.msra.mxu0 0
    %1078 = vmatprep.subr.bf16.mxu0 0
    %1079 = vmatpush2.bf16.msra.mxu0 0
    %1080 = vmatprep.subr.bf16.mxu0 0
    %1081 = vmatpush2.bf16.msra.mxu0 0
    %1082 = vmatprep.subr.bf16.mxu0 0
    %1083 = vmatpush2.bf16.msra.mxu0 0
    %1084 = vmatprep.subr.bf16.mxu0 0
    %1085 = vmatpush2.bf16.msra.mxu0 0
    %1086 = vmatprep.subr.bf16.mxu0 0
    %1087 = vmatpush2.bf16.msra.mxu0 0
    %1088 = vmatprep.subr.bf16.mxu0 0
    %1089 = vmatpush2.bf16.msra.mxu0 0
    %1090 = vmatprep.subr.bf16.mxu0 0
    %1091 = vmatpush2.bf16.msra.mxu0 0
    %1092 = vmatprep.mubr.bf16.mxu0 0
    %1093 = vmatmul.mubr.bf16.gmra.mxu0 %v1054
    %v1094 = vpop.f32.mrf.mxu0
    %v1095 = vadd.f32 0.0, %v1094
    %v1096 = vpop.f32.mrf.mxu0
    %v1097 = vpop.f32.mrf.mxu0
    %v1098 = vpop.f32.mrf.mxu0
    %1099 = vdwg.mxu0
    %v1101 = vsel %vm1030, %v1052, 0
    %v1104 = vsel %vm1056, %v936, 0
    %1106 = vmatprep.subr.bf16.mxu0 0
    %1107 = vmatpush1.bf16.msra.mxu0 0
    %1108 = vmatprep.subr.bf16.mxu0 0
    %1109 = vmatpush1.bf16.msra.mxu0 0
    %1110 = vmatprep.subr.bf16.mxu0 0
    %1111 = vmatpush1.bf16.msra.mxu0 0
    %1112 = vmatprep.subr.bf16.mxu0 0
    %1113 = vmatpush1.bf16.msra.mxu0 0
    %1114 = vmatprep.subr.bf16.mxu0 0
    %1115 = vmatpush1.bf16.msra.mxu0 0
    %1116 = vmatprep.subr.bf16.mxu0 0
    %1117 = vmatpush1.bf16.msra.mxu0 0
    %1118 = vmatprep.subr.bf16.mxu0 0
    %1119 = vmatpush1.bf16.msra.mxu0 0
    %1120 = vmatprep.subr.bf16.mxu0 0
    %1121 = vmatpush1.bf16.msra.mxu0 %v1104
    %1122 = vmatprep.subr.bf16.mxu0 0
    %1123 = vmatpush2.bf16.msra.mxu0 0
    %1124 = vmatprep.subr.bf16.mxu0 0
    %1125 = vmatpush2.bf16.msra.mxu0 0
    %1126 = vmatprep.subr.bf16.mxu0 0
    %1127 = vmatpush2.bf16.msra.mxu0 0
    %1128 = vmatprep.subr.bf16.mxu0 0
    %1129 = vmatpush2.bf16.msra.mxu0 0
    %1130 = vmatprep.subr.bf16.mxu0 0
    %1131 = vmatpush2.bf16.msra.mxu0 0
    %1132 = vmatprep.subr.bf16.mxu0 0
    %1133 = vmatpush2.bf16.msra.mxu0 0
    %1134 = vmatprep.subr.bf16.mxu0 0
    %1135 = vmatpush2.bf16.msra.mxu0 0
    %1136 = vmatprep.subr.bf16.mxu0 0
    %1137 = vmatpush2.bf16.msra.mxu0 0
    %1138 = vmatprep.mubr.bf16.mxu0 0
    %1139 = vmatmul.mubr.bf16.gmra.mxu0 %v1101
    %v1140 = vpop.f32.mrf.mxu0
    %v1141 = vadd.f32 0.0, %v1140
    %v1142 = vpop.f32.mrf.mxu0
    %v1143 = vpop.f32.mrf.mxu0
    %v1144 = vpop.f32.mrf.mxu0
    %1145 = vdwg.mxu0
    %v1146 = vmul.f32 %v1095, %v1049
    %v1147 = vmul.f32 %v1141, %v1050
    %v1148 = vpack.c.bf16 %v1146, %v1146
    %v1149 = vpack.c.bf16 %v1147, %v1147
    %v1151 = vunpack.c.l.b16 %v931
    %v1152 = vpack.c.b16 %v1151, %v1151
    %1153 = vrot.lane.b32.xlu0 %v1152, 64
    %v1154 = vpop.permute.xlu0 %1153
    %v1156 = vunpack.c.l.b16 %v933
    %v1157 = vpack.c.b16 %v1156, %v1156
    %1158 = vrot.lane.b32.xlu0 %v1157, 64
    %v1159 = vpop.permute.xlu0 %1158
    %v1161 = vsel %vm937, %v1154, 0
    %v1164 = vsel %vm937, %v1159, 0
    %1166 = vmatprep.subr.bf16.mxu0 0
    %1167 = vmatpush1.bf16.xpose.msra.mxu0 0
    %1168 = vmatprep.subr.bf16.mxu0 0
    %1169 = vmatpush1.bf16.xpose.msra.mxu0 0
    %1170 = vmatprep.subr.bf16.mxu0 0
    %1171 = vmatpush1.bf16.xpose.msra.mxu0 0
    %1172 = vmatprep.subr.bf16.mxu0 0
    %1173 = vmatpush1.bf16.xpose.msra.mxu0 0
    %1174 = vmatprep.subr.bf16.mxu0 0
    %1175 = vmatpush1.bf16.xpose.msra.mxu0 0
    %1176 = vmatprep.subr.bf16.mxu0 0
    %1177 = vmatpush1.bf16.xpose.msra.mxu0 0
    %1178 = vmatprep.subr.bf16.mxu0 0
    %1179 = vmatpush1.bf16.xpose.msra.mxu0 0
    %1180 = vmatprep.subr.bf16.mxu0 0
    %1181 = vmatpush1.bf16.xpose.msra.mxu0 %v1164
    %1182 = vmatprep.subr.bf16.mxu0 0
    %1183 = vmatpush2.bf16.xpose.msra.mxu0 0
    %1184 = vmatprep.subr.bf16.mxu0 0
    %1185 = vmatpush2.bf16.xpose.msra.mxu0 0
    %1186 = vmatprep.subr.bf16.mxu0 0
    %1187 = vmatpush2.bf16.xpose.msra.mxu0 0
    %1188 = vmatprep.subr.bf16.mxu0 0
    %1189 = vmatpush2.bf16.xpose.msra.mxu0 0
    %1190 = vmatprep.subr.bf16.mxu0 0
    %1191 = vmatpush2.bf16.xpose.msra.mxu0 0
    %1192 = vmatprep.subr.bf16.mxu0 0
    %1193 = vmatpush2.bf16.xpose.msra.mxu0 0
    %1194 = vmatprep.subr.bf16.mxu0 0
    %1195 = vmatpush2.bf16.xpose.msra.mxu0 0
    %1196 = vmatprep.subr.bf16.mxu0 0
    %1197 = vmatpush2.bf16.xpose.msra.mxu0 0
    %1198 = vmatprep.mubr.bf16.mxu0 0
    %1199 = vmatmul.mubr.bf16.gmra.mxu0 %v1161
    %v1200 = vpop.f32.mrf.mxu0
    %v1201 = vadd.f32 %v56, %v1200
    %v1202 = vpop.f32.mrf.mxu0
    %v1203 = vpop.f32.mrf.mxu0
    %v1204 = vpop.f32.mrf.mxu0
    %1205 = vdwg.mxu0
    %v1207 = vunpack.c.l.b16 %v932
    %v1208 = vpack.c.b16 %v1207, %v1207
    %1209 = vrot.lane.b32.xlu0 %v1208, 64
    %v1210 = vpop.permute.xlu0 %1209
    %v1212 = vunpack.c.l.b16 %v934
    %v1213 = vpack.c.b16 %v1212, %v1212
    %1214 = vrot.lane.b32.xlu0 %v1213, 64
    %v1215 = vpop.permute.xlu0 %1214
    %v1217 = vsel %vm937, %v1210, 0
    %v1220 = vsel %vm937, %v1215, 0
    %1222 = vmatprep.subr.bf16.mxu0 0
    %1223 = vmatpush1.bf16.xpose.msra.mxu0 0
    %1224 = vmatprep.subr.bf16.mxu0 0
    %1225 = vmatpush1.bf16.xpose.msra.mxu0 0
    %1226 = vmatprep.subr.bf16.mxu0 0
    %1227 = vmatpush1.bf16.xpose.msra.mxu0 0
    %1228 = vmatprep.subr.bf16.mxu0 0
    %1229 = vmatpush1.bf16.xpose.msra.mxu0 0
    %1230 = vmatprep.subr.bf16.mxu0 0
    %1231 = vmatpush1.bf16.xpose.msra.mxu0 0
    %1232 = vmatprep.subr.bf16.mxu0 0
    %1233 = vmatpush1.bf16.xpose.msra.mxu0 0
    %1234 = vmatprep.subr.bf16.mxu0 0
    %1235 = vmatpush1.bf16.xpose.msra.mxu0 0
    %1236 = vmatprep.subr.bf16.mxu0 0
    %1237 = vmatpush1.bf16.xpose.msra.mxu0 %v1220
    %1238 = vmatprep.subr.bf16.mxu0 0
    %1239 = vmatpush2.bf16.xpose.msra.mxu0 0
    %1240 = vmatprep.subr.bf16.mxu0 0
    %1241 = vmatpush2.bf16.xpose.msra.mxu0 0
    %1242 = vmatprep.subr.bf16.mxu0 0
    %1243 = vmatpush2.bf16.xpose.msra.mxu0 0
    %1244 = vmatprep.subr.bf16.mxu0 0
    %1245 = vmatpush2.bf16.xpose.msra.mxu0 0
    %1246 = vmatprep.subr.bf16.mxu0 0
    %1247 = vmatpush2.bf16.xpose.msra.mxu0 0
    %1248 = vmatprep.subr.bf16.mxu0 0
    %1249 = vmatpush2.bf16.xpose.msra.mxu0 0
    %1250 = vmatprep.subr.bf16.mxu0 0
    %1251 = vmatpush2.bf16.xpose.msra.mxu0 0
    %1252 = vmatprep.subr.bf16.mxu0 0
    %1253 = vmatpush2.bf16.xpose.msra.mxu0 0
    %1254 = vmatprep.mubr.bf16.mxu0 0
    %1255 = vmatmul.mubr.bf16.gmra.mxu0 %v1217
    %v1256 = vpop.f32.mrf.mxu0
    %v1257 = vadd.f32 %v60, %v1256
    %v1258 = vpop.f32.mrf.mxu0
    %v1259 = vpop.f32.mrf.mxu0
    %v1260 = vpop.f32.mrf.mxu0
    %1261 = vdwg.mxu0
    %v1262 = vsel %vm1030, %v1201, -inf
    %1263 = vmax.xlane.f32.xlu0 %v1262
    %v1264 = vpop.xlane.xlu0 %1263
    %v1265 = vsel %vm1030, %v1257, -inf
    %1266 = vmax.xlane.f32.xlu0 %v1265
    %v1267 = vpop.xlane.xlu0 %1266
    %v1268 = vsub.f32 %v1201, %v1264
    %v1269 = vsub.f32 %v1257, %v1267
    %v1270 = vmul.f32 %v1268, 1.442695
    %v1271 = vpow.pop %v1270
    %v1272 = vmul.f32 %v1269, 1.442695
    %v1273 = vpow.pop %v1272
    %v1274 = vsel %vm1030, %v1271, 0.0
    %1275 = vadd.xlane.f32.xlu0 %v1274
    %v1276 = vpop.xlane.xlu0 %1275
    %v1277 = vsel %vm1030, %v1273, 0.0
    %1278 = vadd.xlane.f32.xlu0 %v1277
    %v1279 = vpop.xlane.xlu0 %1278
    %v1280 = vrcp.pop %v1276
    %v1281 = vrcp.pop %v1279
    %v1282 = vpack.c.bf16 %v1271, %v1271
    %v1283 = vpack.c.bf16 %v1273, %v1273
    %v1285 = vunpack.c.l.b16 %v935
    %v1286 = vpack.c.b16 %v1285, %v1285
    %1287 = vrot.lane.b32.xlu0 %v1286, 64
    %v1288 = vpop.permute.xlu0 %1287
    %v1290 = vsel %vm1030, %v1282, 0
    %v1293 = vsel %vm1056, %v1288, 0
    %1295 = vmatprep.subr.bf16.mxu0 0
    %1296 = vmatpush1.bf16.msra.mxu0 0
    %1297 = vmatprep.subr.bf16.mxu0 0
    %1298 = vmatpush1.bf16.msra.mxu0 0
    %1299 = vmatprep.subr.bf16.mxu0 0
    %1300 = vmatpush1.bf16.msra.mxu0 0
    %1301 = vmatprep.subr.bf16.mxu0 0
    %1302 = vmatpush1.bf16.msra.mxu0 0
    %1303 = vmatprep.subr.bf16.mxu0 0
    %1304 = vmatpush1.bf16.msra.mxu0 0
    %1305 = vmatprep.subr.bf16.mxu0 0
    %1306 = vmatpush1.bf16.msra.mxu0 0
    %1307 = vmatprep.subr.bf16.mxu0 0
    %1308 = vmatpush1.bf16.msra.mxu0 0
    %1309 = vmatprep.subr.bf16.mxu0 0
    %1310 = vmatpush1.bf16.msra.mxu0 %v1293
    %1311 = vmatprep.subr.bf16.mxu0 0
    %1312 = vmatpush2.bf16.msra.mxu0 0
    %1313 = vmatprep.subr.bf16.mxu0 0
    %1314 = vmatpush2.bf16.msra.mxu0 0
    %1315 = vmatprep.subr.bf16.mxu0 0
    %1316 = vmatpush2.bf16.msra.mxu0 0
    %1317 = vmatprep.subr.bf16.mxu0 0
    %1318 = vmatpush2.bf16.msra.mxu0 0
    %1319 = vmatprep.subr.bf16.mxu0 0
    %1320 = vmatpush2.bf16.msra.mxu0 0
    %1321 = vmatprep.subr.bf16.mxu0 0
    %1322 = vmatpush2.bf16.msra.mxu0 0
    %1323 = vmatprep.subr.bf16.mxu0 0
    %1324 = vmatpush2.bf16.msra.mxu0 0
    %1325 = vmatprep.subr.bf16.mxu0 0
    %1326 = vmatpush2.bf16.msra.mxu0 0
    %1327 = vmatprep.mubr.bf16.mxu0 0
    %1328 = vmatmul.mubr.bf16.gmra.mxu0 %v1290
    %v1329 = vpop.f32.mrf.mxu0
    %v1330 = vadd.f32 0.0, %v1329
    %v1331 = vpop.f32.mrf.mxu0
    %v1332 = vpop.f32.mrf.mxu0
    %v1333 = vpop.f32.mrf.mxu0
    %1334 = vdwg.mxu0
    %v1336 = vunpack.c.l.b16 %v936
    %v1337 = vpack.c.b16 %v1336, %v1336
    %1338 = vrot.lane.b32.xlu0 %v1337, 64
    %v1339 = vpop.permute.xlu0 %1338
    %v1341 = vsel %vm1030, %v1283, 0
    %v1344 = vsel %vm1056, %v1339, 0
    %1346 = vmatprep.subr.bf16.mxu0 0
    %1347 = vmatpush1.bf16.msra.mxu0 0
    %1348 = vmatprep.subr.bf16.mxu0 0
    %1349 = vmatpush1.bf16.msra.mxu0 0
    %1350 = vmatprep.subr.bf16.mxu0 0
    %1351 = vmatpush1.bf16.msra.mxu0 0
    %1352 = vmatprep.subr.bf16.mxu0 0
    %1353 = vmatpush1.bf16.msra.mxu0 0
    %1354 = vmatprep.subr.bf16.mxu0 0
    %1355 = vmatpush1.bf16.msra.mxu0 0
    %1356 = vmatprep.subr.bf16.mxu0 0
    %1357 = vmatpush1.bf16.msra.mxu0 0
    %1358 = vmatprep.subr.bf16.mxu0 0
    %1359 = vmatpush1.bf16.msra.mxu0 0
    %1360 = vmatprep.subr.bf16.mxu0 0
    %1361 = vmatpush1.bf16.msra.mxu0 %v1344
    %1362 = vmatprep.subr.bf16.mxu0 0
    %1363 = vmatpush2.bf16.msra.mxu0 0
    %1364 = vmatprep.subr.bf16.mxu0 0
    %1365 = vmatpush2.bf16.msra.mxu0 0
    %1366 = vmatprep.subr.bf16.mxu0 0
    %1367 = vmatpush2.bf16.msra.mxu0 0
    %1368 = vmatprep.subr.bf16.mxu0 0
    %1369 = vmatpush2.bf16.msra.mxu0 0
    %1370 = vmatprep.subr.bf16.mxu0 0
    %1371 = vmatpush2.bf16.msra.mxu0 0
    %1372 = vmatprep.subr.bf16.mxu0 0
    %1373 = vmatpush2.bf16.msra.mxu0 0
    %1374 = vmatprep.subr.bf16.mxu0 0
    %1375 = vmatpush2.bf16.msra.mxu0 0
    %1376 = vmatprep.subr.bf16.mxu0 0
    %1377 = vmatpush2.bf16.msra.mxu0 0
    %1378 = vmatprep.mubr.bf16.mxu0 0
    %1379 = vmatmul.mubr.bf16.gmra.mxu0 %v1341
    %v1380 = vpop.f32.mrf.mxu0
    %v1381 = vadd.f32 0.0, %v1380
    %v1382 = vpop.f32.mrf.mxu0
    %v1383 = vpop.f32.mrf.mxu0
    %v1384 = vpop.f32.mrf.mxu0
    %1385 = vdwg.mxu0
    %v1386 = vmul.f32 %v1330, %v1280
    %v1387 = vmul.f32 %v1381, %v1281
    %v1388 = vpack.c.bf16 %v1386, %v1386
    %v1389 = vpack.c.bf16 %v1387, %v1387
    %1392 = vrot.lane.b32.xlu0 %v1388, 64
    %v1393 = vpop.permute.xlu0 %1392
    %1394 = vrot.lane.b32.xlu0 %v1389, 64
    %v1395 = vpop.permute.xlu0 %1394
    %v1398 = vsel %vm937, %v1148, %v1393
    %v1402 = vsel %vm937, %v1149, %v1395
    %1404 = vst [vmem:[#allocation5] sm:$0xf] %v1398
    %1405 = vst [vmem:[#allocation5 + $0x18] sm:$0xf] %v1402
    %v1406 = vld [vmem:[#allocation2 + $0x4] sm:$0xf]
    %v1407 = vld [vmem:[#allocation2 + $0x1c] sm:$0xf]
    %v1408 = vld [vmem:[#allocation3 + $0x4] sm:$0xf]
    %v1409 = vld [vmem:[#allocation3 + $0x1c] sm:$0xf]
    %v1410 = vld [vmem:[#allocation4 + $0x4] sm:$0xf]
    %v1411 = vld [vmem:[#allocation4 + $0x1c] sm:$0xf]
    %v1413 = vsel %vm937, %v1406, 0
    %v1416 = vsel %vm937, %v1408, 0
    %1418 = vmatprep.subr.bf16.mxu0 0
    %1419 = vmatpush1.bf16.xpose.msra.mxu0 0
    %1420 = vmatprep.subr.bf16.mxu0 0
    %1421 = vmatpush1.bf16.xpose.msra.mxu0 0
    %1422 = vmatprep.subr.bf16.mxu0 0
    %1423 = vmatpush1.bf16.xpose.msra.mxu0 0
    %1424 = vmatprep.subr.bf16.mxu0 0
    %1425 = vmatpush1.bf16.xpose.msra.mxu0 0
    %1426 = vmatprep.subr.bf16.mxu0 0
    %1427 = vmatpush1.bf16.xpose.msra.mxu0 0
    %1428 = vmatprep.subr.bf16.mxu0 0
    %1429 = vmatpush1.bf16.xpose.msra.mxu0 0
    %1430 = vmatprep.subr.bf16.mxu0 0
    %1431 = vmatpush1.bf16.xpose.msra.mxu0 0
    %1432 = vmatprep.subr.bf16.mxu0 0
    %1433 = vmatpush1.bf16.xpose.msra.mxu0 %v1416
    %1434 = vmatprep.subr.bf16.mxu0 0
    %1435 = vmatpush2.bf16.xpose.msra.mxu0 0
    %1436 = vmatprep.subr.bf16.mxu0 0
    %1437 = vmatpush2.bf16.xpose.msra.mxu0 0
    %1438 = vmatprep.subr.bf16.mxu0 0
    %1439 = vmatpush2.bf16.xpose.msra.mxu0 0
    %1440 = vmatprep.subr.bf16.mxu0 0
    %1441 = vmatpush2.bf16.xpose.msra.mxu0 0
    %1442 = vmatprep.subr.bf16.mxu0 0
    %1443 = vmatpush2.bf16.xpose.msra.mxu0 0
    %1444 = vmatprep.subr.bf16.mxu0 0
    %1445 = vmatpush2.bf16.xpose.msra.mxu0 0
    %1446 = vmatprep.subr.bf16.mxu0 0
    %1447 = vmatpush2.bf16.xpose.msra.mxu0 0
    %1448 = vmatprep.subr.bf16.mxu0 0
    %1449 = vmatpush2.bf16.xpose.msra.mxu0 0
    %1450 = vmatprep.mubr.bf16.mxu0 0
    %1451 = vmatmul.mubr.bf16.gmra.mxu0 %v1413
    %v1452 = vpop.f32.mrf.mxu0
    %v1453 = vadd.f32 %v56, %v1452
    %v1454 = vpop.f32.mrf.mxu0
    %v1455 = vpop.f32.mrf.mxu0
    %v1456 = vpop.f32.mrf.mxu0
    %1457 = vdwg.mxu0
    %v1459 = vsel %vm937, %v1407, 0
    %v1462 = vsel %vm937, %v1409, 0
    %1464 = vmatprep.subr.bf16.mxu0 0
    %1465 = vmatpush1.bf16.xpose.msra.mxu0 0
    %1466 = vmatprep.subr.bf16.mxu0 0
    %1467 = vmatpush1.bf16.xpose.msra.mxu0 0
    %1468 = vmatprep.subr.bf16.mxu0 0
    %1469 = vmatpush1.bf16.xpose.msra.mxu0 0
    %1470 = vmatprep.subr.bf16.mxu0 0
    %1471 = vmatpush1.bf16.xpose.msra.mxu0 0
    %1472 = vmatprep.subr.bf16.mxu0 0
    %1473 = vmatpush1.bf16.xpose.msra.mxu0 0
    %1474 = vmatprep.subr.bf16.mxu0 0
    %1475 = vmatpush1.bf16.xpose.msra.mxu0 0
    %1476 = vmatprep.subr.bf16.mxu0 0
    %1477 = vmatpush1.bf16.xpose.msra.mxu0 0
    %1478 = vmatprep.subr.bf16.mxu0 0
    %1479 = vmatpush1.bf16.xpose.msra.mxu0 %v1462
    %1480 = vmatprep.subr.bf16.mxu0 0
    %1481 = vmatpush2.bf16.xpose.msra.mxu0 0
    %1482 = vmatprep.subr.bf16.mxu0 0
    %1483 = vmatpush2.bf16.xpose.msra.mxu0 0
    %1484 = vmatprep.subr.bf16.mxu0 0
    %1485 = vmatpush2.bf16.xpose.msra.mxu0 0
    %1486 = vmatprep.subr.bf16.mxu0 0
    %1487 = vmatpush2.bf16.xpose.msra.mxu0 0
    %1488 = vmatprep.subr.bf16.mxu0 0
    %1489 = vmatpush2.bf16.xpose.msra.mxu0 0
    %1490 = vmatprep.subr.bf16.mxu0 0
    %1491 = vmatpush2.bf16.xpose.msra.mxu0 0
    %1492 = vmatprep.subr.bf16.mxu0 0
    %1493 = vmatpush2.bf16.xpose.msra.mxu0 0
    %1494 = vmatprep.subr.bf16.mxu0 0
    %1495 = vmatpush2.bf16.xpose.msra.mxu0 0
    %1496 = vmatprep.mubr.bf16.mxu0 0
    %1497 = vmatmul.mubr.bf16.gmra.mxu0 %v1459
    %v1498 = vpop.f32.mrf.mxu0
    %v1499 = vadd.f32 %v60, %v1498
    %v1500 = vpop.f32.mrf.mxu0
    %v1501 = vpop.f32.mrf.mxu0
    %v1502 = vpop.f32.mrf.mxu0
    %1503 = vdwg.mxu0
    %v1504 = vsel %vm1030, %v1453, -inf
    %1505 = vmax.xlane.f32.xlu0 %v1504
    %v1506 = vpop.xlane.xlu0 %1505
    %v1507 = vsel %vm1030, %v1499, -inf
    %1508 = vmax.xlane.f32.xlu0 %v1507
    %v1509 = vpop.xlane.xlu0 %1508
    %v1510 = vsub.f32 %v1453, %v1506
    %v1511 = vsub.f32 %v1499, %v1509
    %v1512 = vmul.f32 %v1510, 1.442695
    %v1513 = vpow.pop %v1512
    %v1514 = vmul.f32 %v1511, 1.442695
    %v1515 = vpow.pop %v1514
    %v1516 = vsel %vm1030, %v1513, 0.0
    %1517 = vadd.xlane.f32.xlu0 %v1516
    %v1518 = vpop.xlane.xlu0 %1517
    %v1519 = vsel %vm1030, %v1515, 0.0
    %1520 = vadd.xlane.f32.xlu0 %v1519
    %v1521 = vpop.xlane.xlu0 %1520
    %v1522 = vrcp.pop %v1518
    %v1523 = vrcp.pop %v1521
    %v1524 = vpack.c.bf16 %v1513, %v1513
    %v1525 = vpack.c.bf16 %v1515, %v1515
    %v1527 = vsel %vm1030, %v1524, 0
    %v1530 = vsel %vm1056, %v1410, 0
    %1532 = vmatprep.subr.bf16.mxu0 0
    %1533 = vmatpush1.bf16.msra.mxu0 0
    %1534 = vmatprep.subr.bf16.mxu0 0
    %1535 = vmatpush1.bf16.msra.mxu0 0
    %1536 = vmatprep.subr.bf16.mxu0 0
    %1537 = vmatpush1.bf16.msra.mxu0 0
    %1538 = vmatprep.subr.bf16.mxu0 0
    %1539 = vmatpush1.bf16.msra.mxu0 0
    %1540 = vmatprep.subr.bf16.mxu0 0
    %1541 = vmatpush1.bf16.msra.mxu0 0
    %1542 = vmatprep.subr.bf16.mxu0 0
    %1543 = vmatpush1.bf16.msra.mxu0 0
    %1544 = vmatprep.subr.bf16.mxu0 0
    %1545 = vmatpush1.bf16.msra.mxu0 0
    %1546 = vmatprep.subr.bf16.mxu0 0
    %1547 = vmatpush1.bf16.msra.mxu0 %v1530
    %1548 = vmatprep.subr.bf16.mxu0 0
    %1549 = vmatpush2.bf16.msra.mxu0 0
    %1550 = vmatprep.subr.bf16.mxu0 0
    %1551 = vmatpush2.bf16.msra.mxu0 0
    %1552 = vmatprep.subr.bf16.mxu0 0
    %1553 = vmatpush2.bf16.msra.mxu0 0
    %1554 = vmatprep.subr.bf16.mxu0 0
    %1555 = vmatpush2.bf16.msra.mxu0 0
    %1556 = vmatprep.subr.bf16.mxu0 0
    %1557 = vmatpush2.bf16.msra.mxu0 0
    %1558 = vmatprep.subr.bf16.mxu0 0
    %1559 = vmatpush2.bf16.msra.mxu0 0
    %1560 = vmatprep.subr.bf16.mxu0 0
    %1561 = vmatpush2.bf16.msra.mxu0 0
    %1562 = vmatprep.subr.bf16.mxu0 0
    %1563 = vmatpush2.bf16.msra.mxu0 0
    %1564 = vmatprep.mubr.bf16.mxu0 0
    %1565 = vmatmul.mubr.bf16.gmra.mxu0 %v1527
    %v1566 = vpop.f32.mrf.mxu0
    %v1567 = vadd.f32 0.0, %v1566
    %v1568 = vpop.f32.mrf.mxu0
    %v1569 = vpop.f32.mrf.mxu0
    %v1570 = vpop.f32.mrf.mxu0
    %1571 = vdwg.mxu0
    %v1573 = vsel %vm1030, %v1525, 0
    %v1576 = vsel %vm1056, %v1411, 0
    %1578 = vmatprep.subr.bf16.mxu0 0
    %1579 = vmatpush1.bf16.msra.mxu0 0
    %1580 = vmatprep.subr.bf16.mxu0 0
    %1581 = vmatpush1.bf16.msra.mxu0 0
    %1582 = vmatprep.subr.bf16.mxu0 0
    %1583 = vmatpush1.bf16.msra.mxu0 0
    %1584 = vmatprep.subr.bf16.mxu0 0
    %1585 = vmatpush1.bf16.msra.mxu0 0
    %1586 = vmatprep.subr.bf16.mxu0 0
    %1587 = vmatpush1.bf16.msra.mxu0 0
    %1588 = vmatprep.subr.bf16.mxu0 0
    %1589 = vmatpush1.bf16.msra.mxu0 0
    %1590 = vmatprep.subr.bf16.mxu0 0
    %1591 = vmatpush1.bf16.msra.mxu0 0
    %1592 = vmatprep.subr.bf16.mxu0 0
    %1593 = vmatpush1.bf16.msra.mxu0 %v1576
    %1594 = vmatprep.subr.bf16.mxu0 0
    %1595 = vmatpush2.bf16.msra.mxu0 0
    %1596 = vmatprep.subr.bf16.mxu0 0
    %1597 = vmatpush2.bf16.msra.mxu0 0
    %1598 = vmatprep.subr.bf16.mxu0 0
    %1599 = vmatpush2.bf16.msra.mxu0 0
    %1600 = vmatprep.subr.bf16.mxu0 0
    %1601 = vmatpush2.bf16.msra.mxu0 0
    %1602 = vmatprep.subr.bf16.mxu0 0
    %1603 = vmatpush2.bf16.msra.mxu0 0
    %1604 = vmatprep.subr.bf16.mxu0 0
    %1605 = vmatpush2.bf16.msra.mxu0 0
    %1606 = vmatprep.subr.bf16.mxu0 0
    %1607 = vmatpush2.bf16.msra.mxu0 0
    %1608 = vmatprep.subr.bf16.mxu0 0
    %1609 = vmatpush2.bf16.msra.mxu0 0
    %1610 = vmatprep.mubr.bf16.mxu0 0
    %1611 = vmatmul.mubr.bf16.gmra.mxu0 %v1573
    %v1612 = vpop.f32.mrf.mxu0
    %v1613 = vadd.f32 0.0, %v1612
    %v1614 = vpop.f32.mrf.mxu0
    %v1615 = vpop.f32.mrf.mxu0
    %v1616 = vpop.f32.mrf.mxu0
    %1617 = vdwg.mxu0
    %v1618 = vmul.f32 %v1567, %v1522
    %v1619 = vmul.f32 %v1613, %v1523
    %v1620 = vpack.c.bf16 %v1618, %v1618
    %v1621 = vpack.c.bf16 %v1619, %v1619
    %v1623 = vunpack.c.l.b16 %v1406
    %v1624 = vpack.c.b16 %v1623, %v1623
    %1625 = vrot.lane.b32.xlu0 %v1624, 64
    %v1626 = vpop.permute.xlu0 %1625
    %v1628 = vunpack.c.l.b16 %v1408
    %v1629 = vpack.c.b16 %v1628, %v1628
    %1630 = vrot.lane.b32.xlu0 %v1629, 64
    %v1631 = vpop.permute.xlu0 %1630
    %v1633 = vsel %vm937, %v1626, 0
    %v1636 = vsel %vm937, %v1631, 0
    %1638 = vmatprep.subr.bf16.mxu0 0
    %1639 = vmatpush1.bf16.xpose.msra.mxu0 0
    %1640 = vmatprep.subr.bf16.mxu0 0
    %1641 = vmatpush1.bf16.xpose.msra.mxu0 0
    %1642 = vmatprep.subr.bf16.mxu0 0
    %1643 = vmatpush1.bf16.xpose.msra.mxu0 0
    %1644 = vmatprep.subr.bf16.mxu0 0
    %1645 = vmatpush1.bf16.xpose.msra.mxu0 0
    %1646 = vmatprep.subr.bf16.mxu0 0
    %1647 = vmatpush1.bf16.xpose.msra.mxu0 0
    %1648 = vmatprep.subr.bf16.mxu0 0
    %1649 = vmatpush1.bf16.xpose.msra.mxu0 0
    %1650 = vmatprep.subr.bf16.mxu0 0
    %1651 = vmatpush1.bf16.xpose.msra.mxu0 0
    %1652 = vmatprep.subr.bf16.mxu0 0
    %1653 = vmatpush1.bf16.xpose.msra.mxu0 %v1636
    %1654 = vmatprep.subr.bf16.mxu0 0
    %1655 = vmatpush2.bf16.xpose.msra.mxu0 0
    %1656 = vmatprep.subr.bf16.mxu0 0
    %1657 = vmatpush2.bf16.xpose.msra.mxu0 0
    %1658 = vmatprep.subr.bf16.mxu0 0
    %1659 = vmatpush2.bf16.xpose.msra.mxu0 0
    %1660 = vmatprep.subr.bf16.mxu0 0
    %1661 = vmatpush2.bf16.xpose.msra.mxu0 0
    %1662 = vmatprep.subr.bf16.mxu0 0
    %1663 = vmatpush2.bf16.xpose.msra.mxu0 0
    %1664 = vmatprep.subr.bf16.mxu0 0
    %1665 = vmatpush2.bf16.xpose.msra.mxu0 0
    %1666 = vmatprep.subr.bf16.mxu0 0
    %1667 = vmatpush2.bf16.xpose.msra.mxu0 0
    %1668 = vmatprep.subr.bf16.mxu0 0
    %1669 = vmatpush2.bf16.xpose.msra.mxu0 0
    %1670 = vmatprep.mubr.bf16.mxu0 0
    %1671 = vmatmul.mubr.bf16.gmra.mxu0 %v1633
    %v1672 = vpop.f32.mrf.mxu0
    %v1673 = vadd.f32 %v56, %v1672
    %v1674 = vpop.f32.mrf.mxu0
    %v1675 = vpop.f32.mrf.mxu0
    %v1676 = vpop.f32.mrf.mxu0
    %1677 = vdwg.mxu0
    %v1679 = vunpack.c.l.b16 %v1407
    %v1680 = vpack.c.b16 %v1679, %v1679
    %1681 = vrot.lane.b32.xlu0 %v1680, 64
    %v1682 = vpop.permute.xlu0 %1681
    %v1684 = vunpack.c.l.b16 %v1409
    %v1685 = vpack.c.b16 %v1684, %v1684
    %1686 = vrot.lane.b32.xlu0 %v1685, 64
    %v1687 = vpop.permute.xlu0 %1686
    %v1689 = vsel %vm937, %v1682, 0
    %v1692 = vsel %vm937, %v1687, 0
    %1694 = vmatprep.subr.bf16.mxu0 0
    %1695 = vmatpush1.bf16.xpose.msra.mxu0 0
    %1696 = vmatprep.subr.bf16.mxu0 0
    %1697 = vmatpush1.bf16.xpose.msra.mxu0 0
    %1698 = vmatprep.subr.bf16.mxu0 0
    %1699 = vmatpush1.bf16.xpose.msra.mxu0 0
    %1700 = vmatprep.subr.bf16.mxu0 0
    %1701 = vmatpush1.bf16.xpose.msra.mxu0 0
    %1702 = vmatprep.subr.bf16.mxu0 0
    %1703 = vmatpush1.bf16.xpose.msra.mxu0 0
    %1704 = vmatprep.subr.bf16.mxu0 0
    %1705 = vmatpush1.bf16.xpose.msra.mxu0 0
    %1706 = vmatprep.subr.bf16.mxu0 0
    %1707 = vmatpush1.bf16.xpose.msra.mxu0 0
    %1708 = vmatprep.subr.bf16.mxu0 0
    %1709 = vmatpush1.bf16.xpose.msra.mxu0 %v1692
    %1710 = vmatprep.subr.bf16.mxu0 0
    %1711 = vmatpush2.bf16.xpose.msra.mxu0 0
    %1712 = vmatprep.subr.bf16.mxu0 0
    %1713 = vmatpush2.bf16.xpose.msra.mxu0 0
    %1714 = vmatprep.subr.bf16.mxu0 0
    %1715 = vmatpush2.bf16.xpose.msra.mxu0 0
    %1716 = vmatprep.subr.bf16.mxu0 0
    %1717 = vmatpush2.bf16.xpose.msra.mxu0 0
    %1718 = vmatprep.subr.bf16.mxu0 0
    %1719 = vmatpush2.bf16.xpose.msra.mxu0 0
    %1720 = vmatprep.subr.bf16.mxu0 0
    %1721 = vmatpush2.bf16.xpose.msra.mxu0 0
    %1722 = vmatprep.subr.bf16.mxu0 0
    %1723 = vmatpush2.bf16.xpose.msra.mxu0 0
    %1724 = vmatprep.subr.bf16.mxu0 0
    %1725 = vmatpush2.bf16.xpose.msra.mxu0 0
    %1726 = vmatprep.mubr.bf16.mxu0 0
    %1727 = vmatmul.mubr.bf16.gmra.mxu0 %v1689
    %v1728 = vpop.f32.mrf.mxu0
    %v1729 = vadd.f32 %v60, %v1728
    %v1730 = vpop.f32.mrf.mxu0
    %v1731 = vpop.f32.mrf.mxu0
    %v1732 = vpop.f32.mrf.mxu0
    %1733 = vdwg.mxu0
    %v1734 = vsel %vm1030, %v1673, -inf
    %1735 = vmax.xlane.f32.xlu0 %v1734
    %v1736 = vpop.xlane.xlu0 %1735
    %v1737 = vsel %vm1030, %v1729, -inf
    %1738 = vmax.xlane.f32.xlu0 %v1737
    %v1739 = vpop.xlane.xlu0 %1738
    %v1740 = vsub.f32 %v1673, %v1736
    %v1741 = vsub.f32 %v1729, %v1739
    %v1742 = vmul.f32 %v1740, 1.442695
    %v1743 = vpow.pop %v1742
    %v1744 = vmul.f32 %v1741, 1.442695
    %v1745 = vpow.pop %v1744
    %v1746 = vsel %vm1030, %v1743, 0.0
    %1747 = vadd.xlane.f32.xlu0 %v1746
    %v1748 = vpop.xlane.xlu0 %1747
    %v1749 = vsel %vm1030, %v1745, 0.0
    %1750 = vadd.xlane.f32.xlu0 %v1749
    %v1751 = vpop.xlane.xlu0 %1750
    %v1752 = vrcp.pop %v1748
    %v1753 = vrcp.pop %v1751
    %v1754 = vpack.c.bf16 %v1743, %v1743
    %v1755 = vpack.c.bf16 %v1745, %v1745
    %v1757 = vunpack.c.l.b16 %v1410
    %v1758 = vpack.c.b16 %v1757, %v1757
    %1759 = vrot.lane.b32.xlu0 %v1758, 64
    %v1760 = vpop.permute.xlu0 %1759
    %v1762 = vsel %vm1030, %v1754, 0
    %v1765 = vsel %vm1056, %v1760, 0
    %1767 = vmatprep.subr.bf16.mxu0 0
    %1768 = vmatpush1.bf16.msra.mxu0 0
    %1769 = vmatprep.subr.bf16.mxu0 0
    %1770 = vmatpush1.bf16.msra.mxu0 0
    %1771 = vmatprep.subr.bf16.mxu0 0
    %1772 = vmatpush1.bf16.msra.mxu0 0
    %1773 = vmatprep.subr.bf16.mxu0 0
    %1774 = vmatpush1.bf16.msra.mxu0 0
    %1775 = vmatprep.subr.bf16.mxu0 0
    %1776 = vmatpush1.bf16.msra.mxu0 0
    %1777 = vmatprep.subr.bf16.mxu0 0
    %1778 = vmatpush1.bf16.msra.mxu0 0
    %1779 = vmatprep.subr.bf16.mxu0 0
    %1780 = vmatpush1.bf16.msra.mxu0 0
    %1781 = vmatprep.subr.bf16.mxu0 0
    %1782 = vmatpush1.bf16.msra.mxu0 %v1765
    %1783 = vmatprep.subr.bf16.mxu0 0
    %1784 = vmatpush2.bf16.msra.mxu0 0
    %1785 = vmatprep.subr.bf16.mxu0 0
    %1786 = vmatpush2.bf16.msra.mxu0 0
    %1787 = vmatprep.subr.bf16.mxu0 0
    %1788 = vmatpush2.bf16.msra.mxu0 0
    %1789 = vmatprep.subr.bf16.mxu0 0
    %1790 = vmatpush2.bf16.msra.mxu0 0
    %1791 = vmatprep.subr.bf16.mxu0 0
    %1792 = vmatpush2.bf16.msra.mxu0 0
    %1793 = vmatprep.subr.bf16.mxu0 0
    %1794 = vmatpush2.bf16.msra.mxu0 0
    %1795 = vmatprep.subr.bf16.mxu0 0
    %1796 = vmatpush2.bf16.msra.mxu0 0
    %1797 = vmatprep.subr.bf16.mxu0 0
    %1798 = vmatpush2.bf16.msra.mxu0 0
    %1799 = vmatprep.mubr.bf16.mxu0 0
    %1800 = vmatmul.mubr.bf16.gmra.mxu0 %v1762
    %v1801 = vpop.f32.mrf.mxu0
    %v1802 = vadd.f32 0.0, %v1801
    %v1803 = vpop.f32.mrf.mxu0
    %v1804 = vpop.f32.mrf.mxu0
    %v1805 = vpop.f32.mrf.mxu0
    %1806 = vdwg.mxu0
    %v1808 = vunpack.c.l.b16 %v1411
    %v1809 = vpack.c.b16 %v1808, %v1808
    %1810 = vrot.lane.b32.xlu0 %v1809, 64
    %v1811 = vpop.permute.xlu0 %1810
    %v1813 = vsel %vm1030, %v1755, 0
    %v1816 = vsel %vm1056, %v1811, 0
    %1818 = vmatprep.subr.bf16.mxu0 0
    %1819 = vmatpush1.bf16.msra.mxu0 0
    %1820 = vmatprep.subr.bf16.mxu0 0
    %1821 = vmatpush1.bf16.msra.mxu0 0
    %1822 = vmatprep.subr.bf16.mxu0 0
    %1823 = vmatpush1.bf16.msra.mxu0 0
    %1824 = vmatprep.subr.bf16.mxu0 0
    %1825 = vmatpush1.bf16.msra.mxu0 0
    %1826 = vmatprep.subr.bf16.mxu0 0
    %1827 = vmatpush1.bf16.msra.mxu0 0
    %1828 = vmatprep.subr.bf16.mxu0 0
    %1829 = vmatpush1.bf16.msra.mxu0 0
    %1830 = vmatprep.subr.bf16.mxu0 0
    %1831 = vmatpush1.bf16.msra.mxu0 0
    %1832 = vmatprep.subr.bf16.mxu0 0
    %1833 = vmatpush1.bf16.msra.mxu0 %v1816
    %1834 = vmatprep.subr.bf16.mxu0 0
    %1835 = vmatpush2.bf16.msra.mxu0 0
    %1836 = vmatprep.subr.bf16.mxu0 0
    %1837 = vmatpush2.bf16.msra.mxu0 0
    %1838 = vmatprep.subr.bf16.mxu0 0
    %1839 = vmatpush2.bf16.msra.mxu0 0
    %1840 = vmatprep.subr.bf16.mxu0 0
    %1841 = vmatpush2.bf16.msra.mxu0 0
    %1842 = vmatprep.subr.bf16.mxu0 0
    %1843 = vmatpush2.bf16.msra.mxu0 0
    %1844 = vmatprep.subr.bf16.mxu0 0
    %1845 = vmatpush2.bf16.msra.mxu0 0
    %1846 = vmatprep.subr.bf16.mxu0 0
    %1847 = vmatpush2.bf16.msra.mxu0 0
    %1848 = vmatprep.subr.bf16.mxu0 0
    %1849 = vmatpush2.bf16.msra.mxu0 0
    %1850 = vmatprep.mubr.bf16.mxu0 0
    %1851 = vmatmul.mubr.bf16.gmra.mxu0 %v1813
    %v1852 = vpop.f32.mrf.mxu0
    %v1853 = vadd.f32 0.0, %v1852
    %v1854 = vpop.f32.mrf.mxu0
    %v1855 = vpop.f32.mrf.mxu0
    %v1856 = vpop.f32.mrf.mxu0
    %1857 = vdwg.mxu0
    %v1858 = vmul.f32 %v1802, %v1752
    %v1859 = vmul.f32 %v1853, %v1753
    %v1860 = vpack.c.bf16 %v1858, %v1858
    %v1861 = vpack.c.bf16 %v1859, %v1859
    %1864 = vrot.lane.b32.xlu0 %v1860, 64
    %v1865 = vpop.permute.xlu0 %1864
    %1866 = vrot.lane.b32.xlu0 %v1861, 64
    %v1867 = vpop.permute.xlu0 %1866
    %v1870 = vsel %vm937, %v1620, %v1865
    %v1874 = vsel %vm937, %v1621, %v1867
    %1876 = vst [vmem:[#allocation5 + $0x4] sm:$0xf] %v1870
    %1877 = vst [vmem:[#allocation5 + $0x1c] sm:$0xf] %v1874
    %v1878 = vld [vmem:[#allocation2 + $0x8] sm:$0xf]
    %v1879 = vld [vmem:[#allocation2 + $0x20] sm:$0xf]
    %v1880 = vld [vmem:[#allocation3 + $0x8] sm:$0xf]
    %v1881 = vld [vmem:[#allocation3 + $0x20] sm:$0xf]
    %v1882 = vld [vmem:[#allocation4 + $0x8] sm:$0xf]
    %v1883 = vld [vmem:[#allocation4 + $0x20] sm:$0xf]
    %v1885 = vsel %vm937, %v1878, 0
    %v1888 = vsel %vm937, %v1880, 0
    %1890 = vmatprep.subr.bf16.mxu0 0
    %1891 = vmatpush1.bf16.xpose.msra.mxu0 0
    %1892 = vmatprep.subr.bf16.mxu0 0
    %1893 = vmatpush1.bf16.xpose.msra.mxu0 0
    %1894 = vmatprep.subr.bf16.mxu0 0
    %1895 = vmatpush1.bf16.xpose.msra.mxu0 0
    %1896 = vmatprep.subr.bf16.mxu0 0
    %1897 = vmatpush1.bf16.xpose.msra.mxu0 0
    %1898 = vmatprep.subr.bf16.mxu0 0
    %1899 = vmatpush1.bf16.xpose.msra.mxu0 0
    %1900 = vmatprep.subr.bf16.mxu0 0
    %1901 = vmatpush1.bf16.xpose.msra.mxu0 0
    %1902 = vmatprep.subr.bf16.mxu0 0
    %1903 = vmatpush1.bf16.xpose.msra.mxu0 0
    %1904 = vmatprep.subr.bf16.mxu0 0
    %1905 = vmatpush1.bf16.xpose.msra.mxu0 %v1888
    %1906 = vmatprep.subr.bf16.mxu0 0
    %1907 = vmatpush2.bf16.xpose.msra.mxu0 0
    %1908 = vmatprep.subr.bf16.mxu0 0
    %1909 = vmatpush2.bf16.xpose.msra.mxu0 0
    %1910 = vmatprep.subr.bf16.mxu0 0
    %1911 = vmatpush2.bf16.xpose.msra.mxu0 0
    %1912 = vmatprep.subr.bf16.mxu0 0
    %1913 = vmatpush2.bf16.xpose.msra.mxu0 0
    %1914 = vmatprep.subr.bf16.mxu0 0
    %1915 = vmatpush2.bf16.xpose.msra.mxu0 0
    %1916 = vmatprep.subr.bf16.mxu0 0
    %1917 = vmatpush2.bf16.xpose.msra.mxu0 0
    %1918 = vmatprep.subr.bf16.mxu0 0
    %1919 = vmatpush2.bf16.xpose.msra.mxu0 0
    %1920 = vmatprep.subr.bf16.mxu0 0
    %1921 = vmatpush2.bf16.xpose.msra.mxu0 0
    %1922 = vmatprep.mubr.bf16.mxu0 0
    %1923 = vmatmul.mubr.bf16.gmra.mxu0 %v1885
    %v1924 = vpop.f32.mrf.mxu0
    %v1925 = vadd.f32 %v56, %v1924
    %v1926 = vpop.f32.mrf.mxu0
    %v1927 = vpop.f32.mrf.mxu0
    %v1928 = vpop.f32.mrf.mxu0
    %1929 = vdwg.mxu0
    %v1931 = vsel %vm937, %v1879, 0
    %v1934 = vsel %vm937, %v1881, 0
    %1936 = vmatprep.subr.bf16.mxu0 0
    %1937 = vmatpush1.bf16.xpose.msra.mxu0 0
    %1938 = vmatprep.subr.bf16.mxu0 0
    %1939 = vmatpush1.bf16.xpose.msra.mxu0 0
    %1940 = vmatprep.subr.bf16.mxu0 0
    %1941 = vmatpush1.bf16.xpose.msra.mxu0 0
    %1942 = vmatprep.subr.bf16.mxu0 0
    %1943 = vmatpush1.bf16.xpose.msra.mxu0 0
    %1944 = vmatprep.subr.bf16.mxu0 0
    %1945 = vmatpush1.bf16.xpose.msra.mxu0 0
    %1946 = vmatprep.subr.bf16.mxu0 0
    %1947 = vmatpush1.bf16.xpose.msra.mxu0 0
    %1948 = vmatprep.subr.bf16.mxu0 0
    %1949 = vmatpush1.bf16.xpose.msra.mxu0 0
    %1950 = vmatprep.subr.bf16.mxu0 0
    %1951 = vmatpush1.bf16.xpose.msra.mxu0 %v1934
    %1952 = vmatprep.subr.bf16.mxu0 0
    %1953 = vmatpush2.bf16.xpose.msra.mxu0 0
    %1954 = vmatprep.subr.bf16.mxu0 0
    %1955 = vmatpush2.bf16.xpose.msra.mxu0 0
    %1956 = vmatprep.subr.bf16.mxu0 0
    %1957 = vmatpush2.bf16.xpose.msra.mxu0 0
    %1958 = vmatprep.subr.bf16.mxu0 0
    %1959 = vmatpush2.bf16.xpose.msra.mxu0 0
    %1960 = vmatprep.subr.bf16.mxu0 0
    %1961 = vmatpush2.bf16.xpose.msra.mxu0 0
    %1962 = vmatprep.subr.bf16.mxu0 0
    %1963 = vmatpush2.bf16.xpose.msra.mxu0 0
    %1964 = vmatprep.subr.bf16.mxu0 0
    %1965 = vmatpush2.bf16.xpose.msra.mxu0 0
    %1966 = vmatprep.subr.bf16.mxu0 0
    %1967 = vmatpush2.bf16.xpose.msra.mxu0 0
    %1968 = vmatprep.mubr.bf16.mxu0 0
    %1969 = vmatmul.mubr.bf16.gmra.mxu0 %v1931
    %v1970 = vpop.f32.mrf.mxu0
    %v1971 = vadd.f32 %v60, %v1970
    %v1972 = vpop.f32.mrf.mxu0
    %v1973 = vpop.f32.mrf.mxu0
    %v1974 = vpop.f32.mrf.mxu0
    %1975 = vdwg.mxu0
    %v1976 = vsel %vm1030, %v1925, -inf
    %1977 = vmax.xlane.f32.xlu0 %v1976
    %v1978 = vpop.xlane.xlu0 %1977
    %v1979 = vsel %vm1030, %v1971, -inf
    %1980 = vmax.xlane.f32.xlu0 %v1979
    %v1981 = vpop.xlane.xlu0 %1980
    %v1982 = vsub.f32 %v1925, %v1978
    %v1983 = vsub.f32 %v1971, %v1981
    %v1984 = vmul.f32 %v1982, 1.442695
    %v1985 = vpow.pop %v1984
    %v1986 = vmul.f32 %v1983, 1.442695
    %v1987 = vpow.pop %v1986
    %v1988 = vsel %vm1030, %v1985, 0.0
    %1989 = vadd.xlane.f32.xlu0 %v1988
    %v1990 = vpop.xlane.xlu0 %1989
    %v1991 = vsel %vm1030, %v1987, 0.0
    %1992 = vadd.xlane.f32.xlu0 %v1991
    %v1993 = vpop.xlane.xlu0 %1992
    %v1994 = vrcp.pop %v1990
    %v1995 = vrcp.pop %v1993
    %v1996 = vpack.c.bf16 %v1985, %v1985
    %v1997 = vpack.c.bf16 %v1987, %v1987
    %v1999 = vsel %vm1030, %v1996, 0
    %v2002 = vsel %vm1056, %v1882, 0
    %2004 = vmatprep.subr.bf16.mxu0 0
    %2005 = vmatpush1.bf16.msra.mxu0 0
    %2006 = vmatprep.subr.bf16.mxu0 0
    %2007 = vmatpush1.bf16.msra.mxu0 0
    %2008 = vmatprep.subr.bf16.mxu0 0
    %2009 = vmatpush1.bf16.msra.mxu0 0
    %2010 = vmatprep.subr.bf16.mxu0 0
    %2011 = vmatpush1.bf16.msra.mxu0 0
    %2012 = vmatprep.subr.bf16.mxu0 0
    %2013 = vmatpush1.bf16.msra.mxu0 0
    %2014 = vmatprep.subr.bf16.mxu0 0
    %2015 = vmatpush1.bf16.msra.mxu0 0
    %2016 = vmatprep.subr.bf16.mxu0 0
    %2017 = vmatpush1.bf16.msra.mxu0 0
    %2018 = vmatprep.subr.bf16.mxu0 0
    %2019 = vmatpush1.bf16.msra.mxu0 %v2002
    %2020 = vmatprep.subr.bf16.mxu0 0
    %2021 = vmatpush2.bf16.msra.mxu0 0
    %2022 = vmatprep.subr.bf16.mxu0 0
    %2023 = vmatpush2.bf16.msra.mxu0 0
    %2024 = vmatprep.subr.bf16.mxu0 0
    %2025 = vmatpush2.bf16.msra.mxu0 0
    %2026 = vmatprep.subr.bf16.mxu0 0
    %2027 = vmatpush2.bf16.msra.mxu0 0
    %2028 = vmatprep.subr.bf16.mxu0 0
    %2029 = vmatpush2.bf16.msra.mxu0 0
    %2030 = vmatprep.subr.bf16.mxu0 0
    %2031 = vmatpush2.bf16.msra.mxu0 0
    %2032 = vmatprep.subr.bf16.mxu0 0
    %2033 = vmatpush2.bf16.msra.mxu0 0
    %2034 = vmatprep.subr.bf16.mxu0 0
    %2035 = vmatpush2.bf16.msra.mxu0 0
    %2036 = vmatprep.mubr.bf16.mxu0 0
    %2037 = vmatmul.mubr.bf16.gmra.mxu0 %v1999
    %v2038 = vpop.f32.mrf.mxu0
    %v2039 = vadd.f32 0.0, %v2038
    %v2040 = vpop.f32.mrf.mxu0
    %v2041 = vpop.f32.mrf.mxu0
    %v2042 = vpop.f32.mrf.mxu0
    %2043 = vdwg.mxu0
    %v2045 = vsel %vm1030, %v1997, 0
    %v2048 = vsel %vm1056, %v1883, 0
    %2050 = vmatprep.subr.bf16.mxu0 0
    %2051 = vmatpush1.bf16.msra.mxu0 0
    %2052 = vmatprep.subr.bf16.mxu0 0
    %2053 = vmatpush1.bf16.msra.mxu0 0
    %2054 = vmatprep.subr.bf16.mxu0 0
    %2055 = vmatpush1.bf16.msra.mxu0 0
    %2056 = vmatprep.subr.bf16.mxu0 0
    %2057 = vmatpush1.bf16.msra.mxu0 0
    %2058 = vmatprep.subr.bf16.mxu0 0
    %2059 = vmatpush1.bf16.msra.mxu0 0
    %2060 = vmatprep.subr.bf16.mxu0 0
    %2061 = vmatpush1.bf16.msra.mxu0 0
    %2062 = vmatprep.subr.bf16.mxu0 0
    %2063 = vmatpush1.bf16.msra.mxu0 0
    %2064 = vmatprep.subr.bf16.mxu0 0
    %2065 = vmatpush1.bf16.msra.mxu0 %v2048
    %2066 = vmatprep.subr.bf16.mxu0 0
    %2067 = vmatpush2.bf16.msra.mxu0 0
    %2068 = vmatprep.subr.bf16.mxu0 0
    %2069 = vmatpush2.bf16.msra.mxu0 0
    %2070 = vmatprep.subr.bf16.mxu0 0
    %2071 = vmatpush2.bf16.msra.mxu0 0
    %2072 = vmatprep.subr.bf16.mxu0 0
    %2073 = vmatpush2.bf16.msra.mxu0 0
    %2074 = vmatprep.subr.bf16.mxu0 0
    %2075 = vmatpush2.bf16.msra.mxu0 0
    %2076 = vmatprep.subr.bf16.mxu0 0
    %2077 = vmatpush2.bf16.msra.mxu0 0
    %2078 = vmatprep.subr.bf16.mxu0 0
    %2079 = vmatpush2.bf16.msra.mxu0 0
    %2080 = vmatprep.subr.bf16.mxu0 0
    %2081 = vmatpush2.bf16.msra.mxu0 0
    %2082 = vmatprep.mubr.bf16.mxu0 0
    %2083 = vmatmul.mubr.bf16.gmra.mxu0 %v2045
    %v2084 = vpop.f32.mrf.mxu0
    %v2085 = vadd.f32 0.0, %v2084
    %v2086 = vpop.f32.mrf.mxu0
    %v2087 = vpop.f32.mrf.mxu0
    %v2088 = vpop.f32.mrf.mxu0
    %2089 = vdwg.mxu0
    %v2090 = vmul.f32 %v2039, %v1994
    %v2091 = vmul.f32 %v2085, %v1995
    %v2092 = vpack.c.bf16 %v2090, %v2090
    %v2093 = vpack.c.bf16 %v2091, %v2091
    %v2095 = vunpack.c.l.b16 %v1878
    %v2096 = vpack.c.b16 %v2095, %v2095
    %2097 = vrot.lane.b32.xlu0 %v2096, 64
    %v2098 = vpop.permute.xlu0 %2097
    %v2100 = vunpack.c.l.b16 %v1880
    %v2101 = vpack.c.b16 %v2100, %v2100
    %2102 = vrot.lane.b32.xlu0 %v2101, 64
    %v2103 = vpop.permute.xlu0 %2102
    %v2105 = vsel %vm937, %v2098, 0
    %v2108 = vsel %vm937, %v2103, 0
    %2110 = vmatprep.subr.bf16.mxu0 0
    %2111 = vmatpush1.bf16.xpose.msra.mxu0 0
    %2112 = vmatprep.subr.bf16.mxu0 0
    %2113 = vmatpush1.bf16.xpose.msra.mxu0 0
    %2114 = vmatprep.subr.bf16.mxu0 0
    %2115 = vmatpush1.bf16.xpose.msra.mxu0 0
    %2116 = vmatprep.subr.bf16.mxu0 0
    %2117 = vmatpush1.bf16.xpose.msra.mxu0 0
    %2118 = vmatprep.subr.bf16.mxu0 0
    %2119 = vmatpush1.bf16.xpose.msra.mxu0 0
    %2120 = vmatprep.subr.bf16.mxu0 0
    %2121 = vmatpush1.bf16.xpose.msra.mxu0 0
    %2122 = vmatprep.subr.bf16.mxu0 0
    %2123 = vmatpush1.bf16.xpose.msra.mxu0 0
    %2124 = vmatprep.subr.bf16.mxu0 0
    %2125 = vmatpush1.bf16.xpose.msra.mxu0 %v2108
    %2126 = vmatprep.subr.bf16.mxu0 0
    %2127 = vmatpush2.bf16.xpose.msra.mxu0 0
    %2128 = vmatprep.subr.bf16.mxu0 0
    %2129 = vmatpush2.bf16.xpose.msra.mxu0 0
    %2130 = vmatprep.subr.bf16.mxu0 0
    %2131 = vmatpush2.bf16.xpose.msra.mxu0 0
    %2132 = vmatprep.subr.bf16.mxu0 0
    %2133 = vmatpush2.bf16.xpose.msra.mxu0 0
    %2134 = vmatprep.subr.bf16.mxu0 0
    %2135 = vmatpush2.bf16.xpose.msra.mxu0 0
    %2136 = vmatprep.subr.bf16.mxu0 0
    %2137 = vmatpush2.bf16.xpose.msra.mxu0 0
    %2138 = vmatprep.subr.bf16.mxu0 0
    %2139 = vmatpush2.bf16.xpose.msra.mxu0 0
    %2140 = vmatprep.subr.bf16.mxu0 0
    %2141 = vmatpush2.bf16.xpose.msra.mxu0 0
    %2142 = vmatprep.mubr.bf16.mxu0 0
    %2143 = vmatmul.mubr.bf16.gmra.mxu0 %v2105
    %v2144 = vpop.f32.mrf.mxu0
    %v2145 = vadd.f32 %v56, %v2144
    %v2146 = vpop.f32.mrf.mxu0
    %v2147 = vpop.f32.mrf.mxu0
    %v2148 = vpop.f32.mrf.mxu0
    %2149 = vdwg.mxu0
    %v2151 = vunpack.c.l.b16 %v1879
    %v2152 = vpack.c.b16 %v2151, %v2151
    %2153 = vrot.lane.b32.xlu0 %v2152, 64
    %v2154 = vpop.permute.xlu0 %2153
    %v2156 = vunpack.c.l.b16 %v1881
    %v2157 = vpack.c.b16 %v2156, %v2156
    %2158 = vrot.lane.b32.xlu0 %v2157, 64
    %v2159 = vpop.permute.xlu0 %2158
    %v2161 = vsel %vm937, %v2154, 0
    %v2164 = vsel %vm937, %v2159, 0
    %2166 = vmatprep.subr.bf16.mxu0 0
    %2167 = vmatpush1.bf16.xpose.msra.mxu0 0
    %2168 = vmatprep.subr.bf16.mxu0 0
    %2169 = vmatpush1.bf16.xpose.msra.mxu0 0
    %2170 = vmatprep.subr.bf16.mxu0 0
    %2171 = vmatpush1.bf16.xpose.msra.mxu0 0
    %2172 = vmatprep.subr.bf16.mxu0 0
    %2173 = vmatpush1.bf16.xpose.msra.mxu0 0
    %2174 = vmatprep.subr.bf16.mxu0 0
    %2175 = vmatpush1.bf16.xpose.msra.mxu0 0
    %2176 = vmatprep.subr.bf16.mxu0 0
    %2177 = vmatpush1.bf16.xpose.msra.mxu0 0
    %2178 = vmatprep.subr.bf16.mxu0 0
    %2179 = vmatpush1.bf16.xpose.msra.mxu0 0
    %2180 = vmatprep.subr.bf16.mxu0 0
    %2181 = vmatpush1.bf16.xpose.msra.mxu0 %v2164
    %2182 = vmatprep.subr.bf16.mxu0 0
    %2183 = vmatpush2.bf16.xpose.msra.mxu0 0
    %2184 = vmatprep.subr.bf16.mxu0 0
    %2185 = vmatpush2.bf16.xpose.msra.mxu0 0
    %2186 = vmatprep.subr.bf16.mxu0 0
    %2187 = vmatpush2.bf16.xpose.msra.mxu0 0
    %2188 = vmatprep.subr.bf16.mxu0 0
    %2189 = vmatpush2.bf16.xpose.msra.mxu0 0
    %2190 = vmatprep.subr.bf16.mxu0 0
    %2191 = vmatpush2.bf16.xpose.msra.mxu0 0
    %2192 = vmatprep.subr.bf16.mxu0 0
    %2193 = vmatpush2.bf16.xpose.msra.mxu0 0
    %2194 = vmatprep.subr.bf16.mxu0 0
    %2195 = vmatpush2.bf16.xpose.msra.mxu0 0
    %2196 = vmatprep.subr.bf16.mxu0 0
    %2197 = vmatpush2.bf16.xpose.msra.mxu0 0
    %2198 = vmatprep.mubr.bf16.mxu0 0
    %2199 = vmatmul.mubr.bf16.gmra.mxu0 %v2161
    %v2200 = vpop.f32.mrf.mxu0
    %v2201 = vadd.f32 %v60, %v2200
    %v2202 = vpop.f32.mrf.mxu0
    %v2203 = vpop.f32.mrf.mxu0
    %v2204 = vpop.f32.mrf.mxu0
    %2205 = vdwg.mxu0
    %v2206 = vsel %vm1030, %v2145, -inf
    %2207 = vmax.xlane.f32.xlu0 %v2206
    %v2208 = vpop.xlane.xlu0 %2207
    %v2209 = vsel %vm1030, %v2201, -inf
    %2210 = vmax.xlane.f32.xlu0 %v2209
    %v2211 = vpop.xlane.xlu0 %2210
    %v2212 = vsub.f32 %v2145, %v2208
    %v2213 = vsub.f32 %v2201, %v2211
    %v2214 = vmul.f32 %v2212, 1.442695
    %v2215 = vpow.pop %v2214
    %v2216 = vmul.f32 %v2213, 1.442695
    %v2217 = vpow.pop %v2216
    %v2218 = vsel %vm1030, %v2215, 0.0
    %2219 = vadd.xlane.f32.xlu0 %v2218
    %v2220 = vpop.xlane.xlu0 %2219
    %v2221 = vsel %vm1030, %v2217, 0.0
    %2222 = vadd.xlane.f32.xlu0 %v2221
    %v2223 = vpop.xlane.xlu0 %2222
    %v2224 = vrcp.pop %v2220
    %v2225 = vrcp.pop %v2223
    %v2226 = vpack.c.bf16 %v2215, %v2215
    %v2227 = vpack.c.bf16 %v2217, %v2217
    %v2229 = vunpack.c.l.b16 %v1882
    %v2230 = vpack.c.b16 %v2229, %v2229
    %2231 = vrot.lane.b32.xlu0 %v2230, 64
    %v2232 = vpop.permute.xlu0 %2231
    %v2234 = vsel %vm1030, %v2226, 0
    %v2237 = vsel %vm1056, %v2232, 0
    %2239 = vmatprep.subr.bf16.mxu0 0
    %2240 = vmatpush1.bf16.msra.mxu0 0
    %2241 = vmatprep.subr.bf16.mxu0 0
    %2242 = vmatpush1.bf16.msra.mxu0 0
    %2243 = vmatprep.subr.bf16.mxu0 0
    %2244 = vmatpush1.bf16.msra.mxu0 0
    %2245 = vmatprep.subr.bf16.mxu0 0
    %2246 = vmatpush1.bf16.msra.mxu0 0
    %2247 = vmatprep.subr.bf16.mxu0 0
    %2248 = vmatpush1.bf16.msra.mxu0 0
    %2249 = vmatprep.subr.bf16.mxu0 0
    %2250 = vmatpush1.bf16.msra.mxu0 0
    %2251 = vmatprep.subr.bf16.mxu0 0
    %2252 = vmatpush1.bf16.msra.mxu0 0
    %2253 = vmatprep.subr.bf16.mxu0 0
    %2254 = vmatpush1.bf16.msra.mxu0 %v2237
    %2255 = vmatprep.subr.bf16.mxu0 0
    %2256 = vmatpush2.bf16.msra.mxu0 0
    %2257 = vmatprep.subr.bf16.mxu0 0
    %2258 = vmatpush2.bf16.msra.mxu0 0
    %2259 = vmatprep.subr.bf16.mxu0 0
    %2260 = vmatpush2.bf16.msra.mxu0 0
    %2261 = vmatprep.subr.bf16.mxu0 0
    %2262 = vmatpush2.bf16.msra.mxu0 0
    %2263 = vmatprep.subr.bf16.mxu0 0
    %2264 = vmatpush2.bf16.msra.mxu0 0
    %2265 = vmatprep.subr.bf16.mxu0 0
    %2266 = vmatpush2.bf16.msra.mxu0 0
    %2267 = vmatprep.subr.bf16.mxu0 0
    %2268 = vmatpush2.bf16.msra.mxu0 0
    %2269 = vmatprep.subr.bf16.mxu0 0
    %2270 = vmatpush2.bf16.msra.mxu0 0
    %2271 = vmatprep.mubr.bf16.mxu0 0
    %2272 = vmatmul.mubr.bf16.gmra.mxu0 %v2234
    %v2273 = vpop.f32.mrf.mxu0
    %v2274 = vadd.f32 0.0, %v2273
    %v2275 = vpop.f32.mrf.mxu0
    %v2276 = vpop.f32.mrf.mxu0
    %v2277 = vpop.f32.mrf.mxu0
    %2278 = vdwg.mxu0
    %v2280 = vunpack.c.l.b16 %v1883
    %v2281 = vpack.c.b16 %v2280, %v2280
    %2282 = vrot.lane.b32.xlu0 %v2281, 64
    %v2283 = vpop.permute.xlu0 %2282
    %v2285 = vsel %vm1030, %v2227, 0
    %v2288 = vsel %vm1056, %v2283, 0
    %2290 = vmatprep.subr.bf16.mxu0 0
    %2291 = vmatpush1.bf16.msra.mxu0 0
    %2292 = vmatprep.subr.bf16.mxu0 0
    %2293 = vmatpush1.bf16.msra.mxu0 0
    %2294 = vmatprep.subr.bf16.mxu0 0
    %2295 = vmatpush1.bf16.msra.mxu0 0
    %2296 = vmatprep.subr.bf16.mxu0 0
    %2297 = vmatpush1.bf16.msra.mxu0 0
    %2298 = vmatprep.subr.bf16.mxu0 0
    %2299 = vmatpush1.bf16.msra.mxu0 0
    %2300 = vmatprep.subr.bf16.mxu0 0
    %2301 = vmatpush1.bf16.msra.mxu0 0
    %2302 = vmatprep.subr.bf16.mxu0 0
    %2303 = vmatpush1.bf16.msra.mxu0 0
    %2304 = vmatprep.subr.bf16.mxu0 0
    %2305 = vmatpush1.bf16.msra.mxu0 %v2288
    %2306 = vmatprep.subr.bf16.mxu0 0
    %2307 = vmatpush2.bf16.msra.mxu0 0
    %2308 = vmatprep.subr.bf16.mxu0 0
    %2309 = vmatpush2.bf16.msra.mxu0 0
    %2310 = vmatprep.subr.bf16.mxu0 0
    %2311 = vmatpush2.bf16.msra.mxu0 0
    %2312 = vmatprep.subr.bf16.mxu0 0
    %2313 = vmatpush2.bf16.msra.mxu0 0
    %2314 = vmatprep.subr.bf16.mxu0 0
    %2315 = vmatpush2.bf16.msra.mxu0 0
    %2316 = vmatprep.subr.bf16.mxu0 0
    %2317 = vmatpush2.bf16.msra.mxu0 0
    %2318 = vmatprep.subr.bf16.mxu0 0
    %2319 = vmatpush2.bf16.msra.mxu0 0
    %2320 = vmatprep.subr.bf16.mxu0 0
    %2321 = vmatpush2.bf16.msra.mxu0 0
    %2322 = vmatprep.mubr.bf16.mxu0 0
    %2323 = vmatmul.mubr.bf16.gmra.mxu0 %v2285
    %v2324 = vpop.f32.mrf.mxu0
    %v2325 = vadd.f32 0.0, %v2324
    %v2326 = vpop.f32.mrf.mxu0
    %v2327 = vpop.f32.mrf.mxu0
    %v2328 = vpop.f32.mrf.mxu0
    %2329 = vdwg.mxu0
    %v2330 = vmul.f32 %v2274, %v2224
    %v2331 = vmul.f32 %v2325, %v2225
    %v2332 = vpack.c.bf16 %v2330, %v2330
    %v2333 = vpack.c.bf16 %v2331, %v2331
    %2336 = vrot.lane.b32.xlu0 %v2332, 64
    %v2337 = vpop.permute.xlu0 %2336
    %2338 = vrot.lane.b32.xlu0 %v2333, 64
    %v2339 = vpop.permute.xlu0 %2338
    %v2342 = vsel %vm937, %v2092, %v2337
    %v2346 = vsel %vm937, %v2093, %v2339
    %2348 = vst [vmem:[#allocation5 + $0x8] sm:$0xf] %v2342
    %2349 = vst [vmem:[#allocation5 + $0x20] sm:$0xf] %v2346
    %v2350 = vld [vmem:[#allocation2 + $0xc] sm:$0xf]
    %v2351 = vld [vmem:[#allocation2 + $0x24] sm:$0xf]
    %v2352 = vld [vmem:[#allocation3 + $0xc] sm:$0xf]
    %v2353 = vld [vmem:[#allocation3 + $0x24] sm:$0xf]
    %v2354 = vld [vmem:[#allocation4 + $0xc] sm:$0xf]
    %v2355 = vld [vmem:[#allocation4 + $0x24] sm:$0xf]
    %v2357 = vsel %vm937, %v2350, 0
    %v2360 = vsel %vm937, %v2352, 0
    %2362 = vmatprep.subr.bf16.mxu0 0
    %2363 = vmatpush1.bf16.xpose.msra.mxu0 0
    %2364 = vmatprep.subr.bf16.mxu0 0
    %2365 = vmatpush1.bf16.xpose.msra.mxu0 0
    %2366 = vmatprep.subr.bf16.mxu0 0
    %2367 = vmatpush1.bf16.xpose.msra.mxu0 0
    %2368 = vmatprep.subr.bf16.mxu0 0
    %2369 = vmatpush1.bf16.xpose.msra.mxu0 0
    %2370 = vmatprep.subr.bf16.mxu0 0
    %2371 = vmatpush1.bf16.xpose.msra.mxu0 0
    %2372 = vmatprep.subr.bf16.mxu0 0
    %2373 = vmatpush1.bf16.xpose.msra.mxu0 0
    %2374 = vmatprep.subr.bf16.mxu0 0
    %2375 = vmatpush1.bf16.xpose.msra.mxu0 0
    %2376 = vmatprep.subr.bf16.mxu0 0
    %2377 = vmatpush1.bf16.xpose.msra.mxu0 %v2360
    %2378 = vmatprep.subr.bf16.mxu0 0
    %2379 = vmatpush2.bf16.xpose.msra.mxu0 0
    %2380 = vmatprep.subr.bf16.mxu0 0
    %2381 = vmatpush2.bf16.xpose.msra.mxu0 0
    %2382 = vmatprep.subr.bf16.mxu0 0
    %2383 = vmatpush2.bf16.xpose.msra.mxu0 0
    %2384 = vmatprep.subr.bf16.mxu0 0
    %2385 = vmatpush2.bf16.xpose.msra.mxu0 0
    %2386 = vmatprep.subr.bf16.mxu0 0
    %2387 = vmatpush2.bf16.xpose.msra.mxu0 0
    %2388 = vmatprep.subr.bf16.mxu0 0
    %2389 = vmatpush2.bf16.xpose.msra.mxu0 0
    %2390 = vmatprep.subr.bf16.mxu0 0
    %2391 = vmatpush2.bf16.xpose.msra.mxu0 0
    %2392 = vmatprep.subr.bf16.mxu0 0
    %2393 = vmatpush2.bf16.xpose.msra.mxu0 0
    %2394 = vmatprep.mubr.bf16.mxu0 0
    %2395 = vmatmul.mubr.bf16.gmra.mxu0 %v2357
    %v2396 = vpop.f32.mrf.mxu0
    %v2397 = vadd.f32 %v56, %v2396
    %v2398 = vpop.f32.mrf.mxu0
    %v2399 = vpop.f32.mrf.mxu0
    %v2400 = vpop.f32.mrf.mxu0
    %2401 = vdwg.mxu0
    %v2403 = vsel %vm937, %v2351, 0
    %v2406 = vsel %vm937, %v2353, 0
    %2408 = vmatprep.subr.bf16.mxu0 0
    %2409 = vmatpush1.bf16.xpose.msra.mxu0 0
    %2410 = vmatprep.subr.bf16.mxu0 0
    %2411 = vmatpush1.bf16.xpose.msra.mxu0 0
    %2412 = vmatprep.subr.bf16.mxu0 0
    %2413 = vmatpush1.bf16.xpose.msra.mxu0 0
    %2414 = vmatprep.subr.bf16.mxu0 0
    %2415 = vmatpush1.bf16.xpose.msra.mxu0 0
    %2416 = vmatprep.subr.bf16.mxu0 0
    %2417 = vmatpush1.bf16.xpose.msra.mxu0 0
    %2418 = vmatprep.subr.bf16.mxu0 0
    %2419 = vmatpush1.bf16.xpose.msra.mxu0 0
    %2420 = vmatprep.subr.bf16.mxu0 0
    %2421 = vmatpush1.bf16.xpose.msra.mxu0 0
    %2422 = vmatprep.subr.bf16.mxu0 0
    %2423 = vmatpush1.bf16.xpose.msra.mxu0 %v2406
    %2424 = vmatprep.subr.bf16.mxu0 0
    %2425 = vmatpush2.bf16.xpose.msra.mxu0 0
    %2426 = vmatprep.subr.bf16.mxu0 0
    %2427 = vmatpush2.bf16.xpose.msra.mxu0 0
    %2428 = vmatprep.subr.bf16.mxu0 0
    %2429 = vmatpush2.bf16.xpose.msra.mxu0 0
    %2430 = vmatprep.subr.bf16.mxu0 0
    %2431 = vmatpush2.bf16.xpose.msra.mxu0 0
    %2432 = vmatprep.subr.bf16.mxu0 0
    %2433 = vmatpush2.bf16.xpose.msra.mxu0 0
    %2434 = vmatprep.subr.bf16.mxu0 0
    %2435 = vmatpush2.bf16.xpose.msra.mxu0 0
    %2436 = vmatprep.subr.bf16.mxu0 0
    %2437 = vmatpush2.bf16.xpose.msra.mxu0 0
    %2438 = vmatprep.subr.bf16.mxu0 0
    %2439 = vmatpush2.bf16.xpose.msra.mxu0 0
    %2440 = vmatprep.mubr.bf16.mxu0 0
    %2441 = vmatmul.mubr.bf16.gmra.mxu0 %v2403
    %v2442 = vpop.f32.mrf.mxu0
    %v2443 = vadd.f32 %v60, %v2442
    %v2444 = vpop.f32.mrf.mxu0
    %v2445 = vpop.f32.mrf.mxu0
    %v2446 = vpop.f32.mrf.mxu0
    %2447 = vdwg.mxu0
    %v2448 = vsel %vm1030, %v2397, -inf
    %2449 = vmax.xlane.f32.xlu0 %v2448
    %v2450 = vpop.xlane.xlu0 %2449
    %v2451 = vsel %vm1030, %v2443, -inf
    %2452 = vmax.xlane.f32.xlu0 %v2451
    %v2453 = vpop.xlane.xlu0 %2452
    %v2454 = vsub.f32 %v2397, %v2450
    %v2455 = vsub.f32 %v2443, %v2453
    %v2456 = vmul.f32 %v2454, 1.442695
    %v2457 = vpow.pop %v2456
    %v2458 = vmul.f32 %v2455, 1.442695
    %v2459 = vpow.pop %v2458
    %v2460 = vsel %vm1030, %v2457, 0.0
    %2461 = vadd.xlane.f32.xlu0 %v2460
    %v2462 = vpop.xlane.xlu0 %2461
    %v2463 = vsel %vm1030, %v2459, 0.0
    %2464 = vadd.xlane.f32.xlu0 %v2463
    %v2465 = vpop.xlane.xlu0 %2464
    %v2466 = vrcp.pop %v2462
    %v2467 = vrcp.pop %v2465
    %v2468 = vpack.c.bf16 %v2457, %v2457
    %v2469 = vpack.c.bf16 %v2459, %v2459
    %v2471 = vsel %vm1030, %v2468, 0
    %v2474 = vsel %vm1056, %v2354, 0
    %2476 = vmatprep.subr.bf16.mxu0 0
    %2477 = vmatpush1.bf16.msra.mxu0 0
    %2478 = vmatprep.subr.bf16.mxu0 0
    %2479 = vmatpush1.bf16.msra.mxu0 0
    %2480 = vmatprep.subr.bf16.mxu0 0
    %2481 = vmatpush1.bf16.msra.mxu0 0
    %2482 = vmatprep.subr.bf16.mxu0 0
    %2483 = vmatpush1.bf16.msra.mxu0 0
    %2484 = vmatprep.subr.bf16.mxu0 0
    %2485 = vmatpush1.bf16.msra.mxu0 0
    %2486 = vmatprep.subr.bf16.mxu0 0
    %2487 = vmatpush1.bf16.msra.mxu0 0
    %2488 = vmatprep.subr.bf16.mxu0 0
    %2489 = vmatpush1.bf16.msra.mxu0 0
    %2490 = vmatprep.subr.bf16.mxu0 0
    %2491 = vmatpush1.bf16.msra.mxu0 %v2474
    %2492 = vmatprep.subr.bf16.mxu0 0
    %2493 = vmatpush2.bf16.msra.mxu0 0
    %2494 = vmatprep.subr.bf16.mxu0 0
    %2495 = vmatpush2.bf16.msra.mxu0 0
    %2496 = vmatprep.subr.bf16.mxu0 0
    %2497 = vmatpush2.bf16.msra.mxu0 0
    %2498 = vmatprep.subr.bf16.mxu0 0
    %2499 = vmatpush2.bf16.msra.mxu0 0
    %2500 = vmatprep.subr.bf16.mxu0 0
    %2501 = vmatpush2.bf16.msra.mxu0 0
    %2502 = vmatprep.subr.bf16.mxu0 0
    %2503 = vmatpush2.bf16.msra.mxu0 0
    %2504 = vmatprep.subr.bf16.mxu0 0
    %2505 = vmatpush2.bf16.msra.mxu0 0
    %2506 = vmatprep.subr.bf16.mxu0 0
    %2507 = vmatpush2.bf16.msra.mxu0 0
    %2508 = vmatprep.mubr.bf16.mxu0 0
    %2509 = vmatmul.mubr.bf16.gmra.mxu0 %v2471
    %v2510 = vpop.f32.mrf.mxu0
    %v2511 = vadd.f32 0.0, %v2510
    %v2512 = vpop.f32.mrf.mxu0
    %v2513 = vpop.f32.mrf.mxu0
    %v2514 = vpop.f32.mrf.mxu0
    %2515 = vdwg.mxu0
    %v2517 = vsel %vm1030, %v2469, 0
    %v2520 = vsel %vm1056, %v2355, 0
    %2522 = vmatprep.subr.bf16.mxu0 0
    %2523 = vmatpush1.bf16.msra.mxu0 0
    %2524 = vmatprep.subr.bf16.mxu0 0
    %2525 = vmatpush1.bf16.msra.mxu0 0
    %2526 = vmatprep.subr.bf16.mxu0 0
    %2527 = vmatpush1.bf16.msra.mxu0 0
    %2528 = vmatprep.subr.bf16.mxu0 0
    %2529 = vmatpush1.bf16.msra.mxu0 0
    %2530 = vmatprep.subr.bf16.mxu0 0
    %2531 = vmatpush1.bf16.msra.mxu0 0
    %2532 = vmatprep.subr.bf16.mxu0 0
    %2533 = vmatpush1.bf16.msra.mxu0 0
    %2534 = vmatprep.subr.bf16.mxu0 0
    %2535 = vmatpush1.bf16.msra.mxu0 0
    %2536 = vmatprep.subr.bf16.mxu0 0
    %2537 = vmatpush1.bf16.msra.mxu0 %v2520
    %2538 = vmatprep.subr.bf16.mxu0 0
    %2539 = vmatpush2.bf16.msra.mxu0 0
    %2540 = vmatprep.subr.bf16.mxu0 0
    %2541 = vmatpush2.bf16.msra.mxu0 0
    %2542 = vmatprep.subr.bf16.mxu0 0
    %2543 = vmatpush2.bf16.msra.mxu0 0
    %2544 = vmatprep.subr.bf16.mxu0 0
    %2545 = vmatpush2.bf16.msra.mxu0 0
    %2546 = vmatprep.subr.bf16.mxu0 0
    %2547 = vmatpush2.bf16.msra.mxu0 0
    %2548 = vmatprep.subr.bf16.mxu0 0
    %2549 = vmatpush2.bf16.msra.mxu0 0
    %2550 = vmatprep.subr.bf16.mxu0 0
    %2551 = vmatpush2.bf16.msra.mxu0 0
    %2552 = vmatprep.subr.bf16.mxu0 0
    %2553 = vmatpush2.bf16.msra.mxu0 0
    %2554 = vmatprep.mubr.bf16.mxu0 0
    %2555 = vmatmul.mubr.bf16.gmra.mxu0 %v2517
    %v2556 = vpop.f32.mrf.mxu0
    %v2557 = vadd.f32 0.0, %v2556
    %v2558 = vpop.f32.mrf.mxu0
    %v2559 = vpop.f32.mrf.mxu0
    %v2560 = vpop.f32.mrf.mxu0
    %2561 = vdwg.mxu0
    %v2562 = vmul.f32 %v2511, %v2466
    %v2563 = vmul.f32 %v2557, %v2467
    %v2564 = vpack.c.bf16 %v2562, %v2562
    %v2565 = vpack.c.bf16 %v2563, %v2563
    %v2567 = vunpack.c.l.b16 %v2350
    %v2568 = vpack.c.b16 %v2567, %v2567
    %2569 = vrot.lane.b32.xlu0 %v2568, 64
    %v2570 = vpop.permute.xlu0 %2569
    %v2572 = vunpack.c.l.b16 %v2352
    %v2573 = vpack.c.b16 %v2572, %v2572
    %2574 = vrot.lane.b32.xlu0 %v2573, 64
    %v2575 = vpop.permute.xlu0 %2574
    %v2577 = vsel %vm937, %v2570, 0
    %v2580 = vsel %vm937, %v2575, 0
    %2582 = vmatprep.subr.bf16.mxu0 0
    %2583 = vmatpush1.bf16.xpose.msra.mxu0 0
    %2584 = vmatprep.subr.bf16.mxu0 0
    %2585 = vmatpush1.bf16.xpose.msra.mxu0 0
    %2586 = vmatprep.subr.bf16.mxu0 0
    %2587 = vmatpush1.bf16.xpose.msra.mxu0 0
    %2588 = vmatprep.subr.bf16.mxu0 0
    %2589 = vmatpush1.bf16.xpose.msra.mxu0 0
    %2590 = vmatprep.subr.bf16.mxu0 0
    %2591 = vmatpush1.bf16.xpose.msra.mxu0 0
    %2592 = vmatprep.subr.bf16.mxu0 0
    %2593 = vmatpush1.bf16.xpose.msra.mxu0 0
    %2594 = vmatprep.subr.bf16.mxu0 0
    %2595 = vmatpush1.bf16.xpose.msra.mxu0 0
    %2596 = vmatprep.subr.bf16.mxu0 0
    %2597 = vmatpush1.bf16.xpose.msra.mxu0 %v2580
    %2598 = vmatprep.subr.bf16.mxu0 0
    %2599 = vmatpush2.bf16.xpose.msra.mxu0 0
    %2600 = vmatprep.subr.bf16.mxu0 0
    %2601 = vmatpush2.bf16.xpose.msra.mxu0 0
    %2602 = vmatprep.subr.bf16.mxu0 0
    %2603 = vmatpush2.bf16.xpose.msra.mxu0 0
    %2604 = vmatprep.subr.bf16.mxu0 0
    %2605 = vmatpush2.bf16.xpose.msra.mxu0 0
    %2606 = vmatprep.subr.bf16.mxu0 0
    %2607 = vmatpush2.bf16.xpose.msra.mxu0 0
    %2608 = vmatprep.subr.bf16.mxu0 0
    %2609 = vmatpush2.bf16.xpose.msra.mxu0 0
    %2610 = vmatprep.subr.bf16.mxu0 0
    %2611 = vmatpush2.bf16.xpose.msra.mxu0 0
    %2612 = vmatprep.subr.bf16.mxu0 0
    %2613 = vmatpush2.bf16.xpose.msra.mxu0 0
    %2614 = vmatprep.mubr.bf16.mxu0 0
    %2615 = vmatmul.mubr.bf16.gmra.mxu0 %v2577
    %v2616 = vpop.f32.mrf.mxu0
    %v2617 = vadd.f32 %v56, %v2616
    %v2618 = vpop.f32.mrf.mxu0
    %v2619 = vpop.f32.mrf.mxu0
    %v2620 = vpop.f32.mrf.mxu0
    %2621 = vdwg.mxu0
    %v2623 = vunpack.c.l.b16 %v2351
    %v2624 = vpack.c.b16 %v2623, %v2623
    %2625 = vrot.lane.b32.xlu0 %v2624, 64
    %v2626 = vpop.permute.xlu0 %2625
    %v2628 = vunpack.c.l.b16 %v2353
    %v2629 = vpack.c.b16 %v2628, %v2628
    %2630 = vrot.lane.b32.xlu0 %v2629, 64
    %v2631 = vpop.permute.xlu0 %2630
    %v2633 = vsel %vm937, %v2626, 0
    %v2636 = vsel %vm937, %v2631, 0
    %2638 = vmatprep.subr.bf16.mxu0 0
    %2639 = vmatpush1.bf16.xpose.msra.mxu0 0
    %2640 = vmatprep.subr.bf16.mxu0 0
    %2641 = vmatpush1.bf16.xpose.msra.mxu0 0
    %2642 = vmatprep.subr.bf16.mxu0 0
    %2643 = vmatpush1.bf16.xpose.msra.mxu0 0
    %2644 = vmatprep.subr.bf16.mxu0 0
    %2645 = vmatpush1.bf16.xpose.msra.mxu0 0
    %2646 = vmatprep.subr.bf16.mxu0 0
    %2647 = vmatpush1.bf16.xpose.msra.mxu0 0
    %2648 = vmatprep.subr.bf16.mxu0 0
    %2649 = vmatpush1.bf16.xpose.msra.mxu0 0
    %2650 = vmatprep.subr.bf16.mxu0 0
    %2651 = vmatpush1.bf16.xpose.msra.mxu0 0
    %2652 = vmatprep.subr.bf16.mxu0 0
    %2653 = vmatpush1.bf16.xpose.msra.mxu0 %v2636
    %2654 = vmatprep.subr.bf16.mxu0 0
    %2655 = vmatpush2.bf16.xpose.msra.mxu0 0
    %2656 = vmatprep.subr.bf16.mxu0 0
    %2657 = vmatpush2.bf16.xpose.msra.mxu0 0
    %2658 = vmatprep.subr.bf16.mxu0 0
    %2659 = vmatpush2.bf16.xpose.msra.mxu0 0
    %2660 = vmatprep.subr.bf16.mxu0 0
    %2661 = vmatpush2.bf16.xpose.msra.mxu0 0
    %2662 = vmatprep.subr.bf16.mxu0 0
    %2663 = vmatpush2.bf16.xpose.msra.mxu0 0
    %2664 = vmatprep.subr.bf16.mxu0 0
    %2665 = vmatpush2.bf16.xpose.msra.mxu0 0
    %2666 = vmatprep.subr.bf16.mxu0 0
    %2667 = vmatpush2.bf16.xpose.msra.mxu0 0
    %2668 = vmatprep.subr.bf16.mxu0 0
    %2669 = vmatpush2.bf16.xpose.msra.mxu0 0
    %2670 = vmatprep.mubr.bf16.mxu0 0
    %2671 = vmatmul.mubr.bf16.gmra.mxu0 %v2633
    %v2672 = vpop.f32.mrf.mxu0
    %v2673 = vadd.f32 %v60, %v2672
    %v2674 = vpop.f32.mrf.mxu0
    %v2675 = vpop.f32.mrf.mxu0
    %v2676 = vpop.f32.mrf.mxu0
    %2677 = vdwg.mxu0
    %v2678 = vsel %vm1030, %v2617, -inf
    %2679 = vmax.xlane.f32.xlu0 %v2678
    %v2680 = vpop.xlane.xlu0 %2679
    %v2681 = vsel %vm1030, %v2673, -inf
    %2682 = vmax.xlane.f32.xlu0 %v2681
    %v2683 = vpop.xlane.xlu0 %2682
    %v2684 = vsub.f32 %v2617, %v2680
    %v2685 = vsub.f32 %v2673, %v2683
    %v2686 = vmul.f32 %v2684, 1.442695
    %v2687 = vpow.pop %v2686
    %v2688 = vmul.f32 %v2685, 1.442695
    %v2689 = vpow.pop %v2688
    %v2690 = vsel %vm1030, %v2687, 0.0
    %2691 = vadd.xlane.f32.xlu0 %v2690
    %v2692 = vpop.xlane.xlu0 %2691
    %v2693 = vsel %vm1030, %v2689, 0.0
    %2694 = vadd.xlane.f32.xlu0 %v2693
    %v2695 = vpop.xlane.xlu0 %2694
    %v2696 = vrcp.pop %v2692
    %v2697 = vrcp.pop %v2695
    %v2698 = vpack.c.bf16 %v2687, %v2687
    %v2699 = vpack.c.bf16 %v2689, %v2689
    %v2701 = vunpack.c.l.b16 %v2354
    %v2702 = vpack.c.b16 %v2701, %v2701
    %2703 = vrot.lane.b32.xlu0 %v2702, 64
    %v2704 = vpop.permute.xlu0 %2703
    %v2706 = vsel %vm1030, %v2698, 0
    %v2709 = vsel %vm1056, %v2704, 0
    %2711 = vmatprep.subr.bf16.mxu0 0
    %2712 = vmatpush1.bf16.msra.mxu0 0
    %2713 = vmatprep.subr.bf16.mxu0 0
    %2714 = vmatpush1.bf16.msra.mxu0 0
    %2715 = vmatprep.subr.bf16.mxu0 0
    %2716 = vmatpush1.bf16.msra.mxu0 0
    %2717 = vmatprep.subr.bf16.mxu0 0
    %2718 = vmatpush1.bf16.msra.mxu0 0
    %2719 = vmatprep.subr.bf16.mxu0 0
    %2720 = vmatpush1.bf16.msra.mxu0 0
    %2721 = vmatprep.subr.bf16.mxu0 0
    %2722 = vmatpush1.bf16.msra.mxu0 0
    %2723 = vmatprep.subr.bf16.mxu0 0
    %2724 = vmatpush1.bf16.msra.mxu0 0
    %2725 = vmatprep.subr.bf16.mxu0 0
    %2726 = vmatpush1.bf16.msra.mxu0 %v2709
    %2727 = vmatprep.subr.bf16.mxu0 0
    %2728 = vmatpush2.bf16.msra.mxu0 0
    %2729 = vmatprep.subr.bf16.mxu0 0
    %2730 = vmatpush2.bf16.msra.mxu0 0
    %2731 = vmatprep.subr.bf16.mxu0 0
    %2732 = vmatpush2.bf16.msra.mxu0 0
    %2733 = vmatprep.subr.bf16.mxu0 0
    %2734 = vmatpush2.bf16.msra.mxu0 0
    %2735 = vmatprep.subr.bf16.mxu0 0
    %2736 = vmatpush2.bf16.msra.mxu0 0
    %2737 = vmatprep.subr.bf16.mxu0 0
    %2738 = vmatpush2.bf16.msra.mxu0 0
    %2739 = vmatprep.subr.bf16.mxu0 0
    %2740 = vmatpush2.bf16.msra.mxu0 0
    %2741 = vmatprep.subr.bf16.mxu0 0
    %2742 = vmatpush2.bf16.msra.mxu0 0
    %2743 = vmatprep.mubr.bf16.mxu0 0
    %2744 = vmatmul.mubr.bf16.gmra.mxu0 %v2706
    %v2745 = vpop.f32.mrf.mxu0
    %v2746 = vadd.f32 0.0, %v2745
    %v2747 = vpop.f32.mrf.mxu0
    %v2748 = vpop.f32.mrf.mxu0
    %v2749 = vpop.f32.mrf.mxu0
    %2750 = vdwg.mxu0
    %v2752 = vunpack.c.l.b16 %v2355
    %v2753 = vpack.c.b16 %v2752, %v2752
    %2754 = vrot.lane.b32.xlu0 %v2753, 64
    %v2755 = vpop.permute.xlu0 %2754
    %v2757 = vsel %vm1030, %v2699, 0
    %v2760 = vsel %vm1056, %v2755, 0
    %2762 = vmatprep.subr.bf16.mxu0 0
    %2763 = vmatpush1.bf16.msra.mxu0 0
    %2764 = vmatprep.subr.bf16.mxu0 0
    %2765 = vmatpush1.bf16.msra.mxu0 0
    %2766 = vmatprep.subr.bf16.mxu0 0
    %2767 = vmatpush1.bf16.msra.mxu0 0
    %2768 = vmatprep.subr.bf16.mxu0 0
    %2769 = vmatpush1.bf16.msra.mxu0 0
    %2770 = vmatprep.subr.bf16.mxu0 0
    %2771 = vmatpush1.bf16.msra.mxu0 0
    %2772 = vmatprep.subr.bf16.mxu0 0
    %2773 = vmatpush1.bf16.msra.mxu0 0
    %2774 = vmatprep.subr.bf16.mxu0 0
    %2775 = vmatpush1.bf16.msra.mxu0 0
    %2776 = vmatprep.subr.bf16.mxu0 0
    %2777 = vmatpush1.bf16.msra.mxu0 %v2760
    %2778 = vmatprep.subr.bf16.mxu0 0
    %2779 = vmatpush2.bf16.msra.mxu0 0
    %2780 = vmatprep.subr.bf16.mxu0 0
    %2781 = vmatpush2.bf16.msra.mxu0 0
    %2782 = vmatprep.subr.bf16.mxu0 0
    %2783 = vmatpush2.bf16.msra.mxu0 0
    %2784 = vmatprep.subr.bf16.mxu0 0
    %2785 = vmatpush2.bf16.msra.mxu0 0
    %2786 = vmatprep.subr.bf16.mxu0 0
    %2787 = vmatpush2.bf16.msra.mxu0 0
    %2788 = vmatprep.subr.bf16.mxu0 0
    %2789 = vmatpush2.bf16.msra.mxu0 0
    %2790 = vmatprep.subr.bf16.mxu0 0
    %2791 = vmatpush2.bf16.msra.mxu0 0
    %2792 = vmatprep.subr.bf16.mxu0 0
    %2793 = vmatpush2.bf16.msra.mxu0 0
    %2794 = vmatprep.mubr.bf16.mxu0 0
    %2795 = vmatmul.mubr.bf16.gmra.mxu0 %v2757
    %v2796 = vpop.f32.mrf.mxu0
    %v2797 = vadd.f32 0.0, %v2796
    %v2798 = vpop.f32.mrf.mxu0
    %v2799 = vpop.f32.mrf.mxu0
    %v2800 = vpop.f32.mrf.mxu0
    %2801 = vdwg.mxu0
    %v2802 = vmul.f32 %v2746, %v2696
    %v2803 = vmul.f32 %v2797, %v2697
    %v2804 = vpack.c.bf16 %v2802, %v2802
    %v2805 = vpack.c.bf16 %v2803, %v2803
    %2808 = vrot.lane.b32.xlu0 %v2804, 64
    %v2809 = vpop.permute.xlu0 %2808
    %2810 = vrot.lane.b32.xlu0 %v2805, 64
    %v2811 = vpop.permute.xlu0 %2810
    %v2814 = vsel %vm937, %v2564, %v2809
    %v2818 = vsel %vm937, %v2565, %v2811
    %2820 = vst [vmem:[#allocation5 + $0xc] sm:$0xf] %v2814
    %2821 = vst [vmem:[#allocation5 + $0x24] sm:$0xf] %v2818
    %v2822 = vld [vmem:[#allocation2 + $0x10] sm:$0xf]
    %v2823 = vld [vmem:[#allocation2 + $0x28] sm:$0xf]
    %v2824 = vld [vmem:[#allocation3 + $0x10] sm:$0xf]
    %v2825 = vld [vmem:[#allocation3 + $0x28] sm:$0xf]
    %v2826 = vld [vmem:[#allocation4 + $0x10] sm:$0xf]
    %v2827 = vld [vmem:[#allocation4 + $0x28] sm:$0xf]
    %v2829 = vsel %vm937, %v2822, 0
    %v2832 = vsel %vm937, %v2824, 0
    %2834 = vmatprep.subr.bf16.mxu0 0
    %2835 = vmatpush1.bf16.xpose.msra.mxu0 0
    %2836 = vmatprep.subr.bf16.mxu0 0
    %2837 = vmatpush1.bf16.xpose.msra.mxu0 0
    %2838 = vmatprep.subr.bf16.mxu0 0
    %2839 = vmatpush1.bf16.xpose.msra.mxu0 0
    %2840 = vmatprep.subr.bf16.mxu0 0
    %2841 = vmatpush1.bf16.xpose.msra.mxu0 0
    %2842 = vmatprep.subr.bf16.mxu0 0
    %2843 = vmatpush1.bf16.xpose.msra.mxu0 0
    %2844 = vmatprep.subr.bf16.mxu0 0
    %2845 = vmatpush1.bf16.xpose.msra.mxu0 0
    %2846 = vmatprep.subr.bf16.mxu0 0
    %2847 = vmatpush1.bf16.xpose.msra.mxu0 0
    %2848 = vmatprep.subr.bf16.mxu0 0
    %2849 = vmatpush1.bf16.xpose.msra.mxu0 %v2832
    %2850 = vmatprep.subr.bf16.mxu0 0
    %2851 = vmatpush2.bf16.xpose.msra.mxu0 0
    %2852 = vmatprep.subr.bf16.mxu0 0
    %2853 = vmatpush2.bf16.xpose.msra.mxu0 0
    %2854 = vmatprep.subr.bf16.mxu0 0
    %2855 = vmatpush2.bf16.xpose.msra.mxu0 0
    %2856 = vmatprep.subr.bf16.mxu0 0
    %2857 = vmatpush2.bf16.xpose.msra.mxu0 0
    %2858 = vmatprep.subr.bf16.mxu0 0
    %2859 = vmatpush2.bf16.xpose.msra.mxu0 0
    %2860 = vmatprep.subr.bf16.mxu0 0
    %2861 = vmatpush2.bf16.xpose.msra.mxu0 0
    %2862 = vmatprep.subr.bf16.mxu0 0
    %2863 = vmatpush2.bf16.xpose.msra.mxu0 0
    %2864 = vmatprep.subr.bf16.mxu0 0
    %2865 = vmatpush2.bf16.xpose.msra.mxu0 0
    %2866 = vmatprep.mubr.bf16.mxu0 0
    %2867 = vmatmul.mubr.bf16.gmra.mxu0 %v2829
    %v2868 = vpop.f32.mrf.mxu0
    %v2869 = vadd.f32 %v56, %v2868
    %v2870 = vpop.f32.mrf.mxu0
    %v2871 = vpop.f32.mrf.mxu0
    %v2872 = vpop.f32.mrf.mxu0
    %2873 = vdwg.mxu0
    %v2875 = vsel %vm937, %v2823, 0
    %v2878 = vsel %vm937, %v2825, 0
    %2880 = vmatprep.subr.bf16.mxu0 0
    %2881 = vmatpush1.bf16.xpose.msra.mxu0 0
    %2882 = vmatprep.subr.bf16.mxu0 0
    %2883 = vmatpush1.bf16.xpose.msra.mxu0 0
    %2884 = vmatprep.subr.bf16.mxu0 0
    %2885 = vmatpush1.bf16.xpose.msra.mxu0 0
    %2886 = vmatprep.subr.bf16.mxu0 0
    %2887 = vmatpush1.bf16.xpose.msra.mxu0 0
    %2888 = vmatprep.subr.bf16.mxu0 0
    %2889 = vmatpush1.bf16.xpose.msra.mxu0 0
    %2890 = vmatprep.subr.bf16.mxu0 0
    %2891 = vmatpush1.bf16.xpose.msra.mxu0 0
    %2892 = vmatprep.subr.bf16.mxu0 0
    %2893 = vmatpush1.bf16.xpose.msra.mxu0 0
    %2894 = vmatprep.subr.bf16.mxu0 0
    %2895 = vmatpush1.bf16.xpose.msra.mxu0 %v2878
    %2896 = vmatprep.subr.bf16.mxu0 0
    %2897 = vmatpush2.bf16.xpose.msra.mxu0 0
    %2898 = vmatprep.subr.bf16.mxu0 0
    %2899 = vmatpush2.bf16.xpose.msra.mxu0 0
    %2900 = vmatprep.subr.bf16.mxu0 0
    %2901 = vmatpush2.bf16.xpose.msra.mxu0 0
    %2902 = vmatprep.subr.bf16.mxu0 0
    %2903 = vmatpush2.bf16.xpose.msra.mxu0 0
    %2904 = vmatprep.subr.bf16.mxu0 0
    %2905 = vmatpush2.bf16.xpose.msra.mxu0 0
    %2906 = vmatprep.subr.bf16.mxu0 0
    %2907 = vmatpush2.bf16.xpose.msra.mxu0 0
    %2908 = vmatprep.subr.bf16.mxu0 0
    %2909 = vmatpush2.bf16.xpose.msra.mxu0 0
    %2910 = vmatprep.subr.bf16.mxu0 0
    %2911 = vmatpush2.bf16.xpose.msra.mxu0 0
    %2912 = vmatprep.mubr.bf16.mxu0 0
    %2913 = vmatmul.mubr.bf16.gmra.mxu0 %v2875
    %v2914 = vpop.f32.mrf.mxu0
    %v2915 = vadd.f32 %v60, %v2914
    %v2916 = vpop.f32.mrf.mxu0
    %v2917 = vpop.f32.mrf.mxu0
    %v2918 = vpop.f32.mrf.mxu0
    %2919 = vdwg.mxu0
    %v2920 = vsel %vm1030, %v2869, -inf
    %2921 = vmax.xlane.f32.xlu0 %v2920
    %v2922 = vpop.xlane.xlu0 %2921
    %v2923 = vsel %vm1030, %v2915, -inf
    %2924 = vmax.xlane.f32.xlu0 %v2923
    %v2925 = vpop.xlane.xlu0 %2924
    %v2926 = vsub.f32 %v2869, %v2922
    %v2927 = vsub.f32 %v2915, %v2925
    %v2928 = vmul.f32 %v2926, 1.442695
    %v2929 = vpow.pop %v2928
    %v2930 = vmul.f32 %v2927, 1.442695
    %v2931 = vpow.pop %v2930
    %v2932 = vsel %vm1030, %v2929, 0.0
    %2933 = vadd.xlane.f32.xlu0 %v2932
    %v2934 = vpop.xlane.xlu0 %2933
    %v2935 = vsel %vm1030, %v2931, 0.0
    %2936 = vadd.xlane.f32.xlu0 %v2935
    %v2937 = vpop.xlane.xlu0 %2936
    %v2938 = vrcp.pop %v2934
    %v2939 = vrcp.pop %v2937
    %v2940 = vpack.c.bf16 %v2929, %v2929
    %v2941 = vpack.c.bf16 %v2931, %v2931
    %v2943 = vsel %vm1030, %v2940, 0
    %v2946 = vsel %vm1056, %v2826, 0
    %2948 = vmatprep.subr.bf16.mxu0 0
    %2949 = vmatpush1.bf16.msra.mxu0 0
    %2950 = vmatprep.subr.bf16.mxu0 0
    %2951 = vmatpush1.bf16.msra.mxu0 0
    %2952 = vmatprep.subr.bf16.mxu0 0
    %2953 = vmatpush1.bf16.msra.mxu0 0
    %2954 = vmatprep.subr.bf16.mxu0 0
    %2955 = vmatpush1.bf16.msra.mxu0 0
    %2956 = vmatprep.subr.bf16.mxu0 0
    %2957 = vmatpush1.bf16.msra.mxu0 0
    %2958 = vmatprep.subr.bf16.mxu0 0
    %2959 = vmatpush1.bf16.msra.mxu0 0
    %2960 = vmatprep.subr.bf16.mxu0 0
    %2961 = vmatpush1.bf16.msra.mxu0 0
    %2962 = vmatprep.subr.bf16.mxu0 0
    %2963 = vmatpush1.bf16.msra.mxu0 %v2946
    %2964 = vmatprep.subr.bf16.mxu0 0
    %2965 = vmatpush2.bf16.msra.mxu0 0
    %2966 = vmatprep.subr.bf16.mxu0 0
    %2967 = vmatpush2.bf16.msra.mxu0 0
    %2968 = vmatprep.subr.bf16.mxu0 0
    %2969 = vmatpush2.bf16.msra.mxu0 0
    %2970 = vmatprep.subr.bf16.mxu0 0
    %2971 = vmatpush2.bf16.msra.mxu0 0
    %2972 = vmatprep.subr.bf16.mxu0 0
    %2973 = vmatpush2.bf16.msra.mxu0 0
    %2974 = vmatprep.subr.bf16.mxu0 0
    %2975 = vmatpush2.bf16.msra.mxu0 0
    %2976 = vmatprep.subr.bf16.mxu0 0
    %2977 = vmatpush2.bf16.msra.mxu0 0
    %2978 = vmatprep.subr.bf16.mxu0 0
    %2979 = vmatpush2.bf16.msra.mxu0 0
    %2980 = vmatprep.mubr.bf16.mxu0 0
    %2981 = vmatmul.mubr.bf16.gmra.mxu0 %v2943
    %v2982 = vpop.f32.mrf.mxu0
    %v2983 = vadd.f32 0.0, %v2982
    %v2984 = vpop.f32.mrf.mxu0
    %v2985 = vpop.f32.mrf.mxu0
    %v2986 = vpop.f32.mrf.mxu0
    %2987 = vdwg.mxu0
    %v2989 = vsel %vm1030, %v2941, 0
    %v2992 = vsel %vm1056, %v2827, 0
    %2994 = vmatprep.subr.bf16.mxu0 0
    %2995 = vmatpush1.bf16.msra.mxu0 0
    %2996 = vmatprep.subr.bf16.mxu0 0
    %2997 = vmatpush1.bf16.msra.mxu0 0
    %2998 = vmatprep.subr.bf16.mxu0 0
    %2999 = vmatpush1.bf16.msra.mxu0 0
    %3000 = vmatprep.subr.bf16.mxu0 0
    %3001 = vmatpush1.bf16.msra.mxu0 0
    %3002 = vmatprep.subr.bf16.mxu0 0
    %3003 = vmatpush1.bf16.msra.mxu0 0
    %3004 = vmatprep.subr.bf16.mxu0 0
    %3005 = vmatpush1.bf16.msra.mxu0 0
    %3006 = vmatprep.subr.bf16.mxu0 0
    %3007 = vmatpush1.bf16.msra.mxu0 0
    %3008 = vmatprep.subr.bf16.mxu0 0
    %3009 = vmatpush1.bf16.msra.mxu0 %v2992
    %3010 = vmatprep.subr.bf16.mxu0 0
    %3011 = vmatpush2.bf16.msra.mxu0 0
    %3012 = vmatprep.subr.bf16.mxu0 0
    %3013 = vmatpush2.bf16.msra.mxu0 0
    %3014 = vmatprep.subr.bf16.mxu0 0
    %3015 = vmatpush2.bf16.msra.mxu0 0
    %3016 = vmatprep.subr.bf16.mxu0 0
    %3017 = vmatpush2.bf16.msra.mxu0 0
    %3018 = vmatprep.subr.bf16.mxu0 0
    %3019 = vmatpush2.bf16.msra.mxu0 0
    %3020 = vmatprep.subr.bf16.mxu0 0
    %3021 = vmatpush2.bf16.msra.mxu0 0
    %3022 = vmatprep.subr.bf16.mxu0 0
    %3023 = vmatpush2.bf16.msra.mxu0 0
    %3024 = vmatprep.subr.bf16.mxu0 0
    %3025 = vmatpush2.bf16.msra.mxu0 0
    %3026 = vmatprep.mubr.bf16.mxu0 0
    %3027 = vmatmul.mubr.bf16.gmra.mxu0 %v2989
    %v3028 = vpop.f32.mrf.mxu0
    %v3029 = vadd.f32 0.0, %v3028
    %v3030 = vpop.f32.mrf.mxu0
    %v3031 = vpop.f32.mrf.mxu0
    %v3032 = vpop.f32.mrf.mxu0
    %3033 = vdwg.mxu0
    %v3034 = vmul.f32 %v2983, %v2938
    %v3035 = vmul.f32 %v3029, %v2939
    %v3036 = vpack.c.bf16 %v3034, %v3034
    %v3037 = vpack.c.bf16 %v3035, %v3035
    %v3039 = vunpack.c.l.b16 %v2822
    %v3040 = vpack.c.b16 %v3039, %v3039
    %3041 = vrot.lane.b32.xlu0 %v3040, 64
    %v3042 = vpop.permute.xlu0 %3041
    %v3044 = vunpack.c.l.b16 %v2824
    %v3045 = vpack.c.b16 %v3044, %v3044
    %3046 = vrot.lane.b32.xlu0 %v3045, 64
    %v3047 = vpop.permute.xlu0 %3046
    %v3049 = vsel %vm937, %v3042, 0
    %v3052 = vsel %vm937, %v3047, 0
    %3054 = vmatprep.subr.bf16.mxu0 0
    %3055 = vmatpush1.bf16.xpose.msra.mxu0 0
    %3056 = vmatprep.subr.bf16.mxu0 0
    %3057 = vmatpush1.bf16.xpose.msra.mxu0 0
    %3058 = vmatprep.subr.bf16.mxu0 0
    %3059 = vmatpush1.bf16.xpose.msra.mxu0 0
    %3060 = vmatprep.subr.bf16.mxu0 0
    %3061 = vmatpush1.bf16.xpose.msra.mxu0 0
    %3062 = vmatprep.subr.bf16.mxu0 0
    %3063 = vmatpush1.bf16.xpose.msra.mxu0 0
    %3064 = vmatprep.subr.bf16.mxu0 0
    %3065 = vmatpush1.bf16.xpose.msra.mxu0 0
    %3066 = vmatprep.subr.bf16.mxu0 0
    %3067 = vmatpush1.bf16.xpose.msra.mxu0 0
    %3068 = vmatprep.subr.bf16.mxu0 0
    %3069 = vmatpush1.bf16.xpose.msra.mxu0 %v3052
    %3070 = vmatprep.subr.bf16.mxu0 0
    %3071 = vmatpush2.bf16.xpose.msra.mxu0 0
    %3072 = vmatprep.subr.bf16.mxu0 0
    %3073 = vmatpush2.bf16.xpose.msra.mxu0 0
    %3074 = vmatprep.subr.bf16.mxu0 0
    %3075 = vmatpush2.bf16.xpose.msra.mxu0 0
    %3076 = vmatprep.subr.bf16.mxu0 0
    %3077 = vmatpush2.bf16.xpose.msra.mxu0 0
    %3078 = vmatprep.subr.bf16.mxu0 0
    %3079 = vmatpush2.bf16.xpose.msra.mxu0 0
    %3080 = vmatprep.subr.bf16.mxu0 0
    %3081 = vmatpush2.bf16.xpose.msra.mxu0 0
    %3082 = vmatprep.subr.bf16.mxu0 0
    %3083 = vmatpush2.bf16.xpose.msra.mxu0 0
    %3084 = vmatprep.subr.bf16.mxu0 0
    %3085 = vmatpush2.bf16.xpose.msra.mxu0 0
    %3086 = vmatprep.mubr.bf16.mxu0 0
    %3087 = vmatmul.mubr.bf16.gmra.mxu0 %v3049
    %v3088 = vpop.f32.mrf.mxu0
    %v3089 = vadd.f32 %v56, %v3088
    %v3090 = vpop.f32.mrf.mxu0
    %v3091 = vpop.f32.mrf.mxu0
    %v3092 = vpop.f32.mrf.mxu0
    %3093 = vdwg.mxu0
    %v3095 = vunpack.c.l.b16 %v2823
    %v3096 = vpack.c.b16 %v3095, %v3095
    %3097 = vrot.lane.b32.xlu0 %v3096, 64
    %v3098 = vpop.permute.xlu0 %3097
    %v3100 = vunpack.c.l.b16 %v2825
    %v3101 = vpack.c.b16 %v3100, %v3100
    %3102 = vrot.lane.b32.xlu0 %v3101, 64
    %v3103 = vpop.permute.xlu0 %3102
    %v3105 = vsel %vm937, %v3098, 0
    %v3108 = vsel %vm937, %v3103, 0
    %3110 = vmatprep.subr.bf16.mxu0 0
    %3111 = vmatpush1.bf16.xpose.msra.mxu0 0
    %3112 = vmatprep.subr.bf16.mxu0 0
    %3113 = vmatpush1.bf16.xpose.msra.mxu0 0
    %3114 = vmatprep.subr.bf16.mxu0 0
    %3115 = vmatpush1.bf16.xpose.msra.mxu0 0
    %3116 = vmatprep.subr.bf16.mxu0 0
    %3117 = vmatpush1.bf16.xpose.msra.mxu0 0
    %3118 = vmatprep.subr.bf16.mxu0 0
    %3119 = vmatpush1.bf16.xpose.msra.mxu0 0
    %3120 = vmatprep.subr.bf16.mxu0 0
    %3121 = vmatpush1.bf16.xpose.msra.mxu0 0
    %3122 = vmatprep.subr.bf16.mxu0 0
    %3123 = vmatpush1.bf16.xpose.msra.mxu0 0
    %3124 = vmatprep.subr.bf16.mxu0 0
    %3125 = vmatpush1.bf16.xpose.msra.mxu0 %v3108
    %3126 = vmatprep.subr.bf16.mxu0 0
    %3127 = vmatpush2.bf16.xpose.msra.mxu0 0
    %3128 = vmatprep.subr.bf16.mxu0 0
    %3129 = vmatpush2.bf16.xpose.msra.mxu0 0
    %3130 = vmatprep.subr.bf16.mxu0 0
    %3131 = vmatpush2.bf16.xpose.msra.mxu0 0
    %3132 = vmatprep.subr.bf16.mxu0 0
    %3133 = vmatpush2.bf16.xpose.msra.mxu0 0
    %3134 = vmatprep.subr.bf16.mxu0 0
    %3135 = vmatpush2.bf16.xpose.msra.mxu0 0
    %3136 = vmatprep.subr.bf16.mxu0 0
    %3137 = vmatpush2.bf16.xpose.msra.mxu0 0
    %3138 = vmatprep.subr.bf16.mxu0 0
    %3139 = vmatpush2.bf16.xpose.msra.mxu0 0
    %3140 = vmatprep.subr.bf16.mxu0 0
    %3141 = vmatpush2.bf16.xpose.msra.mxu0 0
    %3142 = vmatprep.mubr.bf16.mxu0 0
    %3143 = vmatmul.mubr.bf16.gmra.mxu0 %v3105
    %v3144 = vpop.f32.mrf.mxu0
    %v3145 = vadd.f32 %v60, %v3144
    %v3146 = vpop.f32.mrf.mxu0
    %v3147 = vpop.f32.mrf.mxu0
    %v3148 = vpop.f32.mrf.mxu0
    %3149 = vdwg.mxu0
    %v3150 = vsel %vm1030, %v3089, -inf
    %3151 = vmax.xlane.f32.xlu0 %v3150
    %v3152 = vpop.xlane.xlu0 %3151
    %v3153 = vsel %vm1030, %v3145, -inf
    %3154 = vmax.xlane.f32.xlu0 %v3153
    %v3155 = vpop.xlane.xlu0 %3154
    %v3156 = vsub.f32 %v3089, %v3152
    %v3157 = vsub.f32 %v3145, %v3155
    %v3158 = vmul.f32 %v3156, 1.442695
    %v3159 = vpow.pop %v3158
    %v3160 = vmul.f32 %v3157, 1.442695
    %v3161 = vpow.pop %v3160
    %v3162 = vsel %vm1030, %v3159, 0.0
    %3163 = vadd.xlane.f32.xlu0 %v3162
    %v3164 = vpop.xlane.xlu0 %3163
    %v3165 = vsel %vm1030, %v3161, 0.0
    %3166 = vadd.xlane.f32.xlu0 %v3165
    %v3167 = vpop.xlane.xlu0 %3166
    %v3168 = vrcp.pop %v3164
    %v3169 = vrcp.pop %v3167
    %v3170 = vpack.c.bf16 %v3159, %v3159
    %v3171 = vpack.c.bf16 %v3161, %v3161
    %v3173 = vunpack.c.l.b16 %v2826
    %v3174 = vpack.c.b16 %v3173, %v3173
    %3175 = vrot.lane.b32.xlu0 %v3174, 64
    %v3176 = vpop.permute.xlu0 %3175
    %v3178 = vsel %vm1030, %v3170, 0
    %v3181 = vsel %vm1056, %v3176, 0
    %3183 = vmatprep.subr.bf16.mxu0 0
    %3184 = vmatpush1.bf16.msra.mxu0 0
    %3185 = vmatprep.subr.bf16.mxu0 0
    %3186 = vmatpush1.bf16.msra.mxu0 0
    %3187 = vmatprep.subr.bf16.mxu0 0
    %3188 = vmatpush1.bf16.msra.mxu0 0
    %3189 = vmatprep.subr.bf16.mxu0 0
    %3190 = vmatpush1.bf16.msra.mxu0 0
    %3191 = vmatprep.subr.bf16.mxu0 0
    %3192 = vmatpush1.bf16.msra.mxu0 0
    %3193 = vmatprep.subr.bf16.mxu0 0
    %3194 = vmatpush1.bf16.msra.mxu0 0
    %3195 = vmatprep.subr.bf16.mxu0 0
    %3196 = vmatpush1.bf16.msra.mxu0 0
    %3197 = vmatprep.subr.bf16.mxu0 0
    %3198 = vmatpush1.bf16.msra.mxu0 %v3181
    %3199 = vmatprep.subr.bf16.mxu0 0
    %3200 = vmatpush2.bf16.msra.mxu0 0
    %3201 = vmatprep.subr.bf16.mxu0 0
    %3202 = vmatpush2.bf16.msra.mxu0 0
    %3203 = vmatprep.subr.bf16.mxu0 0
    %3204 = vmatpush2.bf16.msra.mxu0 0
    %3205 = vmatprep.subr.bf16.mxu0 0
    %3206 = vmatpush2.bf16.msra.mxu0 0
    %3207 = vmatprep.subr.bf16.mxu0 0
    %3208 = vmatpush2.bf16.msra.mxu0 0
    %3209 = vmatprep.subr.bf16.mxu0 0
    %3210 = vmatpush2.bf16.msra.mxu0 0
    %3211 = vmatprep.subr.bf16.mxu0 0
    %3212 = vmatpush2.bf16.msra.mxu0 0
    %3213 = vmatprep.subr.bf16.mxu0 0
    %3214 = vmatpush2.bf16.msra.mxu0 0
    %3215 = vmatprep.mubr.bf16.mxu0 0
    %3216 = vmatmul.mubr.bf16.gmra.mxu0 %v3178
    %v3217 = vpop.f32.mrf.mxu0
    %v3218 = vadd.f32 0.0, %v3217
    %v3219 = vpop.f32.mrf.mxu0
    %v3220 = vpop.f32.mrf.mxu0
    %v3221 = vpop.f32.mrf.mxu0
    %3222 = vdwg.mxu0
    %v3224 = vunpack.c.l.b16 %v2827
    %v3225 = vpack.c.b16 %v3224, %v3224
    %3226 = vrot.lane.b32.xlu0 %v3225, 64
    %v3227 = vpop.permute.xlu0 %3226
    %v3229 = vsel %vm1030, %v3171, 0
    %v3232 = vsel %vm1056, %v3227, 0
    %3234 = vmatprep.subr.bf16.mxu0 0
    %3235 = vmatpush1.bf16.msra.mxu0 0
    %3236 = vmatprep.subr.bf16.mxu0 0
    %3237 = vmatpush1.bf16.msra.mxu0 0
    %3238 = vmatprep.subr.bf16.mxu0 0
    %3239 = vmatpush1.bf16.msra.mxu0 0
    %3240 = vmatprep.subr.bf16.mxu0 0
    %3241 = vmatpush1.bf16.msra.mxu0 0
    %3242 = vmatprep.subr.bf16.mxu0 0
    %3243 = vmatpush1.bf16.msra.mxu0 0
    %3244 = vmatprep.subr.bf16.mxu0 0
    %3245 = vmatpush1.bf16.msra.mxu0 0
    %3246 = vmatprep.subr.bf16.mxu0 0
    %3247 = vmatpush1.bf16.msra.mxu0 0
    %3248 = vmatprep.subr.bf16.mxu0 0
    %3249 = vmatpush1.bf16.msra.mxu0 %v3232
    %3250 = vmatprep.subr.bf16.mxu0 0
    %3251 = vmatpush2.bf16.msra.mxu0 0
    %3252 = vmatprep.subr.bf16.mxu0 0
    %3253 = vmatpush2.bf16.msra.mxu0 0
    %3254 = vmatprep.subr.bf16.mxu0 0
    %3255 = vmatpush2.bf16.msra.mxu0 0
    %3256 = vmatprep.subr.bf16.mxu0 0
    %3257 = vmatpush2.bf16.msra.mxu0 0
    %3258 = vmatprep.subr.bf16.mxu0 0
    %3259 = vmatpush2.bf16.msra.mxu0 0
    %3260 = vmatprep.subr.bf16.mxu0 0
    %3261 = vmatpush2.bf16.msra.mxu0 0
    %3262 = vmatprep.subr.bf16.mxu0 0
    %3263 = vmatpush2.bf16.msra.mxu0 0
    %3264 = vmatprep.subr.bf16.mxu0 0
    %3265 = vmatpush2.bf16.msra.mxu0 0
    %3266 = vmatprep.mubr.bf16.mxu0 0
    %3267 = vmatmul.mubr.bf16.gmra.mxu0 %v3229
    %v3268 = vpop.f32.mrf.mxu0
    %v3269 = vadd.f32 0.0, %v3268
    %v3270 = vpop.f32.mrf.mxu0
    %v3271 = vpop.f32.mrf.mxu0
    %v3272 = vpop.f32.mrf.mxu0
    %3273 = vdwg.mxu0
    %v3274 = vmul.f32 %v3218, %v3168
    %v3275 = vmul.f32 %v3269, %v3169
    %v3276 = vpack.c.bf16 %v3274, %v3274
    %v3277 = vpack.c.bf16 %v3275, %v3275
    %3280 = vrot.lane.b32.xlu0 %v3276, 64
    %v3281 = vpop.permute.xlu0 %3280
    %3282 = vrot.lane.b32.xlu0 %v3277, 64
    %v3283 = vpop.permute.xlu0 %3282
    %v3286 = vsel %vm937, %v3036, %v3281
    %v3290 = vsel %vm937, %v3037, %v3283
    %3292 = vst [vmem:[#allocation5 + $0x10] sm:$0xf] %v3286
    %3293 = vst [vmem:[#allocation5 + $0x28] sm:$0xf] %v3290
    %v3294 = vld [vmem:[#allocation2 + $0x14] sm:$0xf]
    %v3295 = vld [vmem:[#allocation2 + $0x2c] sm:$0xf]
    %v3296 = vld [vmem:[#allocation3 + $0x14] sm:$0xf]
    %v3297 = vld [vmem:[#allocation3 + $0x2c] sm:$0xf]
    %v3298 = vld [vmem:[#allocation4 + $0x14] sm:$0xf]
    %v3299 = vld [vmem:[#allocation4 + $0x2c] sm:$0xf]
    %v3301 = vsel %vm937, %v3294, 0
    %v3304 = vsel %vm937, %v3296, 0
    %3306 = vmatprep.subr.bf16.mxu0 0
    %3307 = vmatpush1.bf16.xpose.msra.mxu0 0
    %3308 = vmatprep.subr.bf16.mxu0 0
    %3309 = vmatpush1.bf16.xpose.msra.mxu0 0
    %3310 = vmatprep.subr.bf16.mxu0 0
    %3311 = vmatpush1.bf16.xpose.msra.mxu0 0
    %3312 = vmatprep.subr.bf16.mxu0 0
    %3313 = vmatpush1.bf16.xpose.msra.mxu0 0
    %3314 = vmatprep.subr.bf16.mxu0 0
    %3315 = vmatpush1.bf16.xpose.msra.mxu0 0
    %3316 = vmatprep.subr.bf16.mxu0 0
    %3317 = vmatpush1.bf16.xpose.msra.mxu0 0
    %3318 = vmatprep.subr.bf16.mxu0 0
    %3319 = vmatpush1.bf16.xpose.msra.mxu0 0
    %3320 = vmatprep.subr.bf16.mxu0 0
    %3321 = vmatpush1.bf16.xpose.msra.mxu0 %v3304
    %3322 = vmatprep.subr.bf16.mxu0 0
    %3323 = vmatpush2.bf16.xpose.msra.mxu0 0
    %3324 = vmatprep.subr.bf16.mxu0 0
    %3325 = vmatpush2.bf16.xpose.msra.mxu0 0
    %3326 = vmatprep.subr.bf16.mxu0 0
    %3327 = vmatpush2.bf16.xpose.msra.mxu0 0
    %3328 = vmatprep.subr.bf16.mxu0 0
    %3329 = vmatpush2.bf16.xpose.msra.mxu0 0
    %3330 = vmatprep.subr.bf16.mxu0 0
    %3331 = vmatpush2.bf16.xpose.msra.mxu0 0
    %3332 = vmatprep.subr.bf16.mxu0 0
    %3333 = vmatpush2.bf16.xpose.msra.mxu0 0
    %3334 = vmatprep.subr.bf16.mxu0 0
    %3335 = vmatpush2.bf16.xpose.msra.mxu0 0
    %3336 = vmatprep.subr.bf16.mxu0 0
    %3337 = vmatpush2.bf16.xpose.msra.mxu0 0
    %3338 = vmatprep.mubr.bf16.mxu0 0
    %3339 = vmatmul.mubr.bf16.gmra.mxu0 %v3301
    %v3340 = vpop.f32.mrf.mxu0
    %v3341 = vadd.f32 %v56, %v3340
    %v3342 = vpop.f32.mrf.mxu0
    %v3343 = vpop.f32.mrf.mxu0
    %v3344 = vpop.f32.mrf.mxu0
    %3345 = vdwg.mxu0
    %v3347 = vsel %vm937, %v3295, 0
    %v3350 = vsel %vm937, %v3297, 0
    %3352 = vmatprep.subr.bf16.mxu0 0
    %3353 = vmatpush1.bf16.xpose.msra.mxu0 0
    %3354 = vmatprep.subr.bf16.mxu0 0
    %3355 = vmatpush1.bf16.xpose.msra.mxu0 0
    %3356 = vmatprep.subr.bf16.mxu0 0
    %3357 = vmatpush1.bf16.xpose.msra.mxu0 0
    %3358 = vmatprep.subr.bf16.mxu0 0
    %3359 = vmatpush1.bf16.xpose.msra.mxu0 0
    %3360 = vmatprep.subr.bf16.mxu0 0
    %3361 = vmatpush1.bf16.xpose.msra.mxu0 0
    %3362 = vmatprep.subr.bf16.mxu0 0
    %3363 = vmatpush1.bf16.xpose.msra.mxu0 0
    %3364 = vmatprep.subr.bf16.mxu0 0
    %3365 = vmatpush1.bf16.xpose.msra.mxu0 0
    %3366 = vmatprep.subr.bf16.mxu0 0
    %3367 = vmatpush1.bf16.xpose.msra.mxu0 %v3350
    %3368 = vmatprep.subr.bf16.mxu0 0
    %3369 = vmatpush2.bf16.xpose.msra.mxu0 0
    %3370 = vmatprep.subr.bf16.mxu0 0
    %3371 = vmatpush2.bf16.xpose.msra.mxu0 0
    %3372 = vmatprep.subr.bf16.mxu0 0
    %3373 = vmatpush2.bf16.xpose.msra.mxu0 0
    %3374 = vmatprep.subr.bf16.mxu0 0
    %3375 = vmatpush2.bf16.xpose.msra.mxu0 0
    %3376 = vmatprep.subr.bf16.mxu0 0
    %3377 = vmatpush2.bf16.xpose.msra.mxu0 0
    %3378 = vmatprep.subr.bf16.mxu0 0
    %3379 = vmatpush2.bf16.xpose.msra.mxu0 0
    %3380 = vmatprep.subr.bf16.mxu0 0
    %3381 = vmatpush2.bf16.xpose.msra.mxu0 0
    %3382 = vmatprep.subr.bf16.mxu0 0
    %3383 = vmatpush2.bf16.xpose.msra.mxu0 0
    %3384 = vmatprep.mubr.bf16.mxu0 0
    %3385 = vmatmul.mubr.bf16.gmra.mxu0 %v3347
    %v3386 = vpop.f32.mrf.mxu0
    %v3387 = vadd.f32 %v60, %v3386
    %v3388 = vpop.f32.mrf.mxu0
    %v3389 = vpop.f32.mrf.mxu0
    %v3390 = vpop.f32.mrf.mxu0
    %3391 = vdwg.mxu0
    %v3392 = vsel %vm1030, %v3341, -inf
    %3393 = vmax.xlane.f32.xlu0 %v3392
    %v3394 = vpop.xlane.xlu0 %3393
    %v3395 = vsel %vm1030, %v3387, -inf
    %3396 = vmax.xlane.f32.xlu0 %v3395
    %v3397 = vpop.xlane.xlu0 %3396
    %v3398 = vsub.f32 %v3341, %v3394
    %v3399 = vsub.f32 %v3387, %v3397
    %v3400 = vmul.f32 %v3398, 1.442695
    %v3401 = vpow.pop %v3400
    %v3402 = vmul.f32 %v3399, 1.442695
    %v3403 = vpow.pop %v3402
    %v3404 = vsel %vm1030, %v3401, 0.0
    %3405 = vadd.xlane.f32.xlu0 %v3404
    %v3406 = vpop.xlane.xlu0 %3405
    %v3407 = vsel %vm1030, %v3403, 0.0
    %3408 = vadd.xlane.f32.xlu0 %v3407
    %v3409 = vpop.xlane.xlu0 %3408
    %v3410 = vrcp.pop %v3406
    %v3411 = vrcp.pop %v3409
    %v3412 = vpack.c.bf16 %v3401, %v3401
    %v3413 = vpack.c.bf16 %v3403, %v3403
    %v3415 = vsel %vm1030, %v3412, 0
    %v3418 = vsel %vm1056, %v3298, 0
    %3420 = vmatprep.subr.bf16.mxu0 0
    %3421 = vmatpush1.bf16.msra.mxu0 0
    %3422 = vmatprep.subr.bf16.mxu0 0
    %3423 = vmatpush1.bf16.msra.mxu0 0
    %3424 = vmatprep.subr.bf16.mxu0 0
    %3425 = vmatpush1.bf16.msra.mxu0 0
    %3426 = vmatprep.subr.bf16.mxu0 0
    %3427 = vmatpush1.bf16.msra.mxu0 0
    %3428 = vmatprep.subr.bf16.mxu0 0
    %3429 = vmatpush1.bf16.msra.mxu0 0
    %3430 = vmatprep.subr.bf16.mxu0 0
    %3431 = vmatpush1.bf16.msra.mxu0 0
    %3432 = vmatprep.subr.bf16.mxu0 0
    %3433 = vmatpush1.bf16.msra.mxu0 0
    %3434 = vmatprep.subr.bf16.mxu0 0
    %3435 = vmatpush1.bf16.msra.mxu0 %v3418
    %3436 = vmatprep.subr.bf16.mxu0 0
    %3437 = vmatpush2.bf16.msra.mxu0 0
    %3438 = vmatprep.subr.bf16.mxu0 0
    %3439 = vmatpush2.bf16.msra.mxu0 0
    %3440 = vmatprep.subr.bf16.mxu0 0
    %3441 = vmatpush2.bf16.msra.mxu0 0
    %3442 = vmatprep.subr.bf16.mxu0 0
    %3443 = vmatpush2.bf16.msra.mxu0 0
    %3444 = vmatprep.subr.bf16.mxu0 0
    %3445 = vmatpush2.bf16.msra.mxu0 0
    %3446 = vmatprep.subr.bf16.mxu0 0
    %3447 = vmatpush2.bf16.msra.mxu0 0
    %3448 = vmatprep.subr.bf16.mxu0 0
    %3449 = vmatpush2.bf16.msra.mxu0 0
    %3450 = vmatprep.subr.bf16.mxu0 0
    %3451 = vmatpush2.bf16.msra.mxu0 0
    %3452 = vmatprep.mubr.bf16.mxu0 0
    %3453 = vmatmul.mubr.bf16.gmra.mxu0 %v3415
    %v3454 = vpop.f32.mrf.mxu0
    %v3455 = vadd.f32 0.0, %v3454
    %v3456 = vpop.f32.mrf.mxu0
    %v3457 = vpop.f32.mrf.mxu0
    %v3458 = vpop.f32.mrf.mxu0
    %3459 = vdwg.mxu0
    %v3461 = vsel %vm1030, %v3413, 0
    %v3464 = vsel %vm1056, %v3299, 0
    %3466 = vmatprep.subr.bf16.mxu0 0
    %3467 = vmatpush1.bf16.msra.mxu0 0
    %3468 = vmatprep.subr.bf16.mxu0 0
    %3469 = vmatpush1.bf16.msra.mxu0 0
    %3470 = vmatprep.subr.bf16.mxu0 0
    %3471 = vmatpush1.bf16.msra.mxu0 0
    %3472 = vmatprep.subr.bf16.mxu0 0
    %3473 = vmatpush1.bf16.msra.mxu0 0
    %3474 = vmatprep.subr.bf16.mxu0 0
    %3475 = vmatpush1.bf16.msra.mxu0 0
    %3476 = vmatprep.subr.bf16.mxu0 0
    %3477 = vmatpush1.bf16.msra.mxu0 0
    %3478 = vmatprep.subr.bf16.mxu0 0
    %3479 = vmatpush1.bf16.msra.mxu0 0
    %3480 = vmatprep.subr.bf16.mxu0 0
    %3481 = vmatpush1.bf16.msra.mxu0 %v3464
    %3482 = vmatprep.subr.bf16.mxu0 0
    %3483 = vmatpush2.bf16.msra.mxu0 0
    %3484 = vmatprep.subr.bf16.mxu0 0
    %3485 = vmatpush2.bf16.msra.mxu0 0
    %3486 = vmatprep.subr.bf16.mxu0 0
    %3487 = vmatpush2.bf16.msra.mxu0 0
    %3488 = vmatprep.subr.bf16.mxu0 0
    %3489 = vmatpush2.bf16.msra.mxu0 0
    %3490 = vmatprep.subr.bf16.mxu0 0
    %3491 = vmatpush2.bf16.msra.mxu0 0
    %3492 = vmatprep.subr.bf16.mxu0 0
    %3493 = vmatpush2.bf16.msra.mxu0 0
    %3494 = vmatprep.subr.bf16.mxu0 0
    %3495 = vmatpush2.bf16.msra.mxu0 0
    %3496 = vmatprep.subr.bf16.mxu0 0
    %3497 = vmatpush2.bf16.msra.mxu0 0
    %3498 = vmatprep.mubr.bf16.mxu0 0
    %3499 = vmatmul.mubr.bf16.gmra.mxu0 %v3461
    %v3500 = vpop.f32.mrf.mxu0
    %v3501 = vadd.f32 0.0, %v3500
    %v3502 = vpop.f32.mrf.mxu0
    %v3503 = vpop.f32.mrf.mxu0
    %v3504 = vpop.f32.mrf.mxu0
    %3505 = vdwg.mxu0
    %v3506 = vmul.f32 %v3455, %v3410
    %v3507 = vmul.f32 %v3501, %v3411
    %v3508 = vpack.c.bf16 %v3506, %v3506
    %v3509 = vpack.c.bf16 %v3507, %v3507
    %v3511 = vunpack.c.l.b16 %v3294
    %v3512 = vpack.c.b16 %v3511, %v3511
    %3513 = vrot.lane.b32.xlu0 %v3512, 64
    %v3514 = vpop.permute.xlu0 %3513
    %v3516 = vunpack.c.l.b16 %v3296
    %v3517 = vpack.c.b16 %v3516, %v3516
    %3518 = vrot.lane.b32.xlu0 %v3517, 64
    %v3519 = vpop.permute.xlu0 %3518
    %v3521 = vsel %vm937, %v3514, 0
    %v3524 = vsel %vm937, %v3519, 0
    %3526 = vmatprep.subr.bf16.mxu0 0
    %3527 = vmatpush1.bf16.xpose.msra.mxu0 0
    %3528 = vmatprep.subr.bf16.mxu0 0
    %3529 = vmatpush1.bf16.xpose.msra.mxu0 0
    %3530 = vmatprep.subr.bf16.mxu0 0
    %3531 = vmatpush1.bf16.xpose.msra.mxu0 0
    %3532 = vmatprep.subr.bf16.mxu0 0
    %3533 = vmatpush1.bf16.xpose.msra.mxu0 0
    %3534 = vmatprep.subr.bf16.mxu0 0
    %3535 = vmatpush1.bf16.xpose.msra.mxu0 0
    %3536 = vmatprep.subr.bf16.mxu0 0
    %3537 = vmatpush1.bf16.xpose.msra.mxu0 0
    %3538 = vmatprep.subr.bf16.mxu0 0
    %3539 = vmatpush1.bf16.xpose.msra.mxu0 0
    %3540 = vmatprep.subr.bf16.mxu0 0
    %3541 = vmatpush1.bf16.xpose.msra.mxu0 %v3524
    %3542 = vmatprep.subr.bf16.mxu0 0
    %3543 = vmatpush2.bf16.xpose.msra.mxu0 0
    %3544 = vmatprep.subr.bf16.mxu0 0
    %3545 = vmatpush2.bf16.xpose.msra.mxu0 0
    %3546 = vmatprep.subr.bf16.mxu0 0
    %3547 = vmatpush2.bf16.xpose.msra.mxu0 0
    %3548 = vmatprep.subr.bf16.mxu0 0
    %3549 = vmatpush2.bf16.xpose.msra.mxu0 0
    %3550 = vmatprep.subr.bf16.mxu0 0
    %3551 = vmatpush2.bf16.xpose.msra.mxu0 0
    %3552 = vmatprep.subr.bf16.mxu0 0
    %3553 = vmatpush2.bf16.xpose.msra.mxu0 0
    %3554 = vmatprep.subr.bf16.mxu0 0
    %3555 = vmatpush2.bf16.xpose.msra.mxu0 0
    %3556 = vmatprep.subr.bf16.mxu0 0
    %3557 = vmatpush2.bf16.xpose.msra.mxu0 0
    %3558 = vmatprep.mubr.bf16.mxu0 0
    %3559 = vmatmul.mubr.bf16.gmra.mxu0 %v3521
    %v3560 = vpop.f32.mrf.mxu0
    %v3561 = vadd.f32 %v56, %v3560
    %v3562 = vpop.f32.mrf.mxu0
    %v3563 = vpop.f32.mrf.mxu0
    %v3564 = vpop.f32.mrf.mxu0
    %3565 = vdwg.mxu0
    %v3567 = vunpack.c.l.b16 %v3295
    %v3568 = vpack.c.b16 %v3567, %v3567
    %3569 = vrot.lane.b32.xlu0 %v3568, 64
    %v3570 = vpop.permute.xlu0 %3569
    %v3572 = vunpack.c.l.b16 %v3297
    %v3573 = vpack.c.b16 %v3572, %v3572
    %3574 = vrot.lane.b32.xlu0 %v3573, 64
    %v3575 = vpop.permute.xlu0 %3574
    %v3577 = vsel %vm937, %v3570, 0
    %v3580 = vsel %vm937, %v3575, 0
    %3582 = vmatprep.subr.bf16.mxu0 0
    %3583 = vmatpush1.bf16.xpose.msra.mxu0 0
    %3584 = vmatprep.subr.bf16.mxu0 0
    %3585 = vmatpush1.bf16.xpose.msra.mxu0 0
    %3586 = vmatprep.subr.bf16.mxu0 0
    %3587 = vmatpush1.bf16.xpose.msra.mxu0 0
    %3588 = vmatprep.subr.bf16.mxu0 0
    %3589 = vmatpush1.bf16.xpose.msra.mxu0 0
    %3590 = vmatprep.subr.bf16.mxu0 0
    %3591 = vmatpush1.bf16.xpose.msra.mxu0 0
    %3592 = vmatprep.subr.bf16.mxu0 0
    %3593 = vmatpush1.bf16.xpose.msra.mxu0 0
    %3594 = vmatprep.subr.bf16.mxu0 0
    %3595 = vmatpush1.bf16.xpose.msra.mxu0 0
    %3596 = vmatprep.subr.bf16.mxu0 0
    %3597 = vmatpush1.bf16.xpose.msra.mxu0 %v3580
    %3598 = vmatprep.subr.bf16.mxu0 0
    %3599 = vmatpush2.bf16.xpose.msra.mxu0 0
    %3600 = vmatprep.subr.bf16.mxu0 0
    %3601 = vmatpush2.bf16.xpose.msra.mxu0 0
    %3602 = vmatprep.subr.bf16.mxu0 0
    %3603 = vmatpush2.bf16.xpose.msra.mxu0 0
    %3604 = vmatprep.subr.bf16.mxu0 0
    %3605 = vmatpush2.bf16.xpose.msra.mxu0 0
    %3606 = vmatprep.subr.bf16.mxu0 0
    %3607 = vmatpush2.bf16.xpose.msra.mxu0 0
    %3608 = vmatprep.subr.bf16.mxu0 0
    %3609 = vmatpush2.bf16.xpose.msra.mxu0 0
    %3610 = vmatprep.subr.bf16.mxu0 0
    %3611 = vmatpush2.bf16.xpose.msra.mxu0 0
    %3612 = vmatprep.subr.bf16.mxu0 0
    %3613 = vmatpush2.bf16.xpose.msra.mxu0 0
    %3614 = vmatprep.mubr.bf16.mxu0 0
    %3615 = vmatmul.mubr.bf16.gmra.mxu0 %v3577
    %v3616 = vpop.f32.mrf.mxu0
    %v3617 = vadd.f32 %v60, %v3616
    %v3618 = vpop.f32.mrf.mxu0
    %v3619 = vpop.f32.mrf.mxu0
    %v3620 = vpop.f32.mrf.mxu0
    %3621 = vdwg.mxu0
    %v3622 = vsel %vm1030, %v3561, -inf
    %3623 = vmax.xlane.f32.xlu0 %v3622
    %v3624 = vpop.xlane.xlu0 %3623
    %v3625 = vsel %vm1030, %v3617, -inf
    %3626 = vmax.xlane.f32.xlu0 %v3625
    %v3627 = vpop.xlane.xlu0 %3626
    %v3628 = vsub.f32 %v3561, %v3624
    %v3629 = vsub.f32 %v3617, %v3627
    %v3630 = vmul.f32 %v3628, 1.442695
    %v3631 = vpow.pop %v3630
    %v3632 = vmul.f32 %v3629, 1.442695
    %v3633 = vpow.pop %v3632
    %v3634 = vsel %vm1030, %v3631, 0.0
    %3635 = vadd.xlane.f32.xlu0 %v3634
    %v3636 = vpop.xlane.xlu0 %3635
    %v3637 = vsel %vm1030, %v3633, 0.0
    %3638 = vadd.xlane.f32.xlu0 %v3637
    %v3639 = vpop.xlane.xlu0 %3638
    %v3640 = vrcp.pop %v3636
    %v3641 = vrcp.pop %v3639
    %v3642 = vpack.c.bf16 %v3631, %v3631
    %v3643 = vpack.c.bf16 %v3633, %v3633
    %v3645 = vunpack.c.l.b16 %v3298
    %v3646 = vpack.c.b16 %v3645, %v3645
    %3647 = vrot.lane.b32.xlu0 %v3646, 64
    %v3648 = vpop.permute.xlu0 %3647
    %v3650 = vsel %vm1030, %v3642, 0
    %v3653 = vsel %vm1056, %v3648, 0
    %3655 = vmatprep.subr.bf16.mxu0 0
    %3656 = vmatpush1.bf16.msra.mxu0 0
    %3657 = vmatprep.subr.bf16.mxu0 0
    %3658 = vmatpush1.bf16.msra.mxu0 0
    %3659 = vmatprep.subr.bf16.mxu0 0
    %3660 = vmatpush1.bf16.msra.mxu0 0
    %3661 = vmatprep.subr.bf16.mxu0 0
    %3662 = vmatpush1.bf16.msra.mxu0 0
    %3663 = vmatprep.subr.bf16.mxu0 0
    %3664 = vmatpush1.bf16.msra.mxu0 0
    %3665 = vmatprep.subr.bf16.mxu0 0
    %3666 = vmatpush1.bf16.msra.mxu0 0
    %3667 = vmatprep.subr.bf16.mxu0 0
    %3668 = vmatpush1.bf16.msra.mxu0 0
    %3669 = vmatprep.subr.bf16.mxu0 0
    %3670 = vmatpush1.bf16.msra.mxu0 %v3653
    %3671 = vmatprep.subr.bf16.mxu0 0
    %3672 = vmatpush2.bf16.msra.mxu0 0
    %3673 = vmatprep.subr.bf16.mxu0 0
    %3674 = vmatpush2.bf16.msra.mxu0 0
    %3675 = vmatprep.subr.bf16.mxu0 0
    %3676 = vmatpush2.bf16.msra.mxu0 0
    %3677 = vmatprep.subr.bf16.mxu0 0
    %3678 = vmatpush2.bf16.msra.mxu0 0
    %3679 = vmatprep.subr.bf16.mxu0 0
    %3680 = vmatpush2.bf16.msra.mxu0 0
    %3681 = vmatprep.subr.bf16.mxu0 0
    %3682 = vmatpush2.bf16.msra.mxu0 0
    %3683 = vmatprep.subr.bf16.mxu0 0
    %3684 = vmatpush2.bf16.msra.mxu0 0
    %3685 = vmatprep.subr.bf16.mxu0 0
    %3686 = vmatpush2.bf16.msra.mxu0 0
    %3687 = vmatprep.mubr.bf16.mxu0 0
    %3688 = vmatmul.mubr.bf16.gmra.mxu0 %v3650
    %v3689 = vpop.f32.mrf.mxu0
    %v3690 = vadd.f32 0.0, %v3689
    %v3691 = vpop.f32.mrf.mxu0
    %v3692 = vpop.f32.mrf.mxu0
    %v3693 = vpop.f32.mrf.mxu0
    %3694 = vdwg.mxu0
    %v3696 = vunpack.c.l.b16 %v3299
    %v3697 = vpack.c.b16 %v3696, %v3696
    %3698 = vrot.lane.b32.xlu0 %v3697, 64
    %v3699 = vpop.permute.xlu0 %3698
    %v3701 = vsel %vm1030, %v3643, 0
    %v3704 = vsel %vm1056, %v3699, 0
    %3706 = vmatprep.subr.bf16.mxu0 0
    %3707 = vmatpush1.bf16.msra.mxu0 0
    %3708 = vmatprep.subr.bf16.mxu0 0
    %3709 = vmatpush1.bf16.msra.mxu0 0
    %3710 = vmatprep.subr.bf16.mxu0 0
    %3711 = vmatpush1.bf16.msra.mxu0 0
    %3712 = vmatprep.subr.bf16.mxu0 0
    %3713 = vmatpush1.bf16.msra.mxu0 0
    %3714 = vmatprep.subr.bf16.mxu0 0
    %3715 = vmatpush1.bf16.msra.mxu0 0
    %3716 = vmatprep.subr.bf16.mxu0 0
    %3717 = vmatpush1.bf16.msra.mxu0 0
    %3718 = vmatprep.subr.bf16.mxu0 0
    %3719 = vmatpush1.bf16.msra.mxu0 0
    %3720 = vmatprep.subr.bf16.mxu0 0
    %3721 = vmatpush1.bf16.msra.mxu0 %v3704
    %3722 = vmatprep.subr.bf16.mxu0 0
    %3723 = vmatpush2.bf16.msra.mxu0 0
    %3724 = vmatprep.subr.bf16.mxu0 0
    %3725 = vmatpush2.bf16.msra.mxu0 0
    %3726 = vmatprep.subr.bf16.mxu0 0
    %3727 = vmatpush2.bf16.msra.mxu0 0
    %3728 = vmatprep.subr.bf16.mxu0 0
    %3729 = vmatpush2.bf16.msra.mxu0 0
    %3730 = vmatprep.subr.bf16.mxu0 0
    %3731 = vmatpush2.bf16.msra.mxu0 0
    %3732 = vmatprep.subr.bf16.mxu0 0
    %3733 = vmatpush2.bf16.msra.mxu0 0
    %3734 = vmatprep.subr.bf16.mxu0 0
    %3735 = vmatpush2.bf16.msra.mxu0 0
    %3736 = vmatprep.subr.bf16.mxu0 0
    %3737 = vmatpush2.bf16.msra.mxu0 0
    %3738 = vmatprep.mubr.bf16.mxu0 0
    %3739 = vmatmul.mubr.bf16.gmra.mxu0 %v3701
    %v3740 = vpop.f32.mrf.mxu0
    %v3741 = vadd.f32 0.0, %v3740
    %v3742 = vpop.f32.mrf.mxu0
    %v3743 = vpop.f32.mrf.mxu0
    %v3744 = vpop.f32.mrf.mxu0
    %3745 = vdwg.mxu0
    %v3746 = vmul.f32 %v3690, %v3640
    %v3747 = vmul.f32 %v3741, %v3641
    %v3748 = vpack.c.bf16 %v3746, %v3746
    %v3749 = vpack.c.bf16 %v3747, %v3747
    %3752 = vrot.lane.b32.xlu0 %v3748, 64
    %v3753 = vpop.permute.xlu0 %3752
    %3754 = vrot.lane.b32.xlu0 %v3749, 64
    %v3755 = vpop.permute.xlu0 %3754
    %v3758 = vsel %vm937, %v3508, %v3753
    %v3762 = vsel %vm937, %v3509, %v3755
    %3764 = vst [vmem:[#allocation5 + $0x14] sm:$0xf] %v3758
    %3765 = vst [vmem:[#allocation5 + $0x2c] sm:$0xf] %v3762
    %v3766 = vld [vmem:[#allocation5] sm:$0xff]
    %v3767 = vld [vmem:[#allocation5 + $0x8] sm:$0xff]
    %v3768 = vld [vmem:[#allocation5 + $0x10] sm:$0xff]
    %v3769 = vld [vmem:[#allocation5 + $0x18] sm:$0xff]
    %v3770 = vld [vmem:[#allocation5 + $0x20] sm:$0xff]
    %v3771 = vld [vmem:[#allocation5 + $0x28] sm:$0xff]
    %v3772 = vld [vmem:[%s4] sm:$0xf]
    %v3773 = vld [vmem:[%s4 + $0x4] sm:$0xf]
    %v3774 = vld [vmem:[%s4 + $0x8] sm:$0xf]
    %v3775 = vld [vmem:[%s4 + $0xc] sm:$0xf]
    %v3776 = vld [vmem:[%s4 + $0x10] sm:$0xf]
    %v3777 = vld [vmem:[%s4 + $0x14] sm:$0xf]
    %v3778 = vld [vmem:[%s4 + $0x18] sm:$0xf]
    %v3779 = vld [vmem:[%s4 + $0x1c] sm:$0xf]
    %v3780 = vld [vmem:[%s4 + $0x20] sm:$0xf]
    %v3781 = vld [vmem:[%s4 + $0x24] sm:$0xf]
    %v3782 = vld [vmem:[%s4 + $0x28] sm:$0xf]
    %v3783 = vld [vmem:[%s4 + $0x2c] sm:$0xf]
    %v3784 = vld [vmem:[%s4 + $0x30] sm:$0xf]
    %v3785 = vld [vmem:[%s4 + $0x34] sm:$0xf]
    %v3786 = vld [vmem:[%s4 + $0x38] sm:$0xf]
    %v3787 = vld [vmem:[%s4 + $0x3c] sm:$0xf]
    %v3788 = vld [vmem:[%s4 + $0x40] sm:$0xf]
    %v3789 = vld [vmem:[%s4 + $0x44] sm:$0xf]
    %v3790 = vld [vmem:[%s4 + $0x48] sm:$0xf]
    %v3791 = vld [vmem:[%s4 + $0x4c] sm:$0xf]
    %v3792 = vld [vmem:[%s4 + $0x50] sm:$0xf]
    %v3793 = vld [vmem:[%s4 + $0x54] sm:$0xf]
    %v3794 = vld [vmem:[%s4 + $0x58] sm:$0xf]
    %v3795 = vld [vmem:[%s4 + $0x5c] sm:$0xf]
    %v3796 = vld [vmem:[%s4 + $0x60] sm:$0xf]
    %v3797 = vld [vmem:[%s4 + $0x64] sm:$0xf]
    %v3798 = vld [vmem:[%s4 + $0x68] sm:$0xf]
    %v3799 = vld [vmem:[%s4 + $0x6c] sm:$0xf]
    %v3800 = vld [vmem:[%s4 + $0x70] sm:$0xf]
    %v3801 = vld [vmem:[%s4 + $0x74] sm:$0xf]
    %v3802 = vld [vmem:[%s4 + $0x78] sm:$0xf]
    %v3803 = vld [vmem:[%s4 + $0x7c] sm:$0xf]
    %v3804 = vld [vmem:[%s4 + $0x80] sm:$0xf]
    %v3805 = vld [vmem:[%s4 + $0x84] sm:$0xf]
    %v3806 = vld [vmem:[%s4 + $0x88] sm:$0xf]
    %v3807 = vld [vmem:[%s4 + $0x8c] sm:$0xf]
    %v3808 = vld [vmem:[%s4 + $0x90] sm:$0xf]
    %v3809 = vld [vmem:[%s4 + $0x94] sm:$0xf]
    %v3810 = vld [vmem:[%s4 + $0x98] sm:$0xf]
    %v3811 = vld [vmem:[%s4 + $0x9c] sm:$0xf]
    %v3812 = vld [vmem:[%s4 + $0xa0] sm:$0xf]
    %v3813 = vld [vmem:[%s4 + $0xa4] sm:$0xf]
    %v3814 = vld [vmem:[%s4 + $0xa8] sm:$0xf]
    %v3815 = vld [vmem:[%s4 + $0xac] sm:$0xf]
    %v3816 = vld [vmem:[%s4 + $0xb0] sm:$0xf]
    %v3817 = vld [vmem:[%s4 + $0xb4] sm:$0xf]
    %v3818 = vld [vmem:[%s4 + $0xb8] sm:$0xf]
    %v3819 = vld [vmem:[%s4 + $0xbc] sm:$0xf]
    %v3820 = vld [vmem:[%s4 + $0xc0] sm:$0xf]
    %v3821 = vld [vmem:[%s4 + $0xc4] sm:$0xf]
    %v3822 = vld [vmem:[%s4 + $0xc8] sm:$0xf]
    %v3823 = vld [vmem:[%s4 + $0xcc] sm:$0xf]
    %v3824 = vld [vmem:[%s4 + $0xd0] sm:$0xf]
    %v3825 = vld [vmem:[%s4 + $0xd4] sm:$0xf]
    %v3826 = vld [vmem:[%s4 + $0xd8] sm:$0xf]
    %v3827 = vld [vmem:[%s4 + $0xdc] sm:$0xf]
    %v3828 = vld [vmem:[%s4 + $0xe0] sm:$0xf]
    %v3829 = vld [vmem:[%s4 + $0xe4] sm:$0xf]
    %v3830 = vld [vmem:[%s4 + $0xe8] sm:$0xf]
    %v3831 = vld [vmem:[%s4 + $0xec] sm:$0xf]
    %v3832 = vld [vmem:[%s4 + $0xf0] sm:$0xf]
    %v3833 = vld [vmem:[%s4 + $0xf4] sm:$0xf]
    %v3834 = vld [vmem:[%s4 + $0xf8] sm:$0xf]
    %v3835 = vld [vmem:[%s4 + $0xfc] sm:$0xf]
    %v3836 = vld [vmem:[%s4 + $0x100] sm:$0xf]
    %v3837 = vld [vmem:[%s4 + $0x104] sm:$0xf]
    %v3838 = vld [vmem:[%s4 + $0x108] sm:$0xf]
    %v3839 = vld [vmem:[%s4 + $0x10c] sm:$0xf]
    %v3840 = vld [vmem:[%s4 + $0x110] sm:$0xf]
    %v3841 = vld [vmem:[%s4 + $0x114] sm:$0xf]
    %v3842 = vld [vmem:[%s4 + $0x118] sm:$0xf]
    %v3843 = vld [vmem:[%s4 + $0x11c] sm:$0xf]
    %v3844 = vld [vmem:[%s4 + $0x120] sm:$0xf]
    %v3845 = vld [vmem:[%s4 + $0x124] sm:$0xf]
    %v3846 = vld [vmem:[%s4 + $0x128] sm:$0xf]
    %v3847 = vld [vmem:[%s4 + $0x12c] sm:$0xf]
    %v3848 = vld [vmem:[%s4 + $0x130] sm:$0xf]
    %v3849 = vld [vmem:[%s4 + $0x134] sm:$0xf]
    %v3850 = vld [vmem:[%s4 + $0x138] sm:$0xf]
    %v3851 = vld [vmem:[%s4 + $0x13c] sm:$0xf]
    %v3852 = vld [vmem:[%s4 + $0x140] sm:$0xf]
    %v3853 = vld [vmem:[%s4 + $0x144] sm:$0xf]
    %v3854 = vld [vmem:[%s4 + $0x148] sm:$0xf]
    %v3855 = vld [vmem:[%s4 + $0x14c] sm:$0xf]
    %v3856 = vld [vmem:[%s4 + $0x150] sm:$0xf]
    %v3857 = vld [vmem:[%s4 + $0x154] sm:$0xf]
    %v3858 = vld [vmem:[%s4 + $0x158] sm:$0xf]
    %v3859 = vld [vmem:[%s4 + $0x15c] sm:$0xf]
    %v3860 = vld [vmem:[%s4 + $0x160] sm:$0xf]
    %v3861 = vld [vmem:[%s4 + $0x164] sm:$0xf]
    %v3862 = vld [vmem:[%s4 + $0x168] sm:$0xf]
    %v3863 = vld [vmem:[%s4 + $0x16c] sm:$0xf]
    %v3864 = vld [vmem:[%s4 + $0x170] sm:$0xf]
    %v3865 = vld [vmem:[%s4 + $0x174] sm:$0xf]
    %v3866 = vld [vmem:[%s4 + $0x178] sm:$0xf]
    %v3867 = vld [vmem:[%s4 + $0x17c] sm:$0xf]
    %v3868 = vld [vmem:[%s5] sm:$0x1]
    %v3870 = vlaneseq
    %v3871 = vshrl.u32 %v3870, 7
    %v3872 = vsub.s32 0, %v3871
    %v3873 = vrot.slane %v3868, %v3872
    %v3881 = vunpack.c.l.b16 %v3766
    %v3882 = vunpack.c.h.b16 %v3766
    %v3883 = vunpack.c.l.b16 %v3767
    %v3884 = vunpack.c.h.b16 %v3767
    %v3885 = vunpack.c.l.b16 %v3768
    %v3886 = vunpack.c.h.b16 %v3768
    %v3887 = vunpack.c.l.b16 %v3769
    %v3888 = vunpack.c.h.b16 %v3769
    %v3889 = vunpack.c.l.b16 %v3770
    %v3890 = vunpack.c.h.b16 %v3770
    %v3891 = vunpack.c.l.b16 %v3771
    %v3892 = vunpack.c.h.b16 %v3771
    %v3893 = vpack.c.b16 %v3887, %v3881
    %v3894 = vpack.c.b16 %v3888, %v3882
    %v3895 = vpack.c.b16 %v3889, %v3883
    %v3896 = vpack.c.b16 %v3890, %v3884
    %v3897 = vpack.c.b16 %v3891, %v3885
    %v3898 = vpack.c.b16 %v3892, %v3886
    %v4001 = vunpack.c.l.b16 %v3772
    %v4002 = vunpack.c.l.b16 %v3773
    %v4003 = vunpack.c.l.b16 %v3774
    %v4004 = vunpack.c.l.b16 %v3775
    %v4005 = vunpack.c.l.b16 %v3776
    %v4006 = vunpack.c.l.b16 %v3777
    %v4007 = vunpack.c.l.b16 %v3778
    %v4008 = vunpack.c.l.b16 %v3779
    %v4009 = vunpack.c.l.b16 %v3780
    %v4010 = vunpack.c.l.b16 %v3781
    %v4011 = vunpack.c.l.b16 %v3782
    %v4012 = vunpack.c.l.b16 %v3783
    %v4013 = vunpack.c.l.b16 %v3784
    %v4014 = vunpack.c.l.b16 %v3785
    %v4015 = vunpack.c.l.b16 %v3786
    %v4016 = vunpack.c.l.b16 %v3787
    %v4017 = vunpack.c.l.b16 %v3788
    %v4018 = vunpack.c.l.b16 %v3789
    %v4019 = vunpack.c.l.b16 %v3790
    %v4020 = vunpack.c.l.b16 %v3791
    %v4021 = vunpack.c.l.b16 %v3792
    %v4022 = vunpack.c.l.b16 %v3793
    %v4023 = vunpack.c.l.b16 %v3794
    %v4024 = vunpack.c.l.b16 %v3795
    %v4025 = vunpack.c.l.b16 %v3796
    %v4026 = vunpack.c.l.b16 %v3797
    %v4027 = vunpack.c.l.b16 %v3798
    %v4028 = vunpack.c.l.b16 %v3799
    %v4029 = vunpack.c.l.b16 %v3800
    %v4030 = vunpack.c.l.b16 %v3801
    %v4031 = vunpack.c.l.b16 %v3802
    %v4032 = vunpack.c.l.b16 %v3803
    %v4033 = vunpack.c.l.b16 %v3804
    %v4034 = vunpack.c.l.b16 %v3805
    %v4035 = vunpack.c.l.b16 %v3806
    %v4036 = vunpack.c.l.b16 %v3807
    %v4037 = vunpack.c.l.b16 %v3808
    %v4038 = vunpack.c.l.b16 %v3809
    %v4039 = vunpack.c.l.b16 %v3810
    %v4040 = vunpack.c.l.b16 %v3811
    %v4041 = vunpack.c.l.b16 %v3812
    %v4042 = vunpack.c.l.b16 %v3813
    %v4043 = vunpack.c.l.b16 %v3814
    %v4044 = vunpack.c.l.b16 %v3815
    %v4045 = vunpack.c.l.b16 %v3816
    %v4046 = vunpack.c.l.b16 %v3817
    %v4047 = vunpack.c.l.b16 %v3818
    %v4048 = vunpack.c.l.b16 %v3819
    %v4049 = vunpack.c.l.b16 %v3820
    %v4050 = vunpack.c.l.b16 %v3821
    %v4051 = vunpack.c.l.b16 %v3822
    %v4052 = vunpack.c.l.b16 %v3823
    %v4053 = vunpack.c.l.b16 %v3824
    %v4054 = vunpack.c.l.b16 %v3825
    %v4055 = vunpack.c.l.b16 %v3826
    %v4056 = vunpack.c.l.b16 %v3827
    %v4057 = vunpack.c.l.b16 %v3828
    %v4058 = vunpack.c.l.b16 %v3829
    %v4059 = vunpack.c.l.b16 %v3830
    %v4060 = vunpack.c.l.b16 %v3831
    %v4061 = vunpack.c.l.b16 %v3832
    %v4062 = vunpack.c.l.b16 %v3833
    %v4063 = vunpack.c.l.b16 %v3834
    %v4064 = vunpack.c.l.b16 %v3835
    %v4065 = vunpack.c.l.b16 %v3836
    %v4066 = vunpack.c.l.b16 %v3837
    %v4067 = vunpack.c.l.b16 %v3838
    %v4068 = vunpack.c.l.b16 %v3839
    %v4069 = vunpack.c.l.b16 %v3840
    %v4070 = vunpack.c.l.b16 %v3841
    %v4071 = vunpack.c.l.b16 %v3842
    %v4072 = vunpack.c.l.b16 %v3843
    %v4073 = vunpack.c.l.b16 %v3844
    %v4074 = vunpack.c.l.b16 %v3845
    %v4075 = vunpack.c.l.b16 %v3846
    %v4076 = vunpack.c.l.b16 %v3847
    %v4077 = vunpack.c.l.b16 %v3848
    %v4078 = vunpack.c.l.b16 %v3849
    %v4079 = vunpack.c.l.b16 %v3850
    %v4080 = vunpack.c.l.b16 %v3851
    %v4081 = vunpack.c.l.b16 %v3852
    %v4082 = vunpack.c.l.b16 %v3853
    %v4083 = vunpack.c.l.b16 %v3854
    %v4084 = vunpack.c.l.b16 %v3855
    %v4085 = vunpack.c.l.b16 %v3856
    %v4086 = vunpack.c.l.b16 %v3857
    %v4087 = vunpack.c.l.b16 %v3858
    %v4088 = vunpack.c.l.b16 %v3859
    %v4089 = vunpack.c.l.b16 %v3860
    %v4090 = vunpack.c.l.b16 %v3861
    %v4091 = vunpack.c.l.b16 %v3862
    %v4092 = vunpack.c.l.b16 %v3863
    %v4093 = vunpack.c.l.b16 %v3864
    %v4094 = vunpack.c.l.b16 %v3865
    %v4095 = vunpack.c.l.b16 %v3866
    %v4096 = vunpack.c.l.b16 %v3867
    %v4097 = vpack.c.b16 %v4002, %v4001
    %v4098 = vpack.c.b16 %v4004, %v4003
    %v4099 = vpack.c.b16 %v4006, %v4005
    %v4100 = vpack.c.b16 %v4008, %v4007
    %v4101 = vpack.c.b16 %v4010, %v4009
    %v4102 = vpack.c.b16 %v4012, %v4011
    %v4103 = vpack.c.b16 %v4014, %v4013
    %v4104 = vpack.c.b16 %v4016, %v4015
    %v4105 = vpack.c.b16 %v4018, %v4017
    %v4106 = vpack.c.b16 %v4020, %v4019
    %v4107 = vpack.c.b16 %v4022, %v4021
    %v4108 = vpack.c.b16 %v4024, %v4023
    %v4109 = vpack.c.b16 %v4026, %v4025
    %v4110 = vpack.c.b16 %v4028, %v4027
    %v4111 = vpack.c.b16 %v4030, %v4029
    %v4112 = vpack.c.b16 %v4032, %v4031
    %v4113 = vpack.c.b16 %v4034, %v4033
    %v4114 = vpack.c.b16 %v4036, %v4035
    %v4115 = vpack.c.b16 %v4038, %v4037
    %v4116 = vpack.c.b16 %v4040, %v4039
    %v4117 = vpack.c.b16 %v4042, %v4041
    %v4118 = vpack.c.b16 %v4044, %v4043
    %v4119 = vpack.c.b16 %v4046, %v4045
    %v4120 = vpack.c.b16 %v4048, %v4047
    %v4121 = vpack.c.b16 %v4050, %v4049
    %v4122 = vpack.c.b16 %v4052, %v4051
    %v4123 = vpack.c.b16 %v4054, %v4053
    %v4124 = vpack.c.b16 %v4056, %v4055
    %v4125 = vpack.c.b16 %v4058, %v4057
    %v4126 = vpack.c.b16 %v4060, %v4059
    %v4127 = vpack.c.b16 %v4062, %v4061
    %v4128 = vpack.c.b16 %v4064, %v4063
    %v4129 = vpack.c.b16 %v4066, %v4065
    %v4130 = vpack.c.b16 %v4068, %v4067
    %v4131 = vpack.c.b16 %v4070, %v4069
    %v4132 = vpack.c.b16 %v4072, %v4071
    %v4133 = vpack.c.b16 %v4074, %v4073
    %v4134 = vpack.c.b16 %v4076, %v4075
    %v4135 = vpack.c.b16 %v4078, %v4077
    %v4136 = vpack.c.b16 %v4080, %v4079
    %v4137 = vpack.c.b16 %v4082, %v4081
    %v4138 = vpack.c.b16 %v4084, %v4083
    %v4139 = vpack.c.b16 %v4086, %v4085
    %v4140 = vpack.c.b16 %v4088, %v4087
    %v4141 = vpack.c.b16 %v4090, %v4089
    %v4142 = vpack.c.b16 %v4092, %v4091
    %v4143 = vpack.c.b16 %v4094, %v4093
    %v4144 = vpack.c.b16 %v4096, %v4095
    %4193 = vmatprep.subr.bf16.mxu0 0
    %4194 = vmatpush1.bf16.msra.mxu0 %v4104
    %4195 = vmatprep.subr.bf16.mxu0 0
    %4196 = vmatpush1.bf16.msra.mxu0 %v4103
    %4197 = vmatprep.subr.bf16.mxu0 0
    %4198 = vmatpush1.bf16.msra.mxu0 %v4102
    %4199 = vmatprep.subr.bf16.mxu0 0
    %4200 = vmatpush1.bf16.msra.mxu0 %v4101
    %4201 = vmatprep.subr.bf16.mxu0 0
    %4202 = vmatpush1.bf16.msra.mxu0 %v4100
    %4203 = vmatprep.subr.bf16.mxu0 0
    %4204 = vmatpush1.bf16.msra.mxu0 %v4099
    %4205 = vmatprep.subr.bf16.mxu0 0
    %4206 = vmatpush1.bf16.msra.mxu0 %v4098
    %4207 = vmatprep.subr.bf16.mxu0 0
    %4208 = vmatpush1.bf16.msra.mxu0 %v4097
    %4209 = vmatprep.subr.bf16.mxu0 0
    %4210 = vmatpush2.bf16.msra.mxu0 %v4112
    %4211 = vmatprep.subr.bf16.mxu0 0
    %4212 = vmatpush2.bf16.msra.mxu0 %v4111
    %4213 = vmatprep.subr.bf16.mxu0 0
    %4214 = vmatpush2.bf16.msra.mxu0 %v4110
    %4215 = vmatprep.subr.bf16.mxu0 0
    %4216 = vmatpush2.bf16.msra.mxu0 %v4109
    %4217 = vmatprep.subr.bf16.mxu0 0
    %4218 = vmatpush2.bf16.msra.mxu0 %v4108
    %4219 = vmatprep.subr.bf16.mxu0 0
    %4220 = vmatpush2.bf16.msra.mxu0 %v4107
    %4221 = vmatprep.subr.bf16.mxu0 0
    %4222 = vmatpush2.bf16.msra.mxu0 %v4106
    %4223 = vmatprep.subr.bf16.mxu0 0
    %4224 = vmatpush2.bf16.msra.mxu0 %v4105
    %4225 = vmatprep.mubr.bf16.mxu0 %v3894
    %4226 = vmatmul.mubr.bf16.gmra.mxu0 %v3893
    %v4227 = vpop.f32.mrf.mxu0
    %v4228 = vadd.f32 %v3873, %v4227
    %v4229 = vpop.f32.mrf.mxu0
    %v4230 = vpop.f32.mrf.mxu0
    %v4231 = vadd.f32 %v3873, %v4230
    %v4232 = vpop.f32.mrf.mxu0
    %4233 = vdwg.mxu0
    %4234 = vmatprep.subr.bf16.mxu0 0
    %4235 = vmatpush1.bf16.msra.mxu0 %v4120
    %4236 = vmatprep.subr.bf16.mxu0 0
    %4237 = vmatpush1.bf16.msra.mxu0 %v4119
    %4238 = vmatprep.subr.bf16.mxu0 0
    %4239 = vmatpush1.bf16.msra.mxu0 %v4118
    %4240 = vmatprep.subr.bf16.mxu0 0
    %4241 = vmatpush1.bf16.msra.mxu0 %v4117
    %4242 = vmatprep.subr.bf16.mxu0 0
    %4243 = vmatpush1.bf16.msra.mxu0 %v4116
    %4244 = vmatprep.subr.bf16.mxu0 0
    %4245 = vmatpush1.bf16.msra.mxu0 %v4115
    %4246 = vmatprep.subr.bf16.mxu0 0
    %4247 = vmatpush1.bf16.msra.mxu0 %v4114
    %4248 = vmatprep.subr.bf16.mxu0 0
    %4249 = vmatpush1.bf16.msra.mxu0 %v4113
    %4250 = vmatprep.subr.bf16.mxu0 0
    %4251 = vmatpush2.bf16.msra.mxu0 %v4128
    %4252 = vmatprep.subr.bf16.mxu0 0
    %4253 = vmatpush2.bf16.msra.mxu0 %v4127
    %4254 = vmatprep.subr.bf16.mxu0 0
    %4255 = vmatpush2.bf16.msra.mxu0 %v4126
    %4256 = vmatprep.subr.bf16.mxu0 0
    %4257 = vmatpush2.bf16.msra.mxu0 %v4125
    %4258 = vmatprep.subr.bf16.mxu0 0
    %4259 = vmatpush2.bf16.msra.mxu0 %v4124
    %4260 = vmatprep.subr.bf16.mxu0 0
    %4261 = vmatpush2.bf16.msra.mxu0 %v4123
    %4262 = vmatprep.subr.bf16.mxu0 0
    %4263 = vmatpush2.bf16.msra.mxu0 %v4122
    %4264 = vmatprep.subr.bf16.mxu0 0
    %4265 = vmatpush2.bf16.msra.mxu0 %v4121
    %4266 = vmatprep.mubr.bf16.mxu0 %v3896
    %4267 = vmatmul.mubr.bf16.gmra.mxu0 %v3895
    %v4268 = vpop.f32.mrf.mxu0
    %v4269 = vadd.f32 %v4228, %v4268
    %v4270 = vpop.f32.mrf.mxu0
    %v4271 = vpop.f32.mrf.mxu0
    %v4272 = vadd.f32 %v4231, %v4271
    %v4273 = vpop.f32.mrf.mxu0
    %4274 = vdwg.mxu0
    %4275 = vmatprep.subr.bf16.mxu0 0
    %4276 = vmatpush1.bf16.msra.mxu0 %v4136
    %4277 = vmatprep.subr.bf16.mxu0 0
    %4278 = vmatpush1.bf16.msra.mxu0 %v4135
    %4279 = vmatprep.subr.bf16.mxu0 0
    %4280 = vmatpush1.bf16.msra.mxu0 %v4134
    %4281 = vmatprep.subr.bf16.mxu0 0
    %4282 = vmatpush1.bf16.msra.mxu0 %v4133
    %4283 = vmatprep.subr.bf16.mxu0 0
    %4284 = vmatpush1.bf16.msra.mxu0 %v4132
    %4285 = vmatprep.subr.bf16.mxu0 0
    %4286 = vmatpush1.bf16.msra.mxu0 %v4131
    %4287 = vmatprep.subr.bf16.mxu0 0
    %4288 = vmatpush1.bf16.msra.mxu0 %v4130
    %4289 = vmatprep.subr.bf16.mxu0 0
    %4290 = vmatpush1.bf16.msra.mxu0 %v4129
    %4291 = vmatprep.subr.bf16.mxu0 0
    %4292 = vmatpush2.bf16.msra.mxu0 %v4144
    %4293 = vmatprep.subr.bf16.mxu0 0
    %4294 = vmatpush2.bf16.msra.mxu0 %v4143
    %4295 = vmatprep.subr.bf16.mxu0 0
    %4296 = vmatpush2.bf16.msra.mxu0 %v4142
    %4297 = vmatprep.subr.bf16.mxu0 0
    %4298 = vmatpush2.bf16.msra.mxu0 %v4141
    %4299 = vmatprep.subr.bf16.mxu0 0
    %4300 = vmatpush2.bf16.msra.mxu0 %v4140
    %4301 = vmatprep.subr.bf16.mxu0 0
    %4302 = vmatpush2.bf16.msra.mxu0 %v4139
    %4303 = vmatprep.subr.bf16.mxu0 0
    %4304 = vmatpush2.bf16.msra.mxu0 %v4138
    %4305 = vmatprep.subr.bf16.mxu0 0
    %4306 = vmatpush2.bf16.msra.mxu0 %v4137
    %4307 = vmatprep.mubr.bf16.mxu0 %v3898
    %4308 = vmatmul.mubr.bf16.gmra.mxu0 %v3897
    %v4309 = vpop.f32.mrf.mxu0
    %v4310 = vadd.f32 %v4269, %v4309
    %v4311 = vpop.f32.mrf.mxu0
    %v4312 = vpop.f32.mrf.mxu0
    %v4313 = vadd.f32 %v4272, %v4312
    %v4314 = vpop.f32.mrf.mxu0
    %4315 = vdwg.mxu0
    %v4316 = vadd.f32 %v63, %v4310
    %v4317 = vadd.f32 %v64, %v4313
    %v4318 = vsel %vm378, %v4316, 0.0
    %4319 = vadd.xlane.f32.xlu0 %v4318
    %v4320 = vpop.xlane.xlu0 %4319
    %v4321 = vsel %vm378, %v4317, 0.0
    %4322 = vadd.xlane.f32.xlu0 %v4321
    %v4323 = vpop.xlane.xlu0 %4322
    %v4324 = vrcp.pop 32.0
    %v4325 = vmul.f32 %v4320, %v4324
    %v4326 = vmul.f32 %v4323, %v4324
    %v4327 = vsub.f32 %v4316, %v4325
    %v4328 = vsub.f32 %v4317, %v4326
    %v4329 = vmul.f32 %v4327, %v4327
    %v4330 = vmul.f32 %v4328, %v4328
    %v4331 = vsel %vm378, %v4329, 0.0
    %4332 = vadd.xlane.f32.xlu0 %v4331
    %v4333 = vpop.xlane.xlu0 %4332
    %v4334 = vsel %vm378, %v4330, 0.0
    %4335 = vadd.xlane.f32.xlu0 %v4334
    %v4336 = vpop.xlane.xlu0 %4335
    %v4337 = vmul.f32 %v4333, %v4324
    %v4338 = vmul.f32 %v4336, %v4324
    %v4339 = vadd.f32 %v4337, 1e-05
    %v4340 = vadd.f32 %v4338, 1e-05
    %v4341 = vrsqrt.pop %v4339
    %v4342 = vrsqrt.pop %v4340
    %v4343 = vmul.f32 %v4327, %v4341
    %v4344 = vmul.f32 %v4328, %v4342
    %v4345 = vld [vmem:[%s6] sm:$0x1]
    %v4347 = vlaneseq
    %v4348 = vshrl.u32 %v4347, 7
    %v4349 = vsub.s32 0, %v4348
    %v4350 = vrot.slane %v4345, %v4349
    %v4352 = vmul.f32 %v4343, %v4350
    %v4353 = vmul.f32 %v4344, %v4350
    %v4354 = vld [vmem:[%s7] sm:$0x1]
    %v4356 = vlaneseq
    %v4357 = vshrl.u32 %v4356, 7
    %v4358 = vsub.s32 0, %v4357
    %v4359 = vrot.slane %v4354, %v4358
    %v4361 = vadd.f32 %v4352, %v4359
    %v4362 = vadd.f32 %v4353, %v4359
    %v4364 = vsel %vm1030, %v45, 0
    %4366 = vmatprep.subr.mxu0 0.0
    %4367 = vmatpush1.msra.mxu0 0.0
    %4368 = vmatprep.subr.mxu0 0.0
    %4369 = vmatpush1.msra.mxu0 0.0
    %4370 = vmatprep.subr.mxu0 0.0
    %4371 = vmatpush1.msra.mxu0 0.0
    %4372 = vmatprep.subr.mxu0 0.0
    %4373 = vmatpush1.msra.mxu0 0.0
    %4374 = vmatprep.subr.mxu0 0.0
    %4375 = vmatpush1.msra.mxu0 0.0
    %4376 = vmatprep.subr.mxu0 0.0
    %4377 = vmatpush1.msra.mxu0 0.0
    %4378 = vmatprep.subr.mxu0 0.0
    %4379 = vmatpush1.msra.mxu0 0.0
    %4380 = vmatprep.subr.mxu0 0.0
    %4381 = vmatpush1.msra.mxu0 0.0
    %4382 = vmatprep.subr.mxu0 0.0
    %4383 = vmatpush1.msra.mxu0 0.0
    %4384 = vmatprep.subr.mxu0 0.0
    %4385 = vmatpush1.msra.mxu0 0.0
    %4386 = vmatprep.subr.mxu0 0.0
    %4387 = vmatpush1.msra.mxu0 0.0
    %4388 = vmatprep.subr.mxu0 0.0
    %4389 = vmatpush1.msra.mxu0 0.0
    %4390 = vmatprep.subr.mxu0 0.0
    %4391 = vmatpush1.msra.mxu0 0.0
    %4392 = vmatprep.subr.mxu0 0.0
    %4393 = vmatpush1.msra.mxu0 0.0
    %4394 = vmatprep.subr.mxu0 0.0
    %4395 = vmatpush1.msra.mxu0 0.0
    %4396 = vmatprep.subr.mxu0 0.0
    %4397 = vmatpush1.msra.mxu0 %v4361
    %4398 = vmatprep.subr.mxu0 0.0
    %4399 = vmatpush2.msra.mxu0 0.0
    %4400 = vmatprep.subr.mxu0 0.0
    %4401 = vmatpush2.msra.mxu0 0.0
    %4402 = vmatprep.subr.mxu0 0.0
    %4403 = vmatpush2.msra.mxu0 0.0
    %4404 = vmatprep.subr.mxu0 0.0
    %4405 = vmatpush2.msra.mxu0 0.0
    %4406 = vmatprep.subr.mxu0 0.0
    %4407 = vmatpush2.msra.mxu0 0.0
    %4408 = vmatprep.subr.mxu0 0.0
    %4409 = vmatpush2.msra.mxu0 0.0
    %4410 = vmatprep.subr.mxu0 0.0
    %4411 = vmatpush2.msra.mxu0 0.0
    %4412 = vmatprep.subr.mxu0 0.0
    %4413 = vmatpush2.msra.mxu0 0.0
    %4414 = vmatprep.subr.mxu0 0.0
    %4415 = vmatpush2.msra.mxu0 0.0
    %4416 = vmatprep.subr.mxu0 0.0
    %4417 = vmatpush2.msra.mxu0 0.0
    %4418 = vmatprep.subr.mxu0 0.0
    %4419 = vmatpush2.msra.mxu0 0.0
    %4420 = vmatprep.subr.mxu0 0.0
    %4421 = vmatpush2.msra.mxu0 0.0
    %4422 = vmatprep.subr.mxu0 0.0
    %4423 = vmatpush2.msra.mxu0 0.0
    %4424 = vmatprep.subr.mxu0 0.0
    %4425 = vmatpush2.msra.mxu0 0.0
    %4426 = vmatprep.subr.mxu0 0.0
    %4427 = vmatpush2.msra.mxu0 0.0
    %4428 = vmatprep.subr.mxu0 0.0
    %4429 = vmatpush2.msra.mxu0 0.0
    %4430 = vmatprep.mubr.f32.mxu0 0.0
    %4431 = vmatmul.mubr.f32.gmra.mxu0 %v4364
    %v4432 = vpop.f32.mrf.mxu0
    %v4433 = vadd.f32 0.0, %v4432
    %v4434 = vpop.f32.mrf.mxu0
    %4435 = vdwg.mxu0
    %v4437 = vsel %vm1030, %v46, 0
    %4439 = vmatprep.subr.mxu0 0.0
    %4440 = vmatpush1.msra.mxu0 0.0
    %4441 = vmatprep.subr.mxu0 0.0
    %4442 = vmatpush1.msra.mxu0 0.0
    %4443 = vmatprep.subr.mxu0 0.0
    %4444 = vmatpush1.msra.mxu0 0.0
    %4445 = vmatprep.subr.mxu0 0.0
    %4446 = vmatpush1.msra.mxu0 0.0
    %4447 = vmatprep.subr.mxu0 0.0
    %4448 = vmatpush1.msra.mxu0 0.0
    %4449 = vmatprep.subr.mxu0 0.0
    %4450 = vmatpush1.msra.mxu0 0.0
    %4451 = vmatprep.subr.mxu0 0.0
    %4452 = vmatpush1.msra.mxu0 0.0
    %4453 = vmatprep.subr.mxu0 0.0
    %4454 = vmatpush1.msra.mxu0 0.0
    %4455 = vmatprep.subr.mxu0 0.0
    %4456 = vmatpush1.msra.mxu0 0.0
    %4457 = vmatprep.subr.mxu0 0.0
    %4458 = vmatpush1.msra.mxu0 0.0
    %4459 = vmatprep.subr.mxu0 0.0
    %4460 = vmatpush1.msra.mxu0 0.0
    %4461 = vmatprep.subr.mxu0 0.0
    %4462 = vmatpush1.msra.mxu0 0.0
    %4463 = vmatprep.subr.mxu0 0.0
    %4464 = vmatpush1.msra.mxu0 0.0
    %4465 = vmatprep.subr.mxu0 0.0
    %4466 = vmatpush1.msra.mxu0 0.0
    %4467 = vmatprep.subr.mxu0 0.0
    %4468 = vmatpush1.msra.mxu0 0.0
    %4469 = vmatprep.subr.mxu0 0.0
    %4470 = vmatpush1.msra.mxu0 %v4362
    %4471 = vmatprep.subr.mxu0 0.0
    %4472 = vmatpush2.msra.mxu0 0.0
    %4473 = vmatprep.subr.mxu0 0.0
    %4474 = vmatpush2.msra.mxu0 0.0
    %4475 = vmatprep.subr.mxu0 0.0
    %4476 = vmatpush2.msra.mxu0 0.0
    %4477 = vmatprep.subr.mxu0 0.0
    %4478 = vmatpush2.msra.mxu0 0.0
    %4479 = vmatprep.subr.mxu0 0.0
    %4480 = vmatpush2.msra.mxu0 0.0
    %4481 = vmatprep.subr.mxu0 0.0
    %4482 = vmatpush2.msra.mxu0 0.0
    %4483 = vmatprep.subr.mxu0 0.0
    %4484 = vmatpush2.msra.mxu0 0.0
    %4485 = vmatprep.subr.mxu0 0.0
    %4486 = vmatpush2.msra.mxu0 0.0
    %4487 = vmatprep.subr.mxu0 0.0
    %4488 = vmatpush2.msra.mxu0 0.0
    %4489 = vmatprep.subr.mxu0 0.0
    %4490 = vmatpush2.msra.mxu0 0.0
    %4491 = vmatprep.subr.mxu0 0.0
    %4492 = vmatpush2.msra.mxu0 0.0
    %4493 = vmatprep.subr.mxu0 0.0
    %4494 = vmatpush2.msra.mxu0 0.0
    %4495 = vmatprep.subr.mxu0 0.0
    %4496 = vmatpush2.msra.mxu0 0.0
    %4497 = vmatprep.subr.mxu0 0.0
    %4498 = vmatpush2.msra.mxu0 0.0
    %4499 = vmatprep.subr.mxu0 0.0
    %4500 = vmatpush2.msra.mxu0 0.0
    %4501 = vmatprep.subr.mxu0 0.0
    %4502 = vmatpush2.msra.mxu0 0.0
    %4503 = vmatprep.mubr.f32.mxu0 0.0
    %4504 = vmatmul.mubr.f32.gmra.mxu0 %v4437
    %v4505 = vpop.f32.mrf.mxu0
    %v4506 = vadd.f32 0.0, %v4505
    %v4507 = vpop.f32.mrf.mxu0
    %4508 = vdwg.mxu0
    %vm4509 = vcmask 57344
    %v4510 = vsel %vm4509, %v45, 0.0
    %4511 = vadd.xlane.f32.xlu0 %v4510
    %v4512 = vpop.xlane.xlu0 %4511
    %v4513 = vsel %vm4509, %v46, 0.0
    %4514 = vadd.xlane.f32.xlu0 %v4513
    %v4515 = vpop.xlane.xlu0 %4514
    %v4516 = vrcp.pop %v4512
    %v4517 = vmul.f32 %v4433, %v4516
    %v4518 = vrcp.pop %v4515
    %v4519 = vmul.f32 %v4506, %v4518
    %v4520 = vld [vmem:[%s8] sm:$0xff]
    %v4521 = vld [vmem:[%s8 + $0x8] sm:$0xff]
    %v4522 = vld [vmem:[%s8 + $0x10] sm:$0xff]
    %v4523 = vld [vmem:[%s8 + $0x18] sm:$0xff]
    %v4524 = vld [vmem:[%s9] sm:$0x1]
    %v4526 = vlaneseq
    %v4527 = vshrl.u32 %v4526, 7
    %v4528 = vsub.s32 0, %v4527
    %v4529 = vrot.slane %v4524, %v4528
    %v4533 = vrot.slane %v4519, 7
    %vm4534 = vcmask 1041409
    %v4535 = vsel %vm4534, %v4533, %v4517
    %v4536 = vsel %vm378, %v4535, 0
    %4538 = vmatprep.subr.mxu0 0.0
    %4539 = vmatpush1.msra.mxu0 0.0
    %4540 = vmatprep.subr.mxu0 0.0
    %4541 = vmatpush1.msra.mxu0 0.0
    %4542 = vmatprep.subr.mxu0 0.0
    %4543 = vmatpush1.msra.mxu0 0.0
    %4544 = vmatprep.subr.mxu0 0.0
    %4545 = vmatpush1.msra.mxu0 0.0
    %4546 = vmatprep.subr.mxu0 0.0
    %4547 = vmatpush1.msra.mxu0 0.0
    %4548 = vmatprep.subr.mxu0 0.0
    %4549 = vmatpush1.msra.mxu0 0.0
    %4550 = vmatprep.subr.mxu0 0.0
    %4551 = vmatpush1.msra.mxu0 0.0
    %4552 = vmatprep.subr.mxu0 0.0
    %4553 = vmatpush1.msra.mxu0 0.0
    %4554 = vmatprep.subr.mxu0 0.0
    %4555 = vmatpush1.msra.mxu0 0.0
    %4556 = vmatprep.subr.mxu0 0.0
    %4557 = vmatpush1.msra.mxu0 0.0
    %4558 = vmatprep.subr.mxu0 0.0
    %4559 = vmatpush1.msra.mxu0 0.0
    %4560 = vmatprep.subr.mxu0 0.0
    %4561 = vmatpush1.msra.mxu0 0.0
    %4562 = vmatprep.subr.mxu0 0.0
    %4563 = vmatpush1.msra.mxu0 %v4523
    %4564 = vmatprep.subr.mxu0 0.0
    %4565 = vmatpush1.msra.mxu0 %v4522
    %4566 = vmatprep.subr.mxu0 0.0
    %4567 = vmatpush1.msra.mxu0 %v4521
    %4568 = vmatprep.subr.mxu0 0.0
    %4569 = vmatpush1.msra.mxu0 %v4520
    %4570 = vmatprep.subr.mxu0 0.0
    %4571 = vmatpush2.msra.mxu0 0.0
    %4572 = vmatprep.subr.mxu0 0.0
    %4573 = vmatpush2.msra.mxu0 0.0
    %4574 = vmatprep.subr.mxu0 0.0
    %4575 = vmatpush2.msra.mxu0 0.0
    %4576 = vmatprep.subr.mxu0 0.0
    %4577 = vmatpush2.msra.mxu0 0.0
    %4578 = vmatprep.subr.mxu0 0.0
    %4579 = vmatpush2.msra.mxu0 0.0
    %4580 = vmatprep.subr.mxu0 0.0
    %4581 = vmatpush2.msra.mxu0 0.0
    %4582 = vmatprep.subr.mxu0 0.0
    %4583 = vmatpush2.msra.mxu0 0.0
    %4584 = vmatprep.subr.mxu0 0.0
    %4585 = vmatpush2.msra.mxu0 0.0
    %4586 = vmatprep.subr.mxu0 0.0
    %4587 = vmatpush2.msra.mxu0 0.0
    %4588 = vmatprep.subr.mxu0 0.0
    %4589 = vmatpush2.msra.mxu0 0.0
    %4590 = vmatprep.subr.mxu0 0.0
    %4591 = vmatpush2.msra.mxu0 0.0
    %4592 = vmatprep.subr.mxu0 0.0
    %4593 = vmatpush2.msra.mxu0 0.0
    %4594 = vmatprep.subr.mxu0 0.0
    %4595 = vmatpush2.msra.mxu0 0.0
    %4596 = vmatprep.subr.mxu0 0.0
    %4597 = vmatpush2.msra.mxu0 0.0
    %4598 = vmatprep.subr.mxu0 0.0
    %4599 = vmatpush2.msra.mxu0 0.0
    %4600 = vmatprep.subr.mxu0 0.0
    %4601 = vmatpush2.msra.mxu0 0.0
    %4602 = vmatprep.mubr.f32.mxu0 0.0
    %4603 = vmatmul.mubr.f32.gmra.mxu0 %v4536
    %v4604 = vpop.f32.mrf.mxu0
    %v4605 = vadd.f32 %v4529, %v4604
    %v4606 = vpop.f32.mrf.mxu0
    %4607 = vdwg.mxu0
    %v4608 = vtanh.pop %v4605
    %v4609 = vld [vmem:[%s10] sm:$0x1]
    %v4610 = vld [vmem:[#allocation6] sm:$0x1]
    %4612 = vset.pattern.permute.xlu0 0
    %4613 = vperm.xlu0 %4612, %v4610
    %v4614 = vpop.permute.xlu0 %4613
    %v4616 = vlaneseq
    %v4617 = vshrl.u32 %v4616, 7
    %v4618 = vsub.s32 0, %v4617
    %v4619 = vrot.slane %v4614, %v4618
    %4620 = vmatprep.subr.mxu0 0.0
    %4621 = vmatpush1.xpose.msra.mxu0 0.0
    %4622 = vmatprep.subr.mxu0 0.0
    %4623 = vmatpush1.xpose.msra.mxu0 0.0
    %4624 = vmatprep.subr.mxu0 0.0
    %4625 = vmatpush1.xpose.msra.mxu0 0.0
    %4626 = vmatprep.subr.mxu0 0.0
    %4627 = vmatpush1.xpose.msra.mxu0 0.0
    %4628 = vmatprep.subr.mxu0 0.0
    %4629 = vmatpush1.xpose.msra.mxu0 0.0
    %4630 = vmatprep.subr.mxu0 0.0
    %4631 = vmatpush1.xpose.msra.mxu0 0.0
    %4632 = vmatprep.subr.mxu0 0.0
    %4633 = vmatpush1.xpose.msra.mxu0 0.0
    %4634 = vmatprep.subr.mxu0 0.0
    %4635 = vmatpush1.xpose.msra.mxu0 0.0
    %4636 = vmatprep.subr.mxu0 0.0
    %4637 = vmatpush1.xpose.msra.mxu0 0.0
    %4638 = vmatprep.subr.mxu0 0.0
    %4639 = vmatpush1.xpose.msra.mxu0 0.0
    %4640 = vmatprep.subr.mxu0 0.0
    %4641 = vmatpush1.xpose.msra.mxu0 0.0
    %4642 = vmatprep.subr.mxu0 0.0
    %4643 = vmatpush1.xpose.msra.mxu0 0.0
    %4644 = vmatprep.subr.mxu0 0.0
    %4645 = vmatpush1.xpose.msra.mxu0 0.0
    %4646 = vmatprep.subr.mxu0 0.0
    %4647 = vmatpush1.xpose.msra.mxu0 0.0
    %4648 = vmatprep.subr.mxu0 0.0
    %4649 = vmatpush1.xpose.msra.mxu0 0.0
    %4650 = vmatprep.subr.mxu0 0.0
    %4651 = vmatpush1.xpose.msra.mxu0 %v4608
    %4652 = vmatprep.subr.mxu0 0.0
    %4653 = vmatpush2.xpose.msra.mxu0 0.0
    %4654 = vmatprep.subr.mxu0 0.0
    %4655 = vmatpush2.xpose.msra.mxu0 0.0
    %4656 = vmatprep.subr.mxu0 0.0
    %4657 = vmatpush2.xpose.msra.mxu0 0.0
    %4658 = vmatprep.subr.mxu0 0.0
    %4659 = vmatpush2.xpose.msra.mxu0 0.0
    %4660 = vmatprep.subr.mxu0 0.0
    %4661 = vmatpush2.xpose.msra.mxu0 0.0
    %4662 = vmatprep.subr.mxu0 0.0
    %4663 = vmatpush2.xpose.msra.mxu0 0.0
    %4664 = vmatprep.subr.mxu0 0.0
    %4665 = vmatpush2.xpose.msra.mxu0 0.0
    %4666 = vmatprep.subr.mxu0 0.0
    %4667 = vmatpush2.xpose.msra.mxu0 0.0
    %4668 = vmatprep.subr.mxu0 0.0
    %4669 = vmatpush2.xpose.msra.mxu0 0.0
    %4670 = vmatprep.subr.mxu0 0.0
    %4671 = vmatpush2.xpose.msra.mxu0 0.0
    %4672 = vmatprep.subr.mxu0 0.0
    %4673 = vmatpush2.xpose.msra.mxu0 0.0
    %4674 = vmatprep.subr.mxu0 0.0
    %4675 = vmatpush2.xpose.msra.mxu0 0.0
    %4676 = vmatprep.subr.mxu0 0.0
    %4677 = vmatpush2.xpose.msra.mxu0 0.0
    %4678 = vmatprep.subr.mxu0 0.0
    %4679 = vmatpush2.xpose.msra.mxu0 0.0
    %4680 = vmatprep.subr.mxu0 0.0
    %4681 = vmatpush2.xpose.msra.mxu0 0.0
    %4682 = vmatprep.subr.mxu0 0.0
    %4683 = vmatpush2.xpose.msra.mxu0 0.0
    %4684 = vmatprep.mubr.f32.mxu0 0.0
    %4685 = vmatmul.mubr.f32.gmra.mxu0 %v4609
    %v4686 = vpop.f32.mrf.mxu0
    %v4687 = vadd.f32 %v4619, %v4686
    %v4688 = vpop.f32.mrf.mxu0
    %4689 = vdwg.mxu0
    %vm4690 = vcmask 8192
    %4691 = vst.msk [vmem:[#allocation7] sm:$0x1] %vm4690, %v4687
    // Predicated region
    $region50: #{tpu_custom_call.1} parent=1 // pred_check
      _
    $region51: #{tpu_custom_call.1} parent=1 // pred_check_branch
      %4693 = sbr.rel (0) target = $region53
    $region52: #{tpu_custom_call.1} parent=1 // pred_region
      %s4695 = ssub.s32 16, 16
      %4696 = vsyncadd [#allocation8], %s4695
      %s4698 = sshll.u32 [#allocation7], 4
      %s4699 = int_to_ptr.vmem [resolvable:$true] %s4698
      %4701 = dma.vmem_to_hbm [thread:$0]  %s4699, 16, %s12, [#allocation8]
    $region53: #{tpu_custom_call.1} parent=1 // pred_fallthru
      _
    // Predicated region
    $region54: #{tpu_custom_call.1} parent=1 // pred_check
      _
    $region55: #{tpu_custom_call.1} parent=1 // pred_check_branch
      %4703 = sbr.rel (0) target = $region57
    $region56: #{tpu_custom_call.1} parent=1 // pred_region
      %4704 = dma.done [#allocation8], 16
    $region57: #{tpu_custom_call.1} parent=1 // pred_fallthru
      _
    %4705 = vsyncpa [#allocation8], 1

</llo_original>
